<compile_context>
chip_gen: v5e
topology: v5e:2x2
jax: 0.10.0
libtpu: 0.0.40
codegen_flags: <defaults>
</compile_context>

<pallas_src>
import functools

import jax
import jax.numpy as jnp
from jax import lax
from jax.experimental import pallas as pl
from jax.experimental.pallas import tpu as pltpu

LEAKY_SLOPE = 0.05
BN_EPS = 1e-5
NEG_INF = -1e30

_VMEM = pl.BlockSpec(memory_space=pltpu.MemorySpace.VMEM)


def _leaky(x):
    return jnp.where(x >= 0, x, LEAKY_SLOPE * x)


def _bf16(x):
    return x.astype(jnp.bfloat16)


# --------------------------------------------------------------------------------------
# Fused kernel: ConvGroup -> (relayout-free) Linear -> 2-layer LSTM -> classifier MLP
#               -> LogSoftmax.  Input rows are (b, h) series; output rows are (b, t).
# --------------------------------------------------------------------------------------
def fused_kernel(x_ref, *refs, pool_ks, n_pads, T_out, B, H, HP):
    n_conv = 2 * len(pool_ks)
    conv_refs = refs[:n_conv]
    (wbig_ref, blin_ref, wih0_ref, bg0_ref, whh0_ref, wl1_ref, bg1_ref,
     wc1_ref, bc1_ref, wc2_ref, bc2_ref, wc3_ref, bc3_ref, out_ref) = refs[n_conv:]

    # ---- ConvGroup: one GEMM per layer against pool-offset-concatenated Toeplitz
    #      weights (conv+BN folded), max over 128-aligned column groups, bias, LeakyReLU.
    act = x_ref[...]                                            # (B*H, T_in) f32
    for li, (pk, npd) in enumerate(zip(pool_ks, n_pads)):
        w_ref, b_ref = conv_refs[2 * li], conv_refs[2 * li + 1]
        z = jnp.dot(_bf16(act), w_ref[...], preferred_element_type=jnp.float32)
        m = z[:, :npd]
        for q in range(1, pk):
            m = jnp.maximum(m, z[:, q * npd:(q + 1) * npd])
        act = _leaky(m + b_ref[...])                            # (B*H, npd) f32

    # ---- Flatten + swapaxes + Linear folded into one block-diagonal GEMM.
    #      a_by_b lanes ordered (h, t, c); wbig's t-th diagonal block maps that
    #      time-step's (h, c) features to its own 128 output lanes -> no transpose.
    a_by_b = jnp.concatenate(
        [jnp.concatenate([act[b * H + h:b * H + h + 1, :] for h in range(H)], axis=1)
         for b in range(B)], axis=0)                            # (B, H*npd_last) f32
    lsum = jnp.dot(_bf16(a_by_b), wbig_ref[...],
                   preferred_element_type=jnp.float32)          # (B, T_out*128) f32
    # time-major (t, b) rows for the recurrence: 128-aligned lane slices -> sublane stack
    lin = jnp.concatenate([lsum[:, t * 128:(t + 1) * 128] for t in range(T_out)], axis=0)
    lin = _leaky(lin + blin_ref[...])                           # (T_out*B, 128) f32
    # TODO(synk): train-mode Dropout (stochastic masks) not implemented (eval mode).

    # ---- LSTM layer-0 input projection hoisted out of the recurrence ----
    pre0 = jnp.dot(_bf16(lin), wih0_ref[...],
                   preferred_element_type=jnp.float32) + bg0_ref[...]   # (T_out*B, 4*HP)

    def cell(g, c):
        i = jax.nn.sigmoid(g[:, 0 * HP:1 * HP])
        f = jax.nn.sigmoid(g[:, 1 * HP:2 * HP])
        gg = jnp.tanh(g[:, 2 * HP:3 * HP])
        o = jax.nn.sigmoid(g[:, 3 * HP:4 * HP])
        c_new = f * c + i * gg
        return o * jnp.tanh(c_new), c_new

    zero = jnp.zeros((B, HP), jnp.float32)
    h0, c0, h1, c1 = zero, zero, zero, zero
    hs = []
    for t in range(T_out):                       # statically unrolled (T_out is small)
        g0 = pre0[t * B:(t + 1) * B, :] + jnp.dot(
            _bf16(h0), whh0_ref[...], preferred_element_type=jnp.float32)
        h0, c0 = cell(g0, c0)
        # layer-1: single merged GEMM on [h0 | h1] against stacked [wih1; whh1]
        h01 = _bf16(jnp.concatenate([h0, h1], axis=1))          # (B, 2*HP)
        g1 = jnp.dot(h01, wl1_ref[...],
                     preferred_element_type=jnp.float32) + bg1_ref[...]
        h1, c1 = cell(g1, c1)
        hs.append(h1)                            # keep in vregs; no masked sublane stores

    # classifier is row-wise, so build rows directly in final (b, t) output order
    rnn = jnp.concatenate([hs[t][b:b + 1, :] for b in range(B) for t in range(T_out)],
                          axis=0)                               # (B*T_out, HP) f32
    z = _leaky(jnp.dot(_bf16(rnn), wc1_ref[...],
                       preferred_element_type=jnp.float32) + bc1_ref[...])
    z = _leaky(jnp.dot(_bf16(z), wc2_ref[...],
                       preferred_element_type=jnp.float32) + bc2_ref[...])
    logits = jnp.dot(_bf16(z), wc3_ref[...],
                     preferred_element_type=jnp.float32) + bc3_ref[...]   # f32, pads=-1e30
    m = jnp.max(logits, axis=-1, keepdims=True)
    lse = m + jnp.log(jnp.sum(jnp.exp(logits - m), axis=-1, keepdims=True))
    out_ref[...] = logits - lse                  # (B*T_out, 128) lane-dense store


# --------------------------------------------------------------------------------------
# Host-side one-time parameter preparation
# --------------------------------------------------------------------------------------
def _round_up(n, m):
    return (n + m - 1) // m * m


def _conv_toeplitz(w_f, w_in, stride_w, pool_s, pool_p, w_pool):
    """Matrix mapping channel-last input cols (w*Cin+ci) to conv outputs at pooled
    positions for pool offset `pool_p`; output columns ordered (wp, Cout)."""
    cout, cin, _, K = w_f.shape
    wk = jnp.transpose(w_f[:, :, 0, :], (1, 2, 0))              # (Cin, K, Cout)
    wp = jnp.arange(w_pool)
    k = jnp.arange(K)
    wi = (wp[:, None] * pool_s + pool_p) * stride_w + k[None, :]    # (w_pool, K)
    big = jnp.zeros((w_in, cin, w_pool, cout), jnp.float32)
    big = big.at[wi[:, None, :, None],
                 jnp.arange(cin)[None, :, None, None],
                 wp[:, None, None, None],
                 jnp.arange(cout)[None, None, None, :]].set(wk[None, :, :, :])
    return big.reshape(w_in * cin, w_pool * cout)


def _pad_gate_cols(w_t, hidden, hp):
    d = w_t.shape[0]
    w3 = w_t.reshape(d, 4, hidden)
    return jnp.pad(w3, ((0, 0), (0, 0), (0, hp - hidden))).reshape(d, 4 * hp)


def _pad_rows(w, rows):
    return jnp.pad(w, ((0, rows - w.shape[0]), (0, 0)))


def prepare_params(raw, conv_cfg, num_chans, num_classes, T, hidden=64, hidden_p=128):
    assert hidden <= hidden_p and hidden_p == 128
    assert num_classes <= 128

    # ---- ConvGroup: fold BN (eval) into conv weights; per layer concat the pool_k
    #      pool-offset Toeplitz matrices along N, each padded to a 128-lane multiple.
    conv_ops, pool_ks, n_pads = [], [], []
    w_cur, cin, in_cols = T, 1, T
    for p, (cout, kernel, stride, pool_k, pool_s) in zip(raw['convs'], conv_cfg):
        assert kernel[0] == 1 and stride[0] == 1 and pool_k[0] == 1 and pool_s[0] == 1, \
            "channel (H) axis must be preserved by the conv group"
        K, sw, pk, ps = kernel[1], stride[1], pool_k[1], pool_s[1]
        w_conv = (w_cur - K) // sw + 1
        w_pool = (w_conv - pk) // ps + 1
        scale = p['gamma'] / jnp.sqrt(p['var'] + BN_EPS)
        w_f = p['w'] * scale[:, None, None, None]                   # BN scale folded
        b_f = p['b'] * scale + (p['beta'] - p['mean'] * scale)      # conv bias + BN shift
        n = w_pool * cout
        npd = _round_up(n, 128)
        blocks = []
        for q in range(pk):
            tpl = _conv_toeplitz(w_f, w_cur, sw, ps, q, w_pool)     # (w_cur*cin, n)
            tpl = jnp.pad(tpl, ((0, in_cols - w_cur * cin), (0, npd - n)))
            blocks.append(tpl)
        conv_ops.append(jnp.concatenate(blocks, axis=1).astype(jnp.bfloat16))   # (in_cols, pk*npd)
        conv_ops.append(jnp.pad(jnp.tile(b_f, w_pool), (0, npd - n))
                        .reshape(1, npd).astype(jnp.float32))
        pool_ks.append(pk)
        n_pads.append(npd)
        w_cur, cin, in_cols = w_pool, cout, npd

    t_out, c_last, npd_last = w_cur, cin, in_cols

    # ---- Linear(num_chans*c_last, 128) as block-diagonal (H*npd_last, t_out*128):
    #      folds the flatten/swapaxes relayout into the GEMM itself.
    lin_wt = raw['lin_w'].T                                         # rows = c*num_chans + h
    lw_h = jnp.transpose(lin_wt.reshape(c_last, num_chans, 128), (1, 0, 2))   # [h, c, j]
    eye_t = jnp.eye(t_out, dtype=jnp.float32)
    wbig = eye_t[None, :, None, :, None] * lw_h[:, None, :, None, :]          # [h,t,c,t',j]
    wbig = wbig.reshape(num_chans, t_out * c_last, t_out * 128)
    wbig = jnp.pad(wbig, ((0, 0), (0, npd_last - t_out * c_last), (0, 0)))
    wbig = wbig.reshape(num_chans * npd_last, t_out * 128).astype(jnp.bfloat16)
    blin = raw['lin_b'].reshape(1, 128).astype(jnp.float32)

    # ---- LSTM: zero-pad hidden 64 -> 128; stack layer-1 [wih1; whh1] for merged GEMM ----
    L, h, hp = raw['lstm'], hidden, hidden_p
    wih0 = _pad_gate_cols(L['w_ih0'].T, h, hp).astype(jnp.bfloat16)             # (128, 4hp)
    bg0 = _pad_gate_cols((L['b_ih0'] + L['b_hh0']).reshape(1, 4 * h), h, hp).astype(jnp.float32)
    whh0 = _pad_rows(_pad_gate_cols(L['w_hh0'].T, h, hp), hp).astype(jnp.bfloat16)
    wih1 = _pad_rows(_pad_gate_cols(L['w_ih1'].T, h, hp), hp)
    whh1 = _pad_rows(_pad_gate_cols(L['w_hh1'].T, h, hp), hp)
    wl1 = jnp.concatenate([wih1, whh1], axis=0).astype(jnp.bfloat16)            # (2hp, 4hp)
    bg1 = _pad_gate_cols((L['b_ih1'] + L['b_hh1']).reshape(1, 4 * h), h, hp).astype(jnp.float32)

    # ---- classifier padded to 128 lanes; padded logits get bias -1e30 (kept f32) ----
    wc1 = _pad_rows(raw['cls_w1'].T, hp).astype(jnp.bfloat16)                   # (hp, 128)
    bc1 = raw['cls_b1'].reshape(1, 128).astype(jnp.float32)
    wc2 = jnp.pad(raw['cls_w2'].T, ((0, 0), (0, 128 - h))).astype(jnp.bfloat16)
    bc2 = jnp.pad(raw['cls_b2'], (0, 128 - h)).reshape(1, 128).astype(jnp.float32)
    wc3 = jnp.pad(raw['cls_w3'].T, ((0, hp - h), (0, 128 - num_classes))).astype(jnp.bfloat16)
    bc3 = jnp.concatenate(
        [raw['cls_b3'], jnp.full((128 - num_classes,), NEG_INF, jnp.float32)]).reshape(1, 128)

    ops = conv_ops + [wbig, blin, wih0, bg0, whh0, wl1, bg1,
                      wc1, bc1, wc2, bc2, wc3, bc3]
    return dict(ops=ops, pool_ks=tuple(pool_ks), n_pads=tuple(n_pads),
                t_out=t_out, c_last=c_last)


# --------------------------------------------------------------------------------------
# Forward (matches TemporalClassifier.forward, eval mode)
# --------------------------------------------------------------------------------------
def build_forward(raw, conv_cfg, num_chans, num_classes, T, hidden=64, hidden_p=128):
    prep = prepare_params(raw, conv_cfg, num_chans, num_classes, T, hidden, hidden_p)
    ops, pool_ks, n_pads, t_out = prep['ops'], prep['pool_ks'], prep['n_pads'], prep['t_out']

    @jax.jit
    def forward(x):                      # x: (B, num_chans, T)
        B = x.shape[0]
        # unsqueeze(1) -> NCHW (B,1,H,W); rows (b,h) via a free contiguous reshape
        xf = x.astype(jnp.float32).reshape(B * num_chans, T)

        logp = pl.pallas_call(
            functools.partial(fused_kernel, pool_ks=pool_ks, n_pads=n_pads,
                              T_out=t_out, B=B, H=num_chans, HP=hidden_p),
            out_shape=jax.ShapeDtypeStruct((B * t_out, 128), jnp.float32),
            in_specs=[_VMEM] * (1 + len(ops)),
            out_specs=_VMEM,
        )(xf, *ops)

        # rows are already (b, t); just drop the class-lane padding
        return logp.reshape(B, t_out, 128)[:, :, :num_classes]

    return forward


# --------------------------------------------------------------------------------------
# Pure-JAX reference (eval mode) for correctness checking
# --------------------------------------------------------------------------------------
def reference_forward(x, raw, conv_cfg, hidden=64):
    h = x[:, None, :, :].astype(jnp.float32)
    for p, (cout, kernel, stride, pool_k, pool_s) in zip(raw['convs'], conv_cfg):
        y = lax.conv_general_dilated(h, p['w'], window_strides=tuple(stride),
                                     padding='VALID',
                                     dimension_numbers=('NCHW', 'OIHW', 'NCHW'))
        y = y + p['b'][None, :, None, None]
        scale = p['gamma'] / jnp.sqrt(p['var'] + BN_EPS)
        shift = p['beta'] - p['mean'] * scale
        y = y * scale[None, :, None, None] + shift[None, :, None, None]
        y = lax.reduce_window(y, -jnp.inf, lax.max,
                              (1, 1) + tuple(pool_k), (1, 1) + tuple(pool_s), 'VALID')
        h = jnp.where(y >= 0, y, LEAKY_SLOPE * y)
    B, C, H, W = h.shape
    feat = jnp.swapaxes(h.reshape(B, C * H, W), 1, 2)
    lin = feat @ raw['lin_w'].T + raw['lin_b']
    lin = jnp.where(lin >= 0, lin, LEAKY_SLOPE * lin)

    L = raw['lstm']

    def lstm_layer(xs, w_ih, w_hh, b_ih, b_hh):
        def step(carry, x_t):
            h_, c_ = carry
            g = x_t @ w_ih.T + h_ @ w_hh.T + b_ih + b_hh
            i, f, gg, o = jnp.split(g, 4, axis=-1)
            c_new = jax.nn.sigmoid(f) * c_ + jax.nn.sigmoid(i) * jnp.tanh(gg)
            h_new = jax.nn.sigmoid(o) * jnp.tanh(c_new)
            return (h_new, c_new), h_new
        init = (jnp.zeros((xs.shape[0], hidden)), jnp.zeros((xs.shape[0], hidden)))
        _, ys = lax.scan(step, init, jnp.swapaxes(xs, 0, 1))
        return jnp.swapaxes(ys, 0, 1)

    r = lstm_layer(lin, L['w_ih0'], L['w_hh0'], L['b_ih0'], L['b_hh0'])
    r = lstm_layer(r, L['w_ih1'], L['w_hh1'], L['b_ih1'], L['b_hh1'])

    z = r @ raw['cls_w1'].T + raw['cls_b1']
    z = jnp.where(z >= 0, z, LEAKY_SLOPE * z)
    z = z @ raw['cls_w2'].T + raw['cls_b2']
    z = jnp.where(z >= 0, z, LEAKY_SLOPE * z)
    logits = z @ raw['cls_w3'].T + raw['cls_b3']
    return jax.nn.log_softmax(logits, axis=-1)


# --------------------------------------------------------------------------------------
# Synthetic parameters (PyTorch module shapes)
# --------------------------------------------------------------------------------------
def init_params(key, conv_cfg, num_chans, num_classes, hidden=64):
    keys = iter(jax.random.split(key, 64))

    def nrm(shape, scale=0.1):
        return (scale * jax.random.normal(next(keys), shape)).astype(jnp.float32)

    convs, in_feats = [], 1
    for out_feats, kernel, _, _, _ in conv_cfg:
        convs.append(dict(
            w=nrm((out_feats, in_feats) + tuple(kernel), 0.3),
            b=nrm((out_feats,), 0.1),
            gamma=1.0 + nrm((out_feats,), 0.1),
            beta=nrm((out_feats,), 0.1),
            mean=nrm((out_feats,), 0.05),
            var=1.0 + jnp.abs(nrm((out_feats,), 0.1)),
        ))
        in_feats = out_feats

    feat = num_chans * conv_cfg[-1][0]
    return dict(
        convs=convs,
        lin_w=nrm((128, feat), 0.1), lin_b=nrm((128,), 0.1),
        lstm=dict(
            w_ih0=nrm((4 * hidden, 128), 0.1), w_hh0=nrm((4 * hidden, hidden), 0.1),
            b_ih0=nrm((4 * hidden,), 0.1), b_hh0=nrm((4 * hidden,), 0.1),
            w_ih1=nrm((4 * hidden, hidden), 0.1), w_hh1=nrm((4 * hidden, hidden), 0.1),
            b_ih1=nrm((4 * hidden,), 0.1), b_hh1=nrm((4 * hidden,), 0.1),
        ),
        cls_w1=nrm((128, hidden), 0.1), cls_b1=nrm((128,), 0.1),
        cls_w2=nrm((hidden, 128), 0.1), cls_b2=nrm((hidden,), 0.1),
        cls_w3=nrm((num_classes, hidden), 0.1), cls_b3=nrm((num_classes,), 0.1),
    )


if __name__ == "__main__":
    # conv_layers: (out_feats, kernel, stride, pool_kernel, pool_stride); (1,k) kernels
    # keep the EMG-channel axis intact, as required by Linear(num_chans*C_last, 128).
    conv_cfg = [
        (8,  (1, 3), (1, 1), (1, 2), (1, 2)),
        (16, (1, 3), (1, 1), (1, 2), (1, 2)),
    ]
    num_chans, num_classes = 4, 6
    B, T = 2, 34                     # T=34 -> conv 32 -> pool 16 -> conv 14 -> pool 7 steps

    key = jax.random.PRNGKey(0)
    pkey, xkey = jax.random.split(key)
    raw = init_params(pkey, conv_cfg, num_chans, num_classes, hidden=64)
    x = jax.random.normal(xkey, (B, num_chans, T), jnp.float32)

    forward = build_forward(raw, conv_cfg, num_chans, num_classes, T, hidden=64)
    out = jax.block_until_ready(forward(x))

    assert out.shape == (B, 7, num_classes), out.shape
    # log-softmax rows must exponentiate-sum to 1
    assert bool(jnp.allclose(jnp.exp(out).sum(-1), 1.0, atol=1e-3))

    # check against a plain-JAX eval-mode reference of the PyTorch module
    with jax.default_matmul_precision("float32"):
        ref = reference_forward(x, raw, conv_cfg, hidden=64)
    err = float(jnp.max(jnp.abs(out - ref)))
    assert err < 5e-2, f"mismatch vs reference: {err}"

    print("KERNEL_OK")
</pallas_src>

<mosaic_0001>
module attributes {stable_mosaic.version = 11 : i64} {
  func.func @fused_kernel(%arg0: memref<8x34xf32, #tpu.memory_space<vmem>>, %arg1: memref<34x256xbf16, #tpu.memory_space<vmem>>, %arg2: memref<1x128xf32, #tpu.memory_space<vmem>>, %arg3: memref<128x256xbf16, #tpu.memory_space<vmem>>, %arg4: memref<1x128xf32, #tpu.memory_space<vmem>>, %arg5: memref<512x896xbf16, #tpu.memory_space<vmem>>, %arg6: memref<1x128xf32, #tpu.memory_space<vmem>>, %arg7: memref<128x512xbf16, #tpu.memory_space<vmem>>, %arg8: memref<1x512xf32, #tpu.memory_space<vmem>>, %arg9: memref<128x512xbf16, #tpu.memory_space<vmem>>, %arg10: memref<256x512xbf16, #tpu.memory_space<vmem>>, %arg11: memref<1x512xf32, #tpu.memory_space<vmem>>, %arg12: memref<128x128xbf16, #tpu.memory_space<vmem>>, %arg13: memref<1x128xf32, #tpu.memory_space<vmem>>, %arg14: memref<128x128xbf16, #tpu.memory_space<vmem>>, %arg15: memref<1x128xf32, #tpu.memory_space<vmem>>, %arg16: memref<128x128xbf16, #tpu.memory_space<vmem>>, %arg17: memref<1x128xf32, #tpu.memory_space<vmem>>, %arg18: memref<14x128xf32, #tpu.memory_space<vmem>>) attributes {dimension_semantics = [], scalar_prefetch = 0 : i64, scratch_operands = 0 : i64, tpu.core_type = #tpu.core_type<tc>} {
    %c0 = arith.constant 0 : index
    %c0_0 = arith.constant 0 : index
    %0 = vector.load %arg0[%c0, %c0_0] : memref<8x34xf32, #tpu.memory_space<vmem>>, vector<8x34xf32>
    %1 = arith.truncf %0 : vector<8x34xf32> to vector<8x34xbf16>
    %c0_1 = arith.constant 0 : index
    %c0_2 = arith.constant 0 : index
    %2 = vector.load %arg1[%c0_1, %c0_2] : memref<34x256xbf16, #tpu.memory_space<vmem>>, vector<34x256xbf16>
    %cst = arith.constant dense<0.000000e+00> : vector<8x256xf32>
    %3 = tpu.matmul %1, %2, %cst {dimension_numbers = #tpu.dot_dimension_numbers<[1], [0], [0], [1], [0, 0, 1, 1], [], []>} : vector<8x34xbf16>, vector<34x256xbf16>, vector<8x256xf32> -> vector<8x256xf32>
    %4 = vector.extract_strided_slice %3 {offsets = [0, 0], sizes = [8, 128], strides = [1, 1]} : vector<8x256xf32> to vector<8x128xf32>
    %5 = vector.extract_strided_slice %3 {offsets = [0, 128], sizes = [8, 128], strides = [1, 1]} : vector<8x256xf32> to vector<8x128xf32>
    %6 = arith.maximumf %4, %5 : vector<8x128xf32>
    %c0_3 = arith.constant 0 : index
    %c0_4 = arith.constant 0 : index
    %7 = vector.load %arg2[%c0_3, %c0_4] : memref<1x128xf32, #tpu.memory_space<vmem>>, vector<1x128xf32>
    %8 = vector.broadcast %7 : vector<1x128xf32> to vector<8x128xf32>
    %9 = arith.addf %6, %8 : vector<8x128xf32>
    %cst_5 = arith.constant 0.000000e+00 : f32
    %10 = vector.broadcast %cst_5 : f32 to vector<8x128xf32>
    %11 = arith.cmpf oge, %9, %10 : vector<8x128xf32>
    %cst_6 = arith.constant 5.000000e-02 : f32
    %12 = vector.broadcast %cst_6 : f32 to vector<8x128xf32>
    %13 = arith.mulf %12, %9 : vector<8x128xf32>
    %14 = arith.select %11, %9, %13 : vector<8x128xi1>, vector<8x128xf32>
    %15 = arith.truncf %14 : vector<8x128xf32> to vector<8x128xbf16>
    %c0_7 = arith.constant 0 : index
    %c0_8 = arith.constant 0 : index
    %16 = vector.load %arg3[%c0_7, %c0_8] : memref<128x256xbf16, #tpu.memory_space<vmem>>, vector<128x256xbf16>
    %cst_9 = arith.constant dense<0.000000e+00> : vector<8x256xf32>
    %17 = tpu.matmul %15, %16, %cst_9 {dimension_numbers = #tpu.dot_dimension_numbers<[1], [0], [0], [1], [0, 0, 1, 1], [], []>} : vector<8x128xbf16>, vector<128x256xbf16>, vector<8x256xf32> -> vector<8x256xf32>
    %18 = vector.extract_strided_slice %17 {offsets = [0, 0], sizes = [8, 128], strides = [1, 1]} : vector<8x256xf32> to vector<8x128xf32>
    %19 = vector.extract_strided_slice %17 {offsets = [0, 128], sizes = [8, 128], strides = [1, 1]} : vector<8x256xf32> to vector<8x128xf32>
    %20 = arith.maximumf %18, %19 : vector<8x128xf32>
    %c0_10 = arith.constant 0 : index
    %c0_11 = arith.constant 0 : index
    %21 = vector.load %arg4[%c0_10, %c0_11] : memref<1x128xf32, #tpu.memory_space<vmem>>, vector<1x128xf32>
    %22 = vector.broadcast %21 : vector<1x128xf32> to vector<8x128xf32>
    %23 = arith.addf %20, %22 : vector<8x128xf32>
    %cst_12 = arith.constant 0.000000e+00 : f32
    %24 = vector.broadcast %cst_12 : f32 to vector<8x128xf32>
    %25 = arith.cmpf oge, %23, %24 : vector<8x128xf32>
    %cst_13 = arith.constant 5.000000e-02 : f32
    %26 = vector.broadcast %cst_13 : f32 to vector<8x128xf32>
    %27 = arith.mulf %26, %23 : vector<8x128xf32>
    %28 = arith.select %25, %23, %27 : vector<8x128xi1>, vector<8x128xf32>
    %29 = vector.extract_strided_slice %28 {offsets = [0, 0], sizes = [1, 128], strides = [1, 1]} : vector<8x128xf32> to vector<1x128xf32>
    %30 = vector.extract_strided_slice %28 {offsets = [1, 0], sizes = [1, 128], strides = [1, 1]} : vector<8x128xf32> to vector<1x128xf32>
    %31 = vector.extract_strided_slice %28 {offsets = [2, 0], sizes = [1, 128], strides = [1, 1]} : vector<8x128xf32> to vector<1x128xf32>
    %32 = vector.extract_strided_slice %28 {offsets = [3, 0], sizes = [1, 128], strides = [1, 1]} : vector<8x128xf32> to vector<1x128xf32>
    %33 = tpu.concatenate %29, %30, %31, %32 in 1 : vector<1x128xf32>, vector<1x128xf32>, vector<1x128xf32>, vector<1x128xf32> -> vector<1x512xf32>
    %34 = vector.extract_strided_slice %28 {offsets = [4, 0], sizes = [1, 128], strides = [1, 1]} : vector<8x128xf32> to vector<1x128xf32>
    %35 = vector.extract_strided_slice %28 {offsets = [5, 0], sizes = [1, 128], strides = [1, 1]} : vector<8x128xf32> to vector<1x128xf32>
    %36 = vector.extract_strided_slice %28 {offsets = [6, 0], sizes = [1, 128], strides = [1, 1]} : vector<8x128xf32> to vector<1x128xf32>
    %37 = vector.extract_strided_slice %28 {offsets = [7, 0], sizes = [1, 128], strides = [1, 1]} : vector<8x128xf32> to vector<1x128xf32>
    %38 = tpu.concatenate %34, %35, %36, %37 in 1 : vector<1x128xf32>, vector<1x128xf32>, vector<1x128xf32>, vector<1x128xf32> -> vector<1x512xf32>
    %39 = tpu.concatenate %33, %38 in 0 : vector<1x512xf32>, vector<1x512xf32> -> vector<2x512xf32>
    %40 = arith.truncf %39 : vector<2x512xf32> to vector<2x512xbf16>
    %c0_14 = arith.constant 0 : index
    %c0_15 = arith.constant 0 : index
    %41 = vector.load %arg5[%c0_14, %c0_15] : memref<512x896xbf16, #tpu.memory_space<vmem>>, vector<512x896xbf16>
    %cst_16 = arith.constant dense<0.000000e+00> : vector<2x896xf32>
    %42 = tpu.matmul %40, %41, %cst_16 {dimension_numbers = #tpu.dot_dimension_numbers<[1], [0], [0], [1], [0, 0, 1, 1], [], []>} : vector<2x512xbf16>, vector<512x896xbf16>, vector<2x896xf32> -> vector<2x896xf32>
    %43 = vector.extract_strided_slice %42 {offsets = [0, 0], sizes = [2, 128], strides = [1, 1]} : vector<2x896xf32> to vector<2x128xf32>
    %44 = vector.extract_strided_slice %42 {offsets = [0, 128], sizes = [2, 128], strides = [1, 1]} : vector<2x896xf32> to vector<2x128xf32>
    %45 = vector.extract_strided_slice %42 {offsets = [0, 256], sizes = [2, 128], strides = [1, 1]} : vector<2x896xf32> to vector<2x128xf32>
    %46 = vector.extract_strided_slice %42 {offsets = [0, 384], sizes = [2, 128], strides = [1, 1]} : vector<2x896xf32> to vector<2x128xf32>
    %47 = vector.extract_strided_slice %42 {offsets = [0, 512], sizes = [2, 128], strides = [1, 1]} : vector<2x896xf32> to vector<2x128xf32>
    %48 = vector.extract_strided_slice %42 {offsets = [0, 640], sizes = [2, 128], strides = [1, 1]} : vector<2x896xf32> to vector<2x128xf32>
    %49 = vector.extract_strided_slice %42 {offsets = [0, 768], sizes = [2, 128], strides = [1, 1]} : vector<2x896xf32> to vector<2x128xf32>
    %50 = tpu.concatenate %43, %44, %45, %46, %47, %48, %49 in 0 : vector<2x128xf32>, vector<2x128xf32>, vector<2x128xf32>, vector<2x128xf32>, vector<2x128xf32>, vector<2x128xf32>, vector<2x128xf32> -> vector<14x128xf32>
    %c0_17 = arith.constant 0 : index
    %c0_18 = arith.constant 0 : index
    %51 = vector.load %arg6[%c0_17, %c0_18] : memref<1x128xf32, #tpu.memory_space<vmem>>, vector<1x128xf32>
    %52 = vector.broadcast %51 : vector<1x128xf32> to vector<14x128xf32>
    %53 = arith.addf %50, %52 : vector<14x128xf32>
    %cst_19 = arith.constant 0.000000e+00 : f32
    %54 = vector.broadcast %cst_19 : f32 to vector<14x128xf32>
    %55 = arith.cmpf oge, %53, %54 : vector<14x128xf32>
    %cst_20 = arith.constant 5.000000e-02 : f32
    %56 = vector.broadcast %cst_20 : f32 to vector<14x128xf32>
    %57 = arith.mulf %56, %53 : vector<14x128xf32>
    %58 = arith.select %55, %53, %57 : vector<14x128xi1>, vector<14x128xf32>
    %59 = arith.truncf %58 : vector<14x128xf32> to vector<14x128xbf16>
    %c0_21 = arith.constant 0 : index
    %c0_22 = arith.constant 0 : index
    %60 = vector.load %arg7[%c0_21, %c0_22] : memref<128x512xbf16, #tpu.memory_space<vmem>>, vector<128x512xbf16>
    %cst_23 = arith.constant dense<0.000000e+00> : vector<14x512xf32>
    %61 = tpu.matmul %59, %60, %cst_23 {dimension_numbers = #tpu.dot_dimension_numbers<[1], [0], [0], [1], [0, 0, 1, 1], [], []>} : vector<14x128xbf16>, vector<128x512xbf16>, vector<14x512xf32> -> vector<14x512xf32>
    %c0_24 = arith.constant 0 : index
    %c0_25 = arith.constant 0 : index
    %62 = vector.load %arg8[%c0_24, %c0_25] : memref<1x512xf32, #tpu.memory_space<vmem>>, vector<1x512xf32>
    %63 = vector.broadcast %62 : vector<1x512xf32> to vector<14x512xf32>
    %64 = arith.addf %61, %63 : vector<14x512xf32>
    %cst_26 = arith.constant 0.000000e+00 : f32
    %65 = vector.broadcast %cst_26 : f32 to vector<2x128xf32>
    %66 = vector.extract_strided_slice %64 {offsets = [0, 0], sizes = [2, 512], strides = [1, 1]} : vector<14x512xf32> to vector<2x512xf32>
    %67 = arith.truncf %65 : vector<2x128xf32> to vector<2x128xbf16>
    %c0_27 = arith.constant 0 : index
    %c0_28 = arith.constant 0 : index
    %68 = vector.load %arg9[%c0_27, %c0_28] : memref<128x512xbf16, #tpu.memory_space<vmem>>, vector<128x512xbf16>
    %cst_29 = arith.constant dense<0.000000e+00> : vector<2x512xf32>
    %69 = tpu.matmul %67, %68, %cst_29 {dimension_numbers = #tpu.dot_dimension_numbers<[1], [0], [0], [1], [0, 0, 1, 1], [], []>} : vector<2x128xbf16>, vector<128x512xbf16>, vector<2x512xf32> -> vector<2x512xf32>
    %70 = arith.addf %66, %69 : vector<2x512xf32>
    %71 = vector.extract_strided_slice %70 {offsets = [0, 0], sizes = [2, 128], strides = [1, 1]} : vector<2x512xf32> to vector<2x128xf32>
    %72 = arith.negf %71 : vector<2x128xf32>
    %73 = math.exp %72 : vector<2x128xf32>
    %cst_30 = arith.constant 1.000000e+00 : f32
    %74 = vector.broadcast %cst_30 : f32 to vector<2x128xf32>
    %75 = arith.addf %74, %73 : vector<2x128xf32>
    %76 = arith.divf %74, %75 : vector<2x128xf32>
    %77 = vector.extract_strided_slice %70 {offsets = [0, 128], sizes = [2, 128], strides = [1, 1]} : vector<2x512xf32> to vector<2x128xf32>
    %78 = arith.negf %77 : vector<2x128xf32>
    %79 = math.exp %78 : vector<2x128xf32>
    %cst_31 = arith.constant 1.000000e+00 : f32
    %80 = vector.broadcast %cst_31 : f32 to vector<2x128xf32>
    %81 = arith.addf %80, %79 : vector<2x128xf32>
    %82 = arith.divf %80, %81 : vector<2x128xf32>
    %83 = vector.extract_strided_slice %70 {offsets = [0, 256], sizes = [2, 128], strides = [1, 1]} : vector<2x512xf32> to vector<2x128xf32>
    %84 = math.tanh %83 : vector<2x128xf32>
    %85 = vector.extract_strided_slice %70 {offsets = [0, 384], sizes = [2, 128], strides = [1, 1]} : vector<2x512xf32> to vector<2x128xf32>
    %86 = arith.negf %85 : vector<2x128xf32>
    %87 = math.exp %86 : vector<2x128xf32>
    %cst_32 = arith.constant 1.000000e+00 : f32
    %88 = vector.broadcast %cst_32 : f32 to vector<2x128xf32>
    %89 = arith.addf %88, %87 : vector<2x128xf32>
    %90 = arith.divf %88, %89 : vector<2x128xf32>
    %91 = arith.mulf %82, %65 : vector<2x128xf32>
    %92 = arith.mulf %76, %84 : vector<2x128xf32>
    %93 = arith.addf %91, %92 : vector<2x128xf32>
    %94 = math.tanh %93 : vector<2x128xf32>
    %95 = arith.mulf %90, %94 : vector<2x128xf32>
    %96 = tpu.concatenate %95, %65 in 1 : vector<2x128xf32>, vector<2x128xf32> -> vector<2x256xf32>
    %97 = arith.truncf %96 : vector<2x256xf32> to vector<2x256xbf16>
    %c0_33 = arith.constant 0 : index
    %c0_34 = arith.constant 0 : index
    %98 = vector.load %arg10[%c0_33, %c0_34] : memref<256x512xbf16, #tpu.memory_space<vmem>>, vector<256x512xbf16>
    %cst_35 = arith.constant dense<0.000000e+00> : vector<2x512xf32>
    %99 = tpu.matmul %97, %98, %cst_35 {dimension_numbers = #tpu.dot_dimension_numbers<[1], [0], [0], [1], [0, 0, 1, 1], [], []>} : vector<2x256xbf16>, vector<256x512xbf16>, vector<2x512xf32> -> vector<2x512xf32>
    %c0_36 = arith.constant 0 : index
    %c0_37 = arith.constant 0 : index
    %100 = vector.load %arg11[%c0_36, %c0_37] : memref<1x512xf32, #tpu.memory_space<vmem>>, vector<1x512xf32>
    %101 = vector.broadcast %100 : vector<1x512xf32> to vector<2x512xf32>
    %102 = arith.addf %99, %101 : vector<2x512xf32>
    %103 = vector.extract_strided_slice %102 {offsets = [0, 0], sizes = [2, 128], strides = [1, 1]} : vector<2x512xf32> to vector<2x128xf32>
    %104 = arith.negf %103 : vector<2x128xf32>
    %105 = math.exp %104 : vector<2x128xf32>
    %cst_38 = arith.constant 1.000000e+00 : f32
    %106 = vector.broadcast %cst_38 : f32 to vector<2x128xf32>
    %107 = arith.addf %106, %105 : vector<2x128xf32>
    %108 = arith.divf %106, %107 : vector<2x128xf32>
    %109 = vector.extract_strided_slice %102 {offsets = [0, 128], sizes = [2, 128], strides = [1, 1]} : vector<2x512xf32> to vector<2x128xf32>
    %110 = arith.negf %109 : vector<2x128xf32>
    %111 = math.exp %110 : vector<2x128xf32>
    %cst_39 = arith.constant 1.000000e+00 : f32
    %112 = vector.broadcast %cst_39 : f32 to vector<2x128xf32>
    %113 = arith.addf %112, %111 : vector<2x128xf32>
    %114 = arith.divf %112, %113 : vector<2x128xf32>
    %115 = vector.extract_strided_slice %102 {offsets = [0, 256], sizes = [2, 128], strides = [1, 1]} : vector<2x512xf32> to vector<2x128xf32>
    %116 = math.tanh %115 : vector<2x128xf32>
    %117 = vector.extract_strided_slice %102 {offsets = [0, 384], sizes = [2, 128], strides = [1, 1]} : vector<2x512xf32> to vector<2x128xf32>
    %118 = arith.negf %117 : vector<2x128xf32>
    %119 = math.exp %118 : vector<2x128xf32>
    %cst_40 = arith.constant 1.000000e+00 : f32
    %120 = vector.broadcast %cst_40 : f32 to vector<2x128xf32>
    %121 = arith.addf %120, %119 : vector<2x128xf32>
    %122 = arith.divf %120, %121 : vector<2x128xf32>
    %123 = arith.mulf %114, %65 : vector<2x128xf32>
    %124 = arith.mulf %108, %116 : vector<2x128xf32>
    %125 = arith.addf %123, %124 : vector<2x128xf32>
    %126 = math.tanh %125 : vector<2x128xf32>
    %127 = arith.mulf %122, %126 : vector<2x128xf32>
    %128 = vector.extract_strided_slice %64 {offsets = [2, 0], sizes = [2, 512], strides = [1, 1]} : vector<14x512xf32> to vector<2x512xf32>
    %129 = arith.truncf %95 : vector<2x128xf32> to vector<2x128xbf16>
    %c0_41 = arith.constant 0 : index
    %c0_42 = arith.constant 0 : index
    %130 = vector.load %arg9[%c0_41, %c0_42] : memref<128x512xbf16, #tpu.memory_space<vmem>>, vector<128x512xbf16>
    %cst_43 = arith.constant dense<0.000000e+00> : vector<2x512xf32>
    %131 = tpu.matmul %129, %130, %cst_43 {dimension_numbers = #tpu.dot_dimension_numbers<[1], [0], [0], [1], [0, 0, 1, 1], [], []>} : vector<2x128xbf16>, vector<128x512xbf16>, vector<2x512xf32> -> vector<2x512xf32>
    %132 = arith.addf %128, %131 : vector<2x512xf32>
    %133 = vector.extract_strided_slice %132 {offsets = [0, 0], sizes = [2, 128], strides = [1, 1]} : vector<2x512xf32> to vector<2x128xf32>
    %134 = arith.negf %133 : vector<2x128xf32>
    %135 = math.exp %134 : vector<2x128xf32>
    %cst_44 = arith.constant 1.000000e+00 : f32
    %136 = vector.broadcast %cst_44 : f32 to vector<2x128xf32>
    %137 = arith.addf %136, %135 : vector<2x128xf32>
    %138 = arith.divf %136, %137 : vector<2x128xf32>
    %139 = vector.extract_strided_slice %132 {offsets = [0, 128], sizes = [2, 128], strides = [1, 1]} : vector<2x512xf32> to vector<2x128xf32>
    %140 = arith.negf %139 : vector<2x128xf32>
    %141 = math.exp %140 : vector<2x128xf32>
    %cst_45 = arith.constant 1.000000e+00 : f32
    %142 = vector.broadcast %cst_45 : f32 to vector<2x128xf32>
    %143 = arith.addf %142, %141 : vector<2x128xf32>
    %144 = arith.divf %142, %143 : vector<2x128xf32>
    %145 = vector.extract_strided_slice %132 {offsets = [0, 256], sizes = [2, 128], strides = [1, 1]} : vector<2x512xf32> to vector<2x128xf32>
    %146 = math.tanh %145 : vector<2x128xf32>
    %147 = vector.extract_strided_slice %132 {offsets = [0, 384], sizes = [2, 128], strides = [1, 1]} : vector<2x512xf32> to vector<2x128xf32>
    %148 = arith.negf %147 : vector<2x128xf32>
    %149 = math.exp %148 : vector<2x128xf32>
    %cst_46 = arith.constant 1.000000e+00 : f32
    %150 = vector.broadcast %cst_46 : f32 to vector<2x128xf32>
    %151 = arith.addf %150, %149 : vector<2x128xf32>
    %152 = arith.divf %150, %151 : vector<2x128xf32>
    %153 = arith.mulf %144, %93 : vector<2x128xf32>
    %154 = arith.mulf %138, %146 : vector<2x128xf32>
    %155 = arith.addf %153, %154 : vector<2x128xf32>
    %156 = math.tanh %155 : vector<2x128xf32>
    %157 = arith.mulf %152, %156 : vector<2x128xf32>
    %158 = tpu.concatenate %157, %127 in 1 : vector<2x128xf32>, vector<2x128xf32> -> vector<2x256xf32>
    %159 = arith.truncf %158 : vector<2x256xf32> to vector<2x256xbf16>
    %c0_47 = arith.constant 0 : index
    %c0_48 = arith.constant 0 : index
    %160 = vector.load %arg10[%c0_47, %c0_48] : memref<256x512xbf16, #tpu.memory_space<vmem>>, vector<256x512xbf16>
    %cst_49 = arith.constant dense<0.000000e+00> : vector<2x512xf32>
    %161 = tpu.matmul %159, %160, %cst_49 {dimension_numbers = #tpu.dot_dimension_numbers<[1], [0], [0], [1], [0, 0, 1, 1], [], []>} : vector<2x256xbf16>, vector<256x512xbf16>, vector<2x512xf32> -> vector<2x512xf32>
    %c0_50 = arith.constant 0 : index
    %c0_51 = arith.constant 0 : index
    %162 = vector.load %arg11[%c0_50, %c0_51] : memref<1x512xf32, #tpu.memory_space<vmem>>, vector<1x512xf32>
    %163 = vector.broadcast %162 : vector<1x512xf32> to vector<2x512xf32>
    %164 = arith.addf %161, %163 : vector<2x512xf32>
    %165 = vector.extract_strided_slice %164 {offsets = [0, 0], sizes = [2, 128], strides = [1, 1]} : vector<2x512xf32> to vector<2x128xf32>
    %166 = arith.negf %165 : vector<2x128xf32>
    %167 = math.exp %166 : vector<2x128xf32>
    %cst_52 = arith.constant 1.000000e+00 : f32
    %168 = vector.broadcast %cst_52 : f32 to vector<2x128xf32>
    %169 = arith.addf %168, %167 : vector<2x128xf32>
    %170 = arith.divf %168, %169 : vector<2x128xf32>
    %171 = vector.extract_strided_slice %164 {offsets = [0, 128], sizes = [2, 128], strides = [1, 1]} : vector<2x512xf32> to vector<2x128xf32>
    %172 = arith.negf %171 : vector<2x128xf32>
    %173 = math.exp %172 : vector<2x128xf32>
    %cst_53 = arith.constant 1.000000e+00 : f32
    %174 = vector.broadcast %cst_53 : f32 to vector<2x128xf32>
    %175 = arith.addf %174, %173 : vector<2x128xf32>
    %176 = arith.divf %174, %175 : vector<2x128xf32>
    %177 = vector.extract_strided_slice %164 {offsets = [0, 256], sizes = [2, 128], strides = [1, 1]} : vector<2x512xf32> to vector<2x128xf32>
    %178 = math.tanh %177 : vector<2x128xf32>
    %179 = vector.extract_strided_slice %164 {offsets = [0, 384], sizes = [2, 128], strides = [1, 1]} : vector<2x512xf32> to vector<2x128xf32>
    %180 = arith.negf %179 : vector<2x128xf32>
    %181 = math.exp %180 : vector<2x128xf32>
    %cst_54 = arith.constant 1.000000e+00 : f32
    %182 = vector.broadcast %cst_54 : f32 to vector<2x128xf32>
    %183 = arith.addf %182, %181 : vector<2x128xf32>
    %184 = arith.divf %182, %183 : vector<2x128xf32>
    %185 = arith.mulf %176, %125 : vector<2x128xf32>
    %186 = arith.mulf %170, %178 : vector<2x128xf32>
    %187 = arith.addf %185, %186 : vector<2x128xf32>
    %188 = math.tanh %187 : vector<2x128xf32>
    %189 = arith.mulf %184, %188 : vector<2x128xf32>
    %190 = vector.extract_strided_slice %64 {offsets = [4, 0], sizes = [2, 512], strides = [1, 1]} : vector<14x512xf32> to vector<2x512xf32>
    %191 = arith.truncf %157 : vector<2x128xf32> to vector<2x128xbf16>
    %c0_55 = arith.constant 0 : index
    %c0_56 = arith.constant 0 : index
    %192 = vector.load %arg9[%c0_55, %c0_56] : memref<128x512xbf16, #tpu.memory_space<vmem>>, vector<128x512xbf16>
    %cst_57 = arith.constant dense<0.000000e+00> : vector<2x512xf32>
    %193 = tpu.matmul %191, %192, %cst_57 {dimension_numbers = #tpu.dot_dimension_numbers<[1], [0], [0], [1], [0, 0, 1, 1], [], []>} : vector<2x128xbf16>, vector<128x512xbf16>, vector<2x512xf32> -> vector<2x512xf32>
    %194 = arith.addf %190, %193 : vector<2x512xf32>
    %195 = vector.extract_strided_slice %194 {offsets = [0, 0], sizes = [2, 128], strides = [1, 1]} : vector<2x512xf32> to vector<2x128xf32>
    %196 = arith.negf %195 : vector<2x128xf32>
    %197 = math.exp %196 : vector<2x128xf32>
    %cst_58 = arith.constant 1.000000e+00 : f32
    %198 = vector.broadcast %cst_58 : f32 to vector<2x128xf32>
    %199 = arith.addf %198, %197 : vector<2x128xf32>
    %200 = arith.divf %198, %199 : vector<2x128xf32>
    %201 = vector.extract_strided_slice %194 {offsets = [0, 128], sizes = [2, 128], strides = [1, 1]} : vector<2x512xf32> to vector<2x128xf32>
    %202 = arith.negf %201 : vector<2x128xf32>
    %203 = math.exp %202 : vector<2x128xf32>
    %cst_59 = arith.constant 1.000000e+00 : f32
    %204 = vector.broadcast %cst_59 : f32 to vector<2x128xf32>
    %205 = arith.addf %204, %203 : vector<2x128xf32>
    %206 = arith.divf %204, %205 : vector<2x128xf32>
    %207 = vector.extract_strided_slice %194 {offsets = [0, 256], sizes = [2, 128], strides = [1, 1]} : vector<2x512xf32> to vector<2x128xf32>
    %208 = math.tanh %207 : vector<2x128xf32>
    %209 = vector.extract_strided_slice %194 {offsets = [0, 384], sizes = [2, 128], strides = [1, 1]} : vector<2x512xf32> to vector<2x128xf32>
    %210 = arith.negf %209 : vector<2x128xf32>
    %211 = math.exp %210 : vector<2x128xf32>
    %cst_60 = arith.constant 1.000000e+00 : f32
    %212 = vector.broadcast %cst_60 : f32 to vector<2x128xf32>
    %213 = arith.addf %212, %211 : vector<2x128xf32>
    %214 = arith.divf %212, %213 : vector<2x128xf32>
    %215 = arith.mulf %206, %155 : vector<2x128xf32>
    %216 = arith.mulf %200, %208 : vector<2x128xf32>
    %217 = arith.addf %215, %216 : vector<2x128xf32>
    %218 = math.tanh %217 : vector<2x128xf32>
    %219 = arith.mulf %214, %218 : vector<2x128xf32>
    %220 = tpu.concatenate %219, %189 in 1 : vector<2x128xf32>, vector<2x128xf32> -> vector<2x256xf32>
    %221 = arith.truncf %220 : vector<2x256xf32> to vector<2x256xbf16>
    %c0_61 = arith.constant 0 : index
    %c0_62 = arith.constant 0 : index
    %222 = vector.load %arg10[%c0_61, %c0_62] : memref<256x512xbf16, #tpu.memory_space<vmem>>, vector<256x512xbf16>
    %cst_63 = arith.constant dense<0.000000e+00> : vector<2x512xf32>
    %223 = tpu.matmul %221, %222, %cst_63 {dimension_numbers = #tpu.dot_dimension_numbers<[1], [0], [0], [1], [0, 0, 1, 1], [], []>} : vector<2x256xbf16>, vector<256x512xbf16>, vector<2x512xf32> -> vector<2x512xf32>
    %c0_64 = arith.constant 0 : index
    %c0_65 = arith.constant 0 : index
    %224 = vector.load %arg11[%c0_64, %c0_65] : memref<1x512xf32, #tpu.memory_space<vmem>>, vector<1x512xf32>
    %225 = vector.broadcast %224 : vector<1x512xf32> to vector<2x512xf32>
    %226 = arith.addf %223, %225 : vector<2x512xf32>
    %227 = vector.extract_strided_slice %226 {offsets = [0, 0], sizes = [2, 128], strides = [1, 1]} : vector<2x512xf32> to vector<2x128xf32>
    %228 = arith.negf %227 : vector<2x128xf32>
    %229 = math.exp %228 : vector<2x128xf32>
    %cst_66 = arith.constant 1.000000e+00 : f32
    %230 = vector.broadcast %cst_66 : f32 to vector<2x128xf32>
    %231 = arith.addf %230, %229 : vector<2x128xf32>
    %232 = arith.divf %230, %231 : vector<2x128xf32>
    %233 = vector.extract_strided_slice %226 {offsets = [0, 128], sizes = [2, 128], strides = [1, 1]} : vector<2x512xf32> to vector<2x128xf32>
    %234 = arith.negf %233 : vector<2x128xf32>
    %235 = math.exp %234 : vector<2x128xf32>
    %cst_67 = arith.constant 1.000000e+00 : f32
    %236 = vector.broadcast %cst_67 : f32 to vector<2x128xf32>
    %237 = arith.addf %236, %235 : vector<2x128xf32>
    %238 = arith.divf %236, %237 : vector<2x128xf32>
    %239 = vector.extract_strided_slice %226 {offsets = [0, 256], sizes = [2, 128], strides = [1, 1]} : vector<2x512xf32> to vector<2x128xf32>
    %240 = math.tanh %239 : vector<2x128xf32>
    %241 = vector.extract_strided_slice %226 {offsets = [0, 384], sizes = [2, 128], strides = [1, 1]} : vector<2x512xf32> to vector<2x128xf32>
    %242 = arith.negf %241 : vector<2x128xf32>
    %243 = math.exp %242 : vector<2x128xf32>
    %cst_68 = arith.constant 1.000000e+00 : f32
    %244 = vector.broadcast %cst_68 : f32 to vector<2x128xf32>
    %245 = arith.addf %244, %243 : vector<2x128xf32>
    %246 = arith.divf %244, %245 : vector<2x128xf32>
    %247 = arith.mulf %238, %187 : vector<2x128xf32>
    %248 = arith.mulf %232, %240 : vector<2x128xf32>
    %249 = arith.addf %247, %248 : vector<2x128xf32>
    %250 = math.tanh %249 : vector<2x128xf32>
    %251 = arith.mulf %246, %250 : vector<2x128xf32>
    %252 = vector.extract_strided_slice %64 {offsets = [6, 0], sizes = [2, 512], strides = [1, 1]} : vector<14x512xf32> to vector<2x512xf32>
    %253 = arith.truncf %219 : vector<2x128xf32> to vector<2x128xbf16>
    %c0_69 = arith.constant 0 : index
    %c0_70 = arith.constant 0 : index
    %254 = vector.load %arg9[%c0_69, %c0_70] : memref<128x512xbf16, #tpu.memory_space<vmem>>, vector<128x512xbf16>
    %cst_71 = arith.constant dense<0.000000e+00> : vector<2x512xf32>
    %255 = tpu.matmul %253, %254, %cst_71 {dimension_numbers = #tpu.dot_dimension_numbers<[1], [0], [0], [1], [0, 0, 1, 1], [], []>} : vector<2x128xbf16>, vector<128x512xbf16>, vector<2x512xf32> -> vector<2x512xf32>
    %256 = arith.addf %252, %255 : vector<2x512xf32>
    %257 = vector.extract_strided_slice %256 {offsets = [0, 0], sizes = [2, 128], strides = [1, 1]} : vector<2x512xf32> to vector<2x128xf32>
    %258 = arith.negf %257 : vector<2x128xf32>
    %259 = math.exp %258 : vector<2x128xf32>
    %cst_72 = arith.constant 1.000000e+00 : f32
    %260 = vector.broadcast %cst_72 : f32 to vector<2x128xf32>
    %261 = arith.addf %260, %259 : vector<2x128xf32>
    %262 = arith.divf %260, %261 : vector<2x128xf32>
    %263 = vector.extract_strided_slice %256 {offsets = [0, 128], sizes = [2, 128], strides = [1, 1]} : vector<2x512xf32> to vector<2x128xf32>
    %264 = arith.negf %263 : vector<2x128xf32>
    %265 = math.exp %264 : vector<2x128xf32>
    %cst_73 = arith.constant 1.000000e+00 : f32
    %266 = vector.broadcast %cst_73 : f32 to vector<2x128xf32>
    %267 = arith.addf %266, %265 : vector<2x128xf32>
    %268 = arith.divf %266, %267 : vector<2x128xf32>
    %269 = vector.extract_strided_slice %256 {offsets = [0, 256], sizes = [2, 128], strides = [1, 1]} : vector<2x512xf32> to vector<2x128xf32>
    %270 = math.tanh %269 : vector<2x128xf32>
    %271 = vector.extract_strided_slice %256 {offsets = [0, 384], sizes = [2, 128], strides = [1, 1]} : vector<2x512xf32> to vector<2x128xf32>
    %272 = arith.negf %271 : vector<2x128xf32>
    %273 = math.exp %272 : vector<2x128xf32>
    %cst_74 = arith.constant 1.000000e+00 : f32
    %274 = vector.broadcast %cst_74 : f32 to vector<2x128xf32>
    %275 = arith.addf %274, %273 : vector<2x128xf32>
    %276 = arith.divf %274, %275 : vector<2x128xf32>
    %277 = arith.mulf %268, %217 : vector<2x128xf32>
    %278 = arith.mulf %262, %270 : vector<2x128xf32>
    %279 = arith.addf %277, %278 : vector<2x128xf32>
    %280 = math.tanh %279 : vector<2x128xf32>
    %281 = arith.mulf %276, %280 : vector<2x128xf32>
    %282 = tpu.concatenate %281, %251 in 1 : vector<2x128xf32>, vector<2x128xf32> -> vector<2x256xf32>
    %283 = arith.truncf %282 : vector<2x256xf32> to vector<2x256xbf16>
    %c0_75 = arith.constant 0 : index
    %c0_76 = arith.constant 0 : index
    %284 = vector.load %arg10[%c0_75, %c0_76] : memref<256x512xbf16, #tpu.memory_space<vmem>>, vector<256x512xbf16>
    %cst_77 = arith.constant dense<0.000000e+00> : vector<2x512xf32>
    %285 = tpu.matmul %283, %284, %cst_77 {dimension_numbers = #tpu.dot_dimension_numbers<[1], [0], [0], [1], [0, 0, 1, 1], [], []>} : vector<2x256xbf16>, vector<256x512xbf16>, vector<2x512xf32> -> vector<2x512xf32>
    %c0_78 = arith.constant 0 : index
    %c0_79 = arith.constant 0 : index
    %286 = vector.load %arg11[%c0_78, %c0_79] : memref<1x512xf32, #tpu.memory_space<vmem>>, vector<1x512xf32>
    %287 = vector.broadcast %286 : vector<1x512xf32> to vector<2x512xf32>
    %288 = arith.addf %285, %287 : vector<2x512xf32>
    %289 = vector.extract_strided_slice %288 {offsets = [0, 0], sizes = [2, 128], strides = [1, 1]} : vector<2x512xf32> to vector<2x128xf32>
    %290 = arith.negf %289 : vector<2x128xf32>
    %291 = math.exp %290 : vector<2x128xf32>
    %cst_80 = arith.constant 1.000000e+00 : f32
    %292 = vector.broadcast %cst_80 : f32 to vector<2x128xf32>
    %293 = arith.addf %292, %291 : vector<2x128xf32>
    %294 = arith.divf %292, %293 : vector<2x128xf32>
    %295 = vector.extract_strided_slice %288 {offsets = [0, 128], sizes = [2, 128], strides = [1, 1]} : vector<2x512xf32> to vector<2x128xf32>
    %296 = arith.negf %295 : vector<2x128xf32>
    %297 = math.exp %296 : vector<2x128xf32>
    %cst_81 = arith.constant 1.000000e+00 : f32
    %298 = vector.broadcast %cst_81 : f32 to vector<2x128xf32>
    %299 = arith.addf %298, %297 : vector<2x128xf32>
    %300 = arith.divf %298, %299 : vector<2x128xf32>
    %301 = vector.extract_strided_slice %288 {offsets = [0, 256], sizes = [2, 128], strides = [1, 1]} : vector<2x512xf32> to vector<2x128xf32>
    %302 = math.tanh %301 : vector<2x128xf32>
    %303 = vector.extract_strided_slice %288 {offsets = [0, 384], sizes = [2, 128], strides = [1, 1]} : vector<2x512xf32> to vector<2x128xf32>
    %304 = arith.negf %303 : vector<2x128xf32>
    %305 = math.exp %304 : vector<2x128xf32>
    %cst_82 = arith.constant 1.000000e+00 : f32
    %306 = vector.broadcast %cst_82 : f32 to vector<2x128xf32>
    %307 = arith.addf %306, %305 : vector<2x128xf32>
    %308 = arith.divf %306, %307 : vector<2x128xf32>
    %309 = arith.mulf %300, %249 : vector<2x128xf32>
    %310 = arith.mulf %294, %302 : vector<2x128xf32>
    %311 = arith.addf %309, %310 : vector<2x128xf32>
    %312 = math.tanh %311 : vector<2x128xf32>
    %313 = arith.mulf %308, %312 : vector<2x128xf32>
    %314 = vector.extract_strided_slice %64 {offsets = [8, 0], sizes = [2, 512], strides = [1, 1]} : vector<14x512xf32> to vector<2x512xf32>
    %315 = arith.truncf %281 : vector<2x128xf32> to vector<2x128xbf16>
    %c0_83 = arith.constant 0 : index
    %c0_84 = arith.constant 0 : index
    %316 = vector.load %arg9[%c0_83, %c0_84] : memref<128x512xbf16, #tpu.memory_space<vmem>>, vector<128x512xbf16>
    %cst_85 = arith.constant dense<0.000000e+00> : vector<2x512xf32>
    %317 = tpu.matmul %315, %316, %cst_85 {dimension_numbers = #tpu.dot_dimension_numbers<[1], [0], [0], [1], [0, 0, 1, 1], [], []>} : vector<2x128xbf16>, vector<128x512xbf16>, vector<2x512xf32> -> vector<2x512xf32>
    %318 = arith.addf %314, %317 : vector<2x512xf32>
    %319 = vector.extract_strided_slice %318 {offsets = [0, 0], sizes = [2, 128], strides = [1, 1]} : vector<2x512xf32> to vector<2x128xf32>
    %320 = arith.negf %319 : vector<2x128xf32>
    %321 = math.exp %320 : vector<2x128xf32>
    %cst_86 = arith.constant 1.000000e+00 : f32
    %322 = vector.broadcast %cst_86 : f32 to vector<2x128xf32>
    %323 = arith.addf %322, %321 : vector<2x128xf32>
    %324 = arith.divf %322, %323 : vector<2x128xf32>
    %325 = vector.extract_strided_slice %318 {offsets = [0, 128], sizes = [2, 128], strides = [1, 1]} : vector<2x512xf32> to vector<2x128xf32>
    %326 = arith.negf %325 : vector<2x128xf32>
    %327 = math.exp %326 : vector<2x128xf32>
    %cst_87 = arith.constant 1.000000e+00 : f32
    %328 = vector.broadcast %cst_87 : f32 to vector<2x128xf32>
    %329 = arith.addf %328, %327 : vector<2x128xf32>
    %330 = arith.divf %328, %329 : vector<2x128xf32>
    %331 = vector.extract_strided_slice %318 {offsets = [0, 256], sizes = [2, 128], strides = [1, 1]} : vector<2x512xf32> to vector<2x128xf32>
    %332 = math.tanh %331 : vector<2x128xf32>
    %333 = vector.extract_strided_slice %318 {offsets = [0, 384], sizes = [2, 128], strides = [1, 1]} : vector<2x512xf32> to vector<2x128xf32>
    %334 = arith.negf %333 : vector<2x128xf32>
    %335 = math.exp %334 : vector<2x128xf32>
    %cst_88 = arith.constant 1.000000e+00 : f32
    %336 = vector.broadcast %cst_88 : f32 to vector<2x128xf32>
    %337 = arith.addf %336, %335 : vector<2x128xf32>
    %338 = arith.divf %336, %337 : vector<2x128xf32>
    %339 = arith.mulf %330, %279 : vector<2x128xf32>
    %340 = arith.mulf %324, %332 : vector<2x128xf32>
    %341 = arith.addf %339, %340 : vector<2x128xf32>
    %342 = math.tanh %341 : vector<2x128xf32>
    %343 = arith.mulf %338, %342 : vector<2x128xf32>
    %344 = tpu.concatenate %343, %313 in 1 : vector<2x128xf32>, vector<2x128xf32> -> vector<2x256xf32>
    %345 = arith.truncf %344 : vector<2x256xf32> to vector<2x256xbf16>
    %c0_89 = arith.constant 0 : index
    %c0_90 = arith.constant 0 : index
    %346 = vector.load %arg10[%c0_89, %c0_90] : memref<256x512xbf16, #tpu.memory_space<vmem>>, vector<256x512xbf16>
    %cst_91 = arith.constant dense<0.000000e+00> : vector<2x512xf32>
    %347 = tpu.matmul %345, %346, %cst_91 {dimension_numbers = #tpu.dot_dimension_numbers<[1], [0], [0], [1], [0, 0, 1, 1], [], []>} : vector<2x256xbf16>, vector<256x512xbf16>, vector<2x512xf32> -> vector<2x512xf32>
    %c0_92 = arith.constant 0 : index
    %c0_93 = arith.constant 0 : index
    %348 = vector.load %arg11[%c0_92, %c0_93] : memref<1x512xf32, #tpu.memory_space<vmem>>, vector<1x512xf32>
    %349 = vector.broadcast %348 : vector<1x512xf32> to vector<2x512xf32>
    %350 = arith.addf %347, %349 : vector<2x512xf32>
    %351 = vector.extract_strided_slice %350 {offsets = [0, 0], sizes = [2, 128], strides = [1, 1]} : vector<2x512xf32> to vector<2x128xf32>
    %352 = arith.negf %351 : vector<2x128xf32>
    %353 = math.exp %352 : vector<2x128xf32>
    %cst_94 = arith.constant 1.000000e+00 : f32
    %354 = vector.broadcast %cst_94 : f32 to vector<2x128xf32>
    %355 = arith.addf %354, %353 : vector<2x128xf32>
    %356 = arith.divf %354, %355 : vector<2x128xf32>
    %357 = vector.extract_strided_slice %350 {offsets = [0, 128], sizes = [2, 128], strides = [1, 1]} : vector<2x512xf32> to vector<2x128xf32>
    %358 = arith.negf %357 : vector<2x128xf32>
    %359 = math.exp %358 : vector<2x128xf32>
    %cst_95 = arith.constant 1.000000e+00 : f32
    %360 = vector.broadcast %cst_95 : f32 to vector<2x128xf32>
    %361 = arith.addf %360, %359 : vector<2x128xf32>
    %362 = arith.divf %360, %361 : vector<2x128xf32>
    %363 = vector.extract_strided_slice %350 {offsets = [0, 256], sizes = [2, 128], strides = [1, 1]} : vector<2x512xf32> to vector<2x128xf32>
    %364 = math.tanh %363 : vector<2x128xf32>
    %365 = vector.extract_strided_slice %350 {offsets = [0, 384], sizes = [2, 128], strides = [1, 1]} : vector<2x512xf32> to vector<2x128xf32>
    %366 = arith.negf %365 : vector<2x128xf32>
    %367 = math.exp %366 : vector<2x128xf32>
    %cst_96 = arith.constant 1.000000e+00 : f32
    %368 = vector.broadcast %cst_96 : f32 to vector<2x128xf32>
    %369 = arith.addf %368, %367 : vector<2x128xf32>
    %370 = arith.divf %368, %369 : vector<2x128xf32>
    %371 = arith.mulf %362, %311 : vector<2x128xf32>
    %372 = arith.mulf %356, %364 : vector<2x128xf32>
    %373 = arith.addf %371, %372 : vector<2x128xf32>
    %374 = math.tanh %373 : vector<2x128xf32>
    %375 = arith.mulf %370, %374 : vector<2x128xf32>
    %376 = vector.extract_strided_slice %64 {offsets = [10, 0], sizes = [2, 512], strides = [1, 1]} : vector<14x512xf32> to vector<2x512xf32>
    %377 = arith.truncf %343 : vector<2x128xf32> to vector<2x128xbf16>
    %c0_97 = arith.constant 0 : index
    %c0_98 = arith.constant 0 : index
    %378 = vector.load %arg9[%c0_97, %c0_98] : memref<128x512xbf16, #tpu.memory_space<vmem>>, vector<128x512xbf16>
    %cst_99 = arith.constant dense<0.000000e+00> : vector<2x512xf32>
    %379 = tpu.matmul %377, %378, %cst_99 {dimension_numbers = #tpu.dot_dimension_numbers<[1], [0], [0], [1], [0, 0, 1, 1], [], []>} : vector<2x128xbf16>, vector<128x512xbf16>, vector<2x512xf32> -> vector<2x512xf32>
    %380 = arith.addf %376, %379 : vector<2x512xf32>
    %381 = vector.extract_strided_slice %380 {offsets = [0, 0], sizes = [2, 128], strides = [1, 1]} : vector<2x512xf32> to vector<2x128xf32>
    %382 = arith.negf %381 : vector<2x128xf32>
    %383 = math.exp %382 : vector<2x128xf32>
    %cst_100 = arith.constant 1.000000e+00 : f32
    %384 = vector.broadcast %cst_100 : f32 to vector<2x128xf32>
    %385 = arith.addf %384, %383 : vector<2x128xf32>
    %386 = arith.divf %384, %385 : vector<2x128xf32>
    %387 = vector.extract_strided_slice %380 {offsets = [0, 128], sizes = [2, 128], strides = [1, 1]} : vector<2x512xf32> to vector<2x128xf32>
    %388 = arith.negf %387 : vector<2x128xf32>
    %389 = math.exp %388 : vector<2x128xf32>
    %cst_101 = arith.constant 1.000000e+00 : f32
    %390 = vector.broadcast %cst_101 : f32 to vector<2x128xf32>
    %391 = arith.addf %390, %389 : vector<2x128xf32>
    %392 = arith.divf %390, %391 : vector<2x128xf32>
    %393 = vector.extract_strided_slice %380 {offsets = [0, 256], sizes = [2, 128], strides = [1, 1]} : vector<2x512xf32> to vector<2x128xf32>
    %394 = math.tanh %393 : vector<2x128xf32>
    %395 = vector.extract_strided_slice %380 {offsets = [0, 384], sizes = [2, 128], strides = [1, 1]} : vector<2x512xf32> to vector<2x128xf32>
    %396 = arith.negf %395 : vector<2x128xf32>
    %397 = math.exp %396 : vector<2x128xf32>
    %cst_102 = arith.constant 1.000000e+00 : f32
    %398 = vector.broadcast %cst_102 : f32 to vector<2x128xf32>
    %399 = arith.addf %398, %397 : vector<2x128xf32>
    %400 = arith.divf %398, %399 : vector<2x128xf32>
    %401 = arith.mulf %392, %341 : vector<2x128xf32>
    %402 = arith.mulf %386, %394 : vector<2x128xf32>
    %403 = arith.addf %401, %402 : vector<2x128xf32>
    %404 = math.tanh %403 : vector<2x128xf32>
    %405 = arith.mulf %400, %404 : vector<2x128xf32>
    %406 = tpu.concatenate %405, %375 in 1 : vector<2x128xf32>, vector<2x128xf32> -> vector<2x256xf32>
    %407 = arith.truncf %406 : vector<2x256xf32> to vector<2x256xbf16>
    %c0_103 = arith.constant 0 : index
    %c0_104 = arith.constant 0 : index
    %408 = vector.load %arg10[%c0_103, %c0_104] : memref<256x512xbf16, #tpu.memory_space<vmem>>, vector<256x512xbf16>
    %cst_105 = arith.constant dense<0.000000e+00> : vector<2x512xf32>
    %409 = tpu.matmul %407, %408, %cst_105 {dimension_numbers = #tpu.dot_dimension_numbers<[1], [0], [0], [1], [0, 0, 1, 1], [], []>} : vector<2x256xbf16>, vector<256x512xbf16>, vector<2x512xf32> -> vector<2x512xf32>
    %c0_106 = arith.constant 0 : index
    %c0_107 = arith.constant 0 : index
    %410 = vector.load %arg11[%c0_106, %c0_107] : memref<1x512xf32, #tpu.memory_space<vmem>>, vector<1x512xf32>
    %411 = vector.broadcast %410 : vector<1x512xf32> to vector<2x512xf32>
    %412 = arith.addf %409, %411 : vector<2x512xf32>
    %413 = vector.extract_strided_slice %412 {offsets = [0, 0], sizes = [2, 128], strides = [1, 1]} : vector<2x512xf32> to vector<2x128xf32>
    %414 = arith.negf %413 : vector<2x128xf32>
    %415 = math.exp %414 : vector<2x128xf32>
    %cst_108 = arith.constant 1.000000e+00 : f32
    %416 = vector.broadcast %cst_108 : f32 to vector<2x128xf32>
    %417 = arith.addf %416, %415 : vector<2x128xf32>
    %418 = arith.divf %416, %417 : vector<2x128xf32>
    %419 = vector.extract_strided_slice %412 {offsets = [0, 128], sizes = [2, 128], strides = [1, 1]} : vector<2x512xf32> to vector<2x128xf32>
    %420 = arith.negf %419 : vector<2x128xf32>
    %421 = math.exp %420 : vector<2x128xf32>
    %cst_109 = arith.constant 1.000000e+00 : f32
    %422 = vector.broadcast %cst_109 : f32 to vector<2x128xf32>
    %423 = arith.addf %422, %421 : vector<2x128xf32>
    %424 = arith.divf %422, %423 : vector<2x128xf32>
    %425 = vector.extract_strided_slice %412 {offsets = [0, 256], sizes = [2, 128], strides = [1, 1]} : vector<2x512xf32> to vector<2x128xf32>
    %426 = math.tanh %425 : vector<2x128xf32>
    %427 = vector.extract_strided_slice %412 {offsets = [0, 384], sizes = [2, 128], strides = [1, 1]} : vector<2x512xf32> to vector<2x128xf32>
    %428 = arith.negf %427 : vector<2x128xf32>
    %429 = math.exp %428 : vector<2x128xf32>
    %cst_110 = arith.constant 1.000000e+00 : f32
    %430 = vector.broadcast %cst_110 : f32 to vector<2x128xf32>
    %431 = arith.addf %430, %429 : vector<2x128xf32>
    %432 = arith.divf %430, %431 : vector<2x128xf32>
    %433 = arith.mulf %424, %373 : vector<2x128xf32>
    %434 = arith.mulf %418, %426 : vector<2x128xf32>
    %435 = arith.addf %433, %434 : vector<2x128xf32>
    %436 = math.tanh %435 : vector<2x128xf32>
    %437 = arith.mulf %432, %436 : vector<2x128xf32>
    %438 = vector.extract_strided_slice %64 {offsets = [12, 0], sizes = [2, 512], strides = [1, 1]} : vector<14x512xf32> to vector<2x512xf32>
    %439 = arith.truncf %405 : vector<2x128xf32> to vector<2x128xbf16>
    %c0_111 = arith.constant 0 : index
    %c0_112 = arith.constant 0 : index
    %440 = vector.load %arg9[%c0_111, %c0_112] : memref<128x512xbf16, #tpu.memory_space<vmem>>, vector<128x512xbf16>
    %cst_113 = arith.constant dense<0.000000e+00> : vector<2x512xf32>
    %441 = tpu.matmul %439, %440, %cst_113 {dimension_numbers = #tpu.dot_dimension_numbers<[1], [0], [0], [1], [0, 0, 1, 1], [], []>} : vector<2x128xbf16>, vector<128x512xbf16>, vector<2x512xf32> -> vector<2x512xf32>
    %442 = arith.addf %438, %441 : vector<2x512xf32>
    %443 = vector.extract_strided_slice %442 {offsets = [0, 0], sizes = [2, 128], strides = [1, 1]} : vector<2x512xf32> to vector<2x128xf32>
    %444 = arith.negf %443 : vector<2x128xf32>
    %445 = math.exp %444 : vector<2x128xf32>
    %cst_114 = arith.constant 1.000000e+00 : f32
    %446 = vector.broadcast %cst_114 : f32 to vector<2x128xf32>
    %447 = arith.addf %446, %445 : vector<2x128xf32>
    %448 = arith.divf %446, %447 : vector<2x128xf32>
    %449 = vector.extract_strided_slice %442 {offsets = [0, 128], sizes = [2, 128], strides = [1, 1]} : vector<2x512xf32> to vector<2x128xf32>
    %450 = arith.negf %449 : vector<2x128xf32>
    %451 = math.exp %450 : vector<2x128xf32>
    %cst_115 = arith.constant 1.000000e+00 : f32
    %452 = vector.broadcast %cst_115 : f32 to vector<2x128xf32>
    %453 = arith.addf %452, %451 : vector<2x128xf32>
    %454 = arith.divf %452, %453 : vector<2x128xf32>
    %455 = vector.extract_strided_slice %442 {offsets = [0, 256], sizes = [2, 128], strides = [1, 1]} : vector<2x512xf32> to vector<2x128xf32>
    %456 = math.tanh %455 : vector<2x128xf32>
    %457 = vector.extract_strided_slice %442 {offsets = [0, 384], sizes = [2, 128], strides = [1, 1]} : vector<2x512xf32> to vector<2x128xf32>
    %458 = arith.negf %457 : vector<2x128xf32>
    %459 = math.exp %458 : vector<2x128xf32>
    %cst_116 = arith.constant 1.000000e+00 : f32
    %460 = vector.broadcast %cst_116 : f32 to vector<2x128xf32>
    %461 = arith.addf %460, %459 : vector<2x128xf32>
    %462 = arith.divf %460, %461 : vector<2x128xf32>
    %463 = arith.mulf %454, %403 : vector<2x128xf32>
    %464 = arith.mulf %448, %456 : vector<2x128xf32>
    %465 = arith.addf %463, %464 : vector<2x128xf32>
    %466 = math.tanh %465 : vector<2x128xf32>
    %467 = arith.mulf %462, %466 : vector<2x128xf32>
    %468 = tpu.concatenate %467, %437 in 1 : vector<2x128xf32>, vector<2x128xf32> -> vector<2x256xf32>
    %469 = arith.truncf %468 : vector<2x256xf32> to vector<2x256xbf16>
    %c0_117 = arith.constant 0 : index
    %c0_118 = arith.constant 0 : index
    %470 = vector.load %arg10[%c0_117, %c0_118] : memref<256x512xbf16, #tpu.memory_space<vmem>>, vector<256x512xbf16>
    %cst_119 = arith.constant dense<0.000000e+00> : vector<2x512xf32>
    %471 = tpu.matmul %469, %470, %cst_119 {dimension_numbers = #tpu.dot_dimension_numbers<[1], [0], [0], [1], [0, 0, 1, 1], [], []>} : vector<2x256xbf16>, vector<256x512xbf16>, vector<2x512xf32> -> vector<2x512xf32>
    %c0_120 = arith.constant 0 : index
    %c0_121 = arith.constant 0 : index
    %472 = vector.load %arg11[%c0_120, %c0_121] : memref<1x512xf32, #tpu.memory_space<vmem>>, vector<1x512xf32>
    %473 = vector.broadcast %472 : vector<1x512xf32> to vector<2x512xf32>
    %474 = arith.addf %471, %473 : vector<2x512xf32>
    %475 = vector.extract_strided_slice %474 {offsets = [0, 0], sizes = [2, 128], strides = [1, 1]} : vector<2x512xf32> to vector<2x128xf32>
    %476 = arith.negf %475 : vector<2x128xf32>
    %477 = math.exp %476 : vector<2x128xf32>
    %cst_122 = arith.constant 1.000000e+00 : f32
    %478 = vector.broadcast %cst_122 : f32 to vector<2x128xf32>
    %479 = arith.addf %478, %477 : vector<2x128xf32>
    %480 = arith.divf %478, %479 : vector<2x128xf32>
    %481 = vector.extract_strided_slice %474 {offsets = [0, 128], sizes = [2, 128], strides = [1, 1]} : vector<2x512xf32> to vector<2x128xf32>
    %482 = arith.negf %481 : vector<2x128xf32>
    %483 = math.exp %482 : vector<2x128xf32>
    %cst_123 = arith.constant 1.000000e+00 : f32
    %484 = vector.broadcast %cst_123 : f32 to vector<2x128xf32>
    %485 = arith.addf %484, %483 : vector<2x128xf32>
    %486 = arith.divf %484, %485 : vector<2x128xf32>
    %487 = vector.extract_strided_slice %474 {offsets = [0, 256], sizes = [2, 128], strides = [1, 1]} : vector<2x512xf32> to vector<2x128xf32>
    %488 = math.tanh %487 : vector<2x128xf32>
    %489 = vector.extract_strided_slice %474 {offsets = [0, 384], sizes = [2, 128], strides = [1, 1]} : vector<2x512xf32> to vector<2x128xf32>
    %490 = arith.negf %489 : vector<2x128xf32>
    %491 = math.exp %490 : vector<2x128xf32>
    %cst_124 = arith.constant 1.000000e+00 : f32
    %492 = vector.broadcast %cst_124 : f32 to vector<2x128xf32>
    %493 = arith.addf %492, %491 : vector<2x128xf32>
    %494 = arith.divf %492, %493 : vector<2x128xf32>
    %495 = arith.mulf %486, %435 : vector<2x128xf32>
    %496 = arith.mulf %480, %488 : vector<2x128xf32>
    %497 = arith.addf %495, %496 : vector<2x128xf32>
    %498 = math.tanh %497 : vector<2x128xf32>
    %499 = arith.mulf %494, %498 : vector<2x128xf32>
    %500 = vector.extract_strided_slice %127 {offsets = [0, 0], sizes = [1, 128], strides = [1, 1]} : vector<2x128xf32> to vector<1x128xf32>
    %501 = vector.extract_strided_slice %189 {offsets = [0, 0], sizes = [1, 128], strides = [1, 1]} : vector<2x128xf32> to vector<1x128xf32>
    %502 = vector.extract_strided_slice %251 {offsets = [0, 0], sizes = [1, 128], strides = [1, 1]} : vector<2x128xf32> to vector<1x128xf32>
    %503 = vector.extract_strided_slice %313 {offsets = [0, 0], sizes = [1, 128], strides = [1, 1]} : vector<2x128xf32> to vector<1x128xf32>
    %504 = vector.extract_strided_slice %375 {offsets = [0, 0], sizes = [1, 128], strides = [1, 1]} : vector<2x128xf32> to vector<1x128xf32>
    %505 = vector.extract_strided_slice %437 {offsets = [0, 0], sizes = [1, 128], strides = [1, 1]} : vector<2x128xf32> to vector<1x128xf32>
    %506 = vector.extract_strided_slice %499 {offsets = [0, 0], sizes = [1, 128], strides = [1, 1]} : vector<2x128xf32> to vector<1x128xf32>
    %507 = vector.extract_strided_slice %127 {offsets = [1, 0], sizes = [1, 128], strides = [1, 1]} : vector<2x128xf32> to vector<1x128xf32>
    %508 = vector.extract_strided_slice %189 {offsets = [1, 0], sizes = [1, 128], strides = [1, 1]} : vector<2x128xf32> to vector<1x128xf32>
    %509 = vector.extract_strided_slice %251 {offsets = [1, 0], sizes = [1, 128], strides = [1, 1]} : vector<2x128xf32> to vector<1x128xf32>
    %510 = vector.extract_strided_slice %313 {offsets = [1, 0], sizes = [1, 128], strides = [1, 1]} : vector<2x128xf32> to vector<1x128xf32>
    %511 = vector.extract_strided_slice %375 {offsets = [1, 0], sizes = [1, 128], strides = [1, 1]} : vector<2x128xf32> to vector<1x128xf32>
    %512 = vector.extract_strided_slice %437 {offsets = [1, 0], sizes = [1, 128], strides = [1, 1]} : vector<2x128xf32> to vector<1x128xf32>
    %513 = vector.extract_strided_slice %499 {offsets = [1, 0], sizes = [1, 128], strides = [1, 1]} : vector<2x128xf32> to vector<1x128xf32>
    %514 = tpu.concatenate %500, %501, %502, %503, %504, %505, %506, %507, %508, %509, %510, %511, %512, %513 in 0 : vector<1x128xf32>, vector<1x128xf32>, vector<1x128xf32>, vector<1x128xf32>, vector<1x128xf32>, vector<1x128xf32>, vector<1x128xf32>, vector<1x128xf32>, vector<1x128xf32>, vector<1x128xf32>, vector<1x128xf32>, vector<1x128xf32>, vector<1x128xf32>, vector<1x128xf32> -> vector<14x128xf32>
    %515 = arith.truncf %514 : vector<14x128xf32> to vector<14x128xbf16>
    %c0_125 = arith.constant 0 : index
    %c0_126 = arith.constant 0 : index
    %516 = vector.load %arg12[%c0_125, %c0_126] : memref<128x128xbf16, #tpu.memory_space<vmem>>, vector<128x128xbf16>
    %cst_127 = arith.constant dense<0.000000e+00> : vector<14x128xf32>
    %517 = tpu.matmul %515, %516, %cst_127 {dimension_numbers = #tpu.dot_dimension_numbers<[1], [0], [0], [1], [0, 0, 1, 1], [], []>} : vector<14x128xbf16>, vector<128x128xbf16>, vector<14x128xf32> -> vector<14x128xf32>
    %c0_128 = arith.constant 0 : index
    %c0_129 = arith.constant 0 : index
    %518 = vector.load %arg13[%c0_128, %c0_129] : memref<1x128xf32, #tpu.memory_space<vmem>>, vector<1x128xf32>
    %519 = vector.broadcast %518 : vector<1x128xf32> to vector<14x128xf32>
    %520 = arith.addf %517, %519 : vector<14x128xf32>
    %cst_130 = arith.constant 0.000000e+00 : f32
    %521 = vector.broadcast %cst_130 : f32 to vector<14x128xf32>
    %522 = arith.cmpf oge, %520, %521 : vector<14x128xf32>
    %cst_131 = arith.constant 5.000000e-02 : f32
    %523 = vector.broadcast %cst_131 : f32 to vector<14x128xf32>
    %524 = arith.mulf %523, %520 : vector<14x128xf32>
    %525 = arith.select %522, %520, %524 : vector<14x128xi1>, vector<14x128xf32>
    %526 = arith.truncf %525 : vector<14x128xf32> to vector<14x128xbf16>
    %c0_132 = arith.constant 0 : index
    %c0_133 = arith.constant 0 : index
    %527 = vector.load %arg14[%c0_132, %c0_133] : memref<128x128xbf16, #tpu.memory_space<vmem>>, vector<128x128xbf16>
    %cst_134 = arith.constant dense<0.000000e+00> : vector<14x128xf32>
    %528 = tpu.matmul %526, %527, %cst_134 {dimension_numbers = #tpu.dot_dimension_numbers<[1], [0], [0], [1], [0, 0, 1, 1], [], []>} : vector<14x128xbf16>, vector<128x128xbf16>, vector<14x128xf32> -> vector<14x128xf32>
    %c0_135 = arith.constant 0 : index
    %c0_136 = arith.constant 0 : index
    %529 = vector.load %arg15[%c0_135, %c0_136] : memref<1x128xf32, #tpu.memory_space<vmem>>, vector<1x128xf32>
    %530 = vector.broadcast %529 : vector<1x128xf32> to vector<14x128xf32>
    %531 = arith.addf %528, %530 : vector<14x128xf32>
    %cst_137 = arith.constant 0.000000e+00 : f32
    %532 = vector.broadcast %cst_137 : f32 to vector<14x128xf32>
    %533 = arith.cmpf oge, %531, %532 : vector<14x128xf32>
    %cst_138 = arith.constant 5.000000e-02 : f32
    %534 = vector.broadcast %cst_138 : f32 to vector<14x128xf32>
    %535 = arith.mulf %534, %531 : vector<14x128xf32>
    %536 = arith.select %533, %531, %535 : vector<14x128xi1>, vector<14x128xf32>
    %537 = arith.truncf %536 : vector<14x128xf32> to vector<14x128xbf16>
    %c0_139 = arith.constant 0 : index
    %c0_140 = arith.constant 0 : index
    %538 = vector.load %arg16[%c0_139, %c0_140] : memref<128x128xbf16, #tpu.memory_space<vmem>>, vector<128x128xbf16>
    %cst_141 = arith.constant dense<0.000000e+00> : vector<14x128xf32>
    %539 = tpu.matmul %537, %538, %cst_141 {dimension_numbers = #tpu.dot_dimension_numbers<[1], [0], [0], [1], [0, 0, 1, 1], [], []>} : vector<14x128xbf16>, vector<128x128xbf16>, vector<14x128xf32> -> vector<14x128xf32>
    %c0_142 = arith.constant 0 : index
    %c0_143 = arith.constant 0 : index
    %540 = vector.load %arg17[%c0_142, %c0_143] : memref<1x128xf32, #tpu.memory_space<vmem>>, vector<1x128xf32>
    %541 = vector.broadcast %540 : vector<1x128xf32> to vector<14x128xf32>
    %542 = arith.addf %539, %541 : vector<14x128xf32>
    %cst_144 = arith.constant dense<0xFF800000> : vector<14xf32>
    %543 = vector.multi_reduction <maximumf>, %542, %cst_144 [1] : vector<14x128xf32> to vector<14xf32>
    %544 = vector.shape_cast %543 : vector<14xf32> to vector<14x1xf32>
    %545 = vector.broadcast %544 : vector<14x1xf32> to vector<14x128xf32>
    %546 = arith.subf %542, %545 : vector<14x128xf32>
    %547 = math.exp %546 : vector<14x128xf32>
    %cst_145 = arith.constant dense<0.000000e+00> : vector<14xf32>
    %548 = vector.multi_reduction <add>, %547, %cst_145 [1] : vector<14x128xf32> to vector<14xf32>
    %549 = vector.shape_cast %548 : vector<14xf32> to vector<14x1xf32>
    %550 = math.log %549 : vector<14x1xf32>
    %551 = arith.addf %544, %550 : vector<14x1xf32>
    %552 = vector.broadcast %551 : vector<14x1xf32> to vector<14x128xf32>
    %553 = arith.subf %542, %552 : vector<14x128xf32>
    %c0_146 = arith.constant 0 : index
    %c0_147 = arith.constant 0 : index
    %554 = vector.load %arg18[%c0_146, %c0_147] : memref<14x128xf32, #tpu.memory_space<vmem>>, vector<14x128xf32>
    tpu.vector_store %arg18[%c0_146, %c0_147], %553 {strides = array<i32>} : memref<14x128xf32, #tpu.memory_space<vmem>>, vector<14x128xf32>,
    return
  }
}

</mosaic_0001>

<llo_original>
// kernel: forward.1
$region0: #{forward.1}
  #allocation0 [shape = 'u32[]', space=smem, size = 0x4, offset = 0x4, fixed_abs, tag = 'smem constant byte address 0x4 - core index']
  #allocation1 [shape = 'u32[72,128]{1,0:T(1,128)}', space=vmem, size = 0x9000, scoped, tag = 'internal scratch']
  %s0 = inlined_call_operand.hbm [shape: f32[8,34], index: 0, kind: input, shape index: {}]
  %s1 = inlined_call_operand.hbm [shape: bf16[34,256], index: 1, kind: input, shape index: {}]
  %s2 = inlined_call_operand.hbm [shape: f32[1,128], index: 2, kind: input, shape index: {}]
  %s3 = inlined_call_operand.hbm [shape: bf16[128,256], index: 3, kind: input, shape index: {}]
  %s4 = inlined_call_operand.hbm [shape: f32[1,128], index: 4, kind: input, shape index: {}]
  %s5 = inlined_call_operand.hbm [shape: bf16[512,896], index: 5, kind: input, shape index: {}]
  %s6 = inlined_call_operand.hbm [shape: f32[1,128], index: 6, kind: input, shape index: {}]
  %s7 = inlined_call_operand.hbm [shape: bf16[128,512], index: 7, kind: input, shape index: {}]
  %s8 = inlined_call_operand.vmem [shape: f32[1,512], index: 8, kind: input, shape index: {}]
  %s9 = inlined_call_operand.hbm [shape: bf16[128,512], index: 9, kind: input, shape index: {}]
  %s10 = inlined_call_operand.hbm [shape: bf16[256,512], index: 10, kind: input, shape index: {}]
  %s11 = inlined_call_operand.vmem [shape: f32[1,512], index: 11, kind: input, shape index: {}]
  %s12 = inlined_call_operand.hbm [shape: bf16[128,128], index: 12, kind: input, shape index: {}]
  %s13 = inlined_call_operand.vmem [shape: f32[1,128], index: 13, kind: input, shape index: {}]
  %s14 = inlined_call_operand.hbm [shape: bf16[128,128], index: 14, kind: input, shape index: {}]
  %s15 = inlined_call_operand.vmem [shape: f32[1,128], index: 15, kind: input, shape index: {}]
  %s16 = inlined_call_operand.hbm [shape: bf16[128,128], index: 16, kind: input, shape index: {}]
  %s17 = inlined_call_operand.vmem [shape: f32[1,128], index: 17, kind: input, shape index: {}]
  %s18 = inlined_call_operand.vmem [shape: f32[14,128], index: 18, kind: output, shape index: {}]
  %s19 = sld [smem:[#allocation0]]
  $region134: #{forward.1} parent=0
    _
  %s21 = ssub.s32 1, %s19
  %s22 = scalar_select 0, %s21, %s19
  $region1: #{forward.1} parent=0
    #allocation2 [shape = 'u8[4096]{0}', space=vmem, size = 0x1000, scoped, tag = 'input window, operand 0, single buffered']
    #allocation3 [shape = 's32[1]{0}', space=sflag, size = 0x4, scoped, tag = 'scoped memory for forward.1']
    #allocation4 [shape = 'u8[20480]{0}', space=vmem, size = 0x5000, scoped, tag = 'input window, operand 1, single buffered']
    #allocation5 [shape = 's32[1]{0}', space=sflag, size = 0x4, scoped, tag = 'scoped memory for forward.1']
    #allocation6 [shape = 'u8[512]{0}', space=vmem, size = 0x400, scoped, tag = 'input window, operand 2, single buffered']
    #allocation7 [shape = 'u8[65536]{0}', space=vmem, size = 0x10000, scoped, tag = 'input window, operand 3, single buffered']
    #allocation8 [shape = 's32[1]{0}', space=sflag, size = 0x4, scoped, tag = 'scoped memory for forward.1']
    #allocation9 [shape = 'u8[512]{0}', space=vmem, size = 0x400, scoped, tag = 'input window, operand 4, single buffered']
    #allocation10 [shape = 'u8[917504]{0}', space=vmem, size = 0xe0000, scoped, tag = 'input window, operand 5, single buffered']
    #allocation11 [shape = 's32[1]{0}', space=sflag, size = 0x4, scoped, tag = 'scoped memory for forward.1']
    #allocation12 [shape = 'u8[512]{0}', space=vmem, size = 0x400, scoped, tag = 'input window, operand 6, single buffered']
    #allocation13 [shape = 'u8[131072]{0}', space=vmem, size = 0x20000, scoped, tag = 'input window, operand 7, single buffered']
    #allocation14 [shape = 's32[1]{0}', space=sflag, size = 0x4, scoped, tag = 'scoped memory for forward.1']
    #allocation15 [shape = 'u8[131072]{0}', space=vmem, size = 0x20000, scoped, tag = 'input window, operand 9, single buffered']
    #allocation16 [shape = 'u8[262144]{0}', space=vmem, size = 0x40000, scoped, tag = 'input window, operand 10, single buffered']
    #allocation17 [shape = 's32[1]{0}', space=sflag, size = 0x4, scoped, tag = 'scoped memory for forward.1']
    #allocation18 [shape = 'u8[32768]{0}', space=vmem, size = 0x8000, scoped, tag = 'input window, operand 12, single buffered']
    #allocation19 [shape = 'u8[32768]{0}', space=vmem, size = 0x8000, scoped, tag = 'input window, operand 14, single buffered']
    #allocation20 [shape = 's32[1]{0}', space=sflag, size = 0x4, scoped, tag = 'scoped memory for forward.1']
    #allocation21 [shape = 'u8[32768]{0}', space=vmem, size = 0x8000, scoped, tag = 'input window, operand 16, single buffered']
    %23 = vsyncpa [#allocation3], 0
    %24 = vsyncpa [#allocation5], 0
    %25 = vsyncpa [#allocation8], 0
    %26 = vsyncpa [#allocation11], 0
    %27 = vsyncpa [#allocation14], 0
    %28 = vsyncpa [#allocation17], 0
    %29 = vsyncpa [#allocation20], 0
    // Predicated region
    $region2: #{forward.1} parent=1 // pred_check
      _
    $region3: #{forward.1} parent=1 // pred_check_branch
      %31 = sbr.rel (0) target = $region5
    $region4: #{forward.1} parent=1 // pred_region
      %33 = vsyncadd [#allocation3], 0
      %s35 = sshll.u32 %s0, 4
      %s36 = int_to_ptr.hbm [resolvable:$true] %s35
      %s37 = sshll.u32 [#allocation2], 4
      %s38 = int_to_ptr.vmem [resolvable:$true] %s37
      %40 = dma.hbm_to_vmem [thread:$0]  %s36, 128, %s38, [#allocation3]
    $region5: #{forward.1} parent=1 // pred_fallthru
      _
    // Predicated region
    $region6: #{forward.1} parent=1 // pred_check
      _
    $region7: #{forward.1} parent=1 // pred_check_branch
      %42 = sbr.rel (0) target = $region9
    $region8: #{forward.1} parent=1 // pred_region
      %44 = vsyncadd [#allocation5], 0
      %s45 = sshll.u32 %s1, 4
      %s46 = int_to_ptr.hbm [resolvable:$true] %s45
      %s47 = sshll.u32 [#allocation4], 4
      %s48 = int_to_ptr.vmem [resolvable:$true] %s47
      %53 = dma.hbm_to_vmem [thread:$0]  %s46, 640, %s48, [#allocation5], 128, 128, 8
    $region9: #{forward.1} parent=1 // pred_fallthru
      _
    // Predicated region
    $region10: #{forward.1} parent=1 // pred_check
      _
    $region11: #{forward.1} parent=1 // pred_check_branch
      %55 = sbr.rel (0) target = $region13
    $region12: #{forward.1} parent=1 // pred_region
      %57 = vsyncadd [#allocation5], 0
      %s59 = sshll.u32 %s2, 4
      %s60 = int_to_ptr.hbm [resolvable:$true] %s59
      %s61 = sshll.u32 [#allocation6], 4
      %s62 = int_to_ptr.vmem [resolvable:$true] %s61
      %64 = dma.hbm_to_vmem [thread:$0]  %s60, 16, %s62, [#allocation5]
    $region13: #{forward.1} parent=1 // pred_fallthru
      _
    // Predicated region
    $region14: #{forward.1} parent=1 // pred_check
      _
    $region15: #{forward.1} parent=1 // pred_check_branch
      %66 = sbr.rel (0) target = $region17
    $region16: #{forward.1} parent=1 // pred_region
      %68 = vsyncadd [#allocation8], 0
      %s69 = sshll.u32 %s3, 4
      %s70 = int_to_ptr.hbm [resolvable:$true] %s69
      %s71 = sshll.u32 [#allocation7], 4
      %s72 = int_to_ptr.vmem [resolvable:$true] %s71
      %77 = dma.hbm_to_vmem [thread:$0]  %s70, 2048, %s72, [#allocation8], 128, 128, 8
    $region17: #{forward.1} parent=1 // pred_fallthru
      _
    // Predicated region
    $region18: #{forward.1} parent=1 // pred_check
      _
    $region19: #{forward.1} parent=1 // pred_check_branch
      %79 = sbr.rel (0) target = $region21
    $region20: #{forward.1} parent=1 // pred_region
      %81 = vsyncadd [#allocation8], 0
      %s83 = sshll.u32 %s4, 4
      %s84 = int_to_ptr.hbm [resolvable:$true] %s83
      %s85 = sshll.u32 [#allocation9], 4
      %s86 = int_to_ptr.vmem [resolvable:$true] %s85
      %88 = dma.hbm_to_vmem [thread:$0]  %s84, 16, %s86, [#allocation8]
    $region21: #{forward.1} parent=1 // pred_fallthru
      _
    // Predicated region
    $region22: #{forward.1} parent=1 // pred_check
      _
    $region23: #{forward.1} parent=1 // pred_check_branch
      %90 = sbr.rel (0) target = $region25
    $region24: #{forward.1} parent=1 // pred_region
      %92 = vsyncadd [#allocation11], 0
      %s93 = sshll.u32 %s5, 4
      %s94 = int_to_ptr.hbm [resolvable:$true] %s93
      %s95 = sshll.u32 [#allocation10], 4
      %s96 = int_to_ptr.vmem [resolvable:$true] %s95
      %101 = dma.hbm_to_vmem [thread:$0]  %s94, 28672, %s96, [#allocation11], 448, 448, 28
    $region25: #{forward.1} parent=1 // pred_fallthru
      _
    // Predicated region
    $region26: #{forward.1} parent=1 // pred_check
      _
    $region27: #{forward.1} parent=1 // pred_check_branch
      %103 = sbr.rel (0) target = $region29
    $region28: #{forward.1} parent=1 // pred_region
      %105 = vsyncadd [#allocation11], 0
      %s107 = sshll.u32 %s6, 4
      %s108 = int_to_ptr.hbm [resolvable:$true] %s107
      %s109 = sshll.u32 [#allocation12], 4
      %s110 = int_to_ptr.vmem [resolvable:$true] %s109
      %112 = dma.hbm_to_vmem [thread:$0]  %s108, 16, %s110, [#allocation11]
    $region29: #{forward.1} parent=1 // pred_fallthru
      _
    // Predicated region
    $region30: #{forward.1} parent=1 // pred_check
      _
    $region31: #{forward.1} parent=1 // pred_check_branch
      %114 = sbr.rel (0) target = $region33
    $region32: #{forward.1} parent=1 // pred_region
      %116 = vsyncadd [#allocation14], 0
      %s117 = sshll.u32 %s7, 4
      %s118 = int_to_ptr.hbm [resolvable:$true] %s117
      %s119 = sshll.u32 [#allocation13], 4
      %s120 = int_to_ptr.vmem [resolvable:$true] %s119
      %125 = dma.hbm_to_vmem [thread:$0]  %s118, 4096, %s120, [#allocation14], 256, 256, 16
    $region33: #{forward.1} parent=1 // pred_fallthru
      _
    // Predicated region
    $region34: #{forward.1} parent=1 // pred_check
      _
    $region35: #{forward.1} parent=1 // pred_check_branch
      %127 = sbr.rel (0) target = $region37
    $region36: #{forward.1} parent=1 // pred_region
      _
    $region37: #{forward.1} parent=1 // pred_fallthru
      _
    // Predicated region
    $region38: #{forward.1} parent=1 // pred_check
      _
    $region39: #{forward.1} parent=1 // pred_check_branch
      %129 = sbr.rel (0) target = $region41
    $region40: #{forward.1} parent=1 // pred_region
      %131 = vsyncadd [#allocation14], 0
      %s132 = sshll.u32 %s9, 4
      %s133 = int_to_ptr.hbm [resolvable:$true] %s132
      %s134 = sshll.u32 [#allocation15], 4
      %s135 = int_to_ptr.vmem [resolvable:$true] %s134
      %140 = dma.hbm_to_vmem [thread:$0]  %s133, 4096, %s135, [#allocation14], 256, 256, 16
    $region41: #{forward.1} parent=1 // pred_fallthru
      _
    // Predicated region
    $region42: #{forward.1} parent=1 // pred_check
      _
    $region43: #{forward.1} parent=1 // pred_check_branch
      %142 = sbr.rel (0) target = $region45
    $region44: #{forward.1} parent=1 // pred_region
      %144 = vsyncadd [#allocation17], 0
      %s145 = sshll.u32 %s10, 4
      %s146 = int_to_ptr.hbm [resolvable:$true] %s145
      %s147 = sshll.u32 [#allocation16], 4
      %s148 = int_to_ptr.vmem [resolvable:$true] %s147
      %153 = dma.hbm_to_vmem [thread:$0]  %s146, 8192, %s148, [#allocation17], 256, 256, 16
    $region45: #{forward.1} parent=1 // pred_fallthru
      _
    // Predicated region
    $region46: #{forward.1} parent=1 // pred_check
      _
    $region47: #{forward.1} parent=1 // pred_check_branch
      %155 = sbr.rel (0) target = $region49
    $region48: #{forward.1} parent=1 // pred_region
      _
    $region49: #{forward.1} parent=1 // pred_fallthru
      _
    // Predicated region
    $region50: #{forward.1} parent=1 // pred_check
      _
    $region51: #{forward.1} parent=1 // pred_check_branch
      %157 = sbr.rel (0) target = $region53
    $region52: #{forward.1} parent=1 // pred_region
      %159 = vsyncadd [#allocation17], 0
      %s160 = sshll.u32 %s12, 4
      %s161 = int_to_ptr.hbm [resolvable:$true] %s160
      %s162 = sshll.u32 [#allocation18], 4
      %s163 = int_to_ptr.vmem [resolvable:$true] %s162
      %168 = dma.hbm_to_vmem [thread:$0]  %s161, 1024, %s163, [#allocation17], 64, 64, 4
    $region53: #{forward.1} parent=1 // pred_fallthru
      _
    // Predicated region
    $region54: #{forward.1} parent=1 // pred_check
      _
    $region55: #{forward.1} parent=1 // pred_check_branch
      %170 = sbr.rel (0) target = $region57
    $region56: #{forward.1} parent=1 // pred_region
      _
    $region57: #{forward.1} parent=1 // pred_fallthru
      _
    // Predicated region
    $region58: #{forward.1} parent=1 // pred_check
      _
    $region59: #{forward.1} parent=1 // pred_check_branch
      %172 = sbr.rel (0) target = $region61
    $region60: #{forward.1} parent=1 // pred_region
      %174 = vsyncadd [#allocation20], 0
      %s175 = sshll.u32 %s14, 4
      %s176 = int_to_ptr.hbm [resolvable:$true] %s175
      %s177 = sshll.u32 [#allocation19], 4
      %s178 = int_to_ptr.vmem [resolvable:$true] %s177
      %183 = dma.hbm_to_vmem [thread:$0]  %s176, 1024, %s178, [#allocation20], 64, 64, 4
    $region61: #{forward.1} parent=1 // pred_fallthru
      _
    // Predicated region
    $region62: #{forward.1} parent=1 // pred_check
      _
    $region63: #{forward.1} parent=1 // pred_check_branch
      %185 = sbr.rel (0) target = $region65
    $region64: #{forward.1} parent=1 // pred_region
      _
    $region65: #{forward.1} parent=1 // pred_fallthru
      _
    // Predicated region
    $region66: #{forward.1} parent=1 // pred_check
      _
    $region67: #{forward.1} parent=1 // pred_check_branch
      %187 = sbr.rel (0) target = $region69
    $region68: #{forward.1} parent=1 // pred_region
      %189 = vsyncadd [#allocation20], 0
      %s190 = sshll.u32 %s16, 4
      %s191 = int_to_ptr.hbm [resolvable:$true] %s190
      %s192 = sshll.u32 [#allocation21], 4
      %s193 = int_to_ptr.vmem [resolvable:$true] %s192
      %198 = dma.hbm_to_vmem [thread:$0]  %s191, 1024, %s193, [#allocation20], 64, 64, 4
    $region69: #{forward.1} parent=1 // pred_fallthru
      _
    // Predicated region
    $region70: #{forward.1} parent=1 // pred_check
      _
    $region71: #{forward.1} parent=1 // pred_check_branch
      %200 = sbr.rel (0) target = $region73
    $region72: #{forward.1} parent=1 // pred_region
      _
    $region73: #{forward.1} parent=1 // pred_fallthru
      _
    // Predicated region
    $region74: #{forward.1} parent=1 // pred_check
      _
    $region75: #{forward.1} parent=1 // pred_check_branch
      %202 = sbr.rel (0) target = $region77
    $region76: #{forward.1} parent=1 // pred_region
      %204 = dma.done [#allocation3], 128
    $region77: #{forward.1} parent=1 // pred_fallthru
      _
    // Predicated region
    $region78: #{forward.1} parent=1 // pred_check
      _
    $region79: #{forward.1} parent=1 // pred_check_branch
      %206 = sbr.rel (0) target = $region81
    $region80: #{forward.1} parent=1 // pred_region
      %208 = dma.done [#allocation5], 640
    $region81: #{forward.1} parent=1 // pred_fallthru
      _
    // Predicated region
    $region82: #{forward.1} parent=1 // pred_check
      _
    $region83: #{forward.1} parent=1 // pred_check_branch
      %210 = sbr.rel (0) target = $region85
    $region84: #{forward.1} parent=1 // pred_region
      %212 = dma.done [#allocation5], 16
    $region85: #{forward.1} parent=1 // pred_fallthru
      _
    // Predicated region
    $region86: #{forward.1} parent=1 // pred_check
      _
    $region87: #{forward.1} parent=1 // pred_check_branch
      %214 = sbr.rel (0) target = $region89
    $region88: #{forward.1} parent=1 // pred_region
      %216 = dma.done [#allocation8], 2048
    $region89: #{forward.1} parent=1 // pred_fallthru
      _
    // Predicated region
    $region90: #{forward.1} parent=1 // pred_check
      _
    $region91: #{forward.1} parent=1 // pred_check_branch
      %218 = sbr.rel (0) target = $region93
    $region92: #{forward.1} parent=1 // pred_region
      %220 = dma.done [#allocation8], 16
    $region93: #{forward.1} parent=1 // pred_fallthru
      _
    // Predicated region
    $region94: #{forward.1} parent=1 // pred_check
      _
    $region95: #{forward.1} parent=1 // pred_check_branch
      %222 = sbr.rel (0) target = $region97
    $region96: #{forward.1} parent=1 // pred_region
      %224 = dma.done [#allocation11], 28672
    $region97: #{forward.1} parent=1 // pred_fallthru
      _
    // Predicated region
    $region98: #{forward.1} parent=1 // pred_check
      _
    $region99: #{forward.1} parent=1 // pred_check_branch
      %226 = sbr.rel (0) target = $region101
    $region100: #{forward.1} parent=1 // pred_region
      %228 = dma.done [#allocation11], 16
    $region101: #{forward.1} parent=1 // pred_fallthru
      _
    // Predicated region
    $region102: #{forward.1} parent=1 // pred_check
      _
    $region103: #{forward.1} parent=1 // pred_check_branch
      %230 = sbr.rel (0) target = $region105
    $region104: #{forward.1} parent=1 // pred_region
      %232 = dma.done [#allocation14], 4096
    $region105: #{forward.1} parent=1 // pred_fallthru
      _
    // Predicated region
    $region106: #{forward.1} parent=1 // pred_check
      _
    $region107: #{forward.1} parent=1 // pred_check_branch
      %234 = sbr.rel (0) target = $region109
    $region108: #{forward.1} parent=1 // pred_region
      %236 = dma.done [#allocation14], 4096
    $region109: #{forward.1} parent=1 // pred_fallthru
      _
    // Predicated region
    $region110: #{forward.1} parent=1 // pred_check
      _
    $region111: #{forward.1} parent=1 // pred_check_branch
      %238 = sbr.rel (0) target = $region113
    $region112: #{forward.1} parent=1 // pred_region
      %240 = dma.done [#allocation17], 8192
    $region113: #{forward.1} parent=1 // pred_fallthru
      _
    // Predicated region
    $region114: #{forward.1} parent=1 // pred_check
      _
    $region115: #{forward.1} parent=1 // pred_check_branch
      %242 = sbr.rel (0) target = $region117
    $region116: #{forward.1} parent=1 // pred_region
      %244 = dma.done [#allocation17], 1024
    $region117: #{forward.1} parent=1 // pred_fallthru
      _
    // Predicated region
    $region118: #{forward.1} parent=1 // pred_check
      _
    $region119: #{forward.1} parent=1 // pred_check_branch
      %246 = sbr.rel (0) target = $region121
    $region120: #{forward.1} parent=1 // pred_region
      %248 = dma.done [#allocation20], 1024
    $region121: #{forward.1} parent=1 // pred_fallthru
      _
    // Predicated region
    $region122: #{forward.1} parent=1 // pred_check
      _
    $region123: #{forward.1} parent=1 // pred_check_branch
      %250 = sbr.rel (0) target = $region125
    $region124: #{forward.1} parent=1 // pred_region
      %252 = dma.done [#allocation20], 1024
    $region125: #{forward.1} parent=1 // pred_fallthru
      _
    %v254 = vld [vmem:[#allocation2] sm:$0xff]
    %v255 = vpack.c.bf16 %v254, %v254
    %v256 = vld [vmem:[#allocation4] sm:$0xff]
    %v257 = vld [vmem:[#allocation4 + $0x8] sm:$0xff]
    %v258 = vld [vmem:[#allocation4 + $0x10] sm:$0xff]
    %v259 = vld [vmem:[#allocation4 + $0x18] sm:$0xff]
    %v260 = vld [vmem:[#allocation4 + $0x20] sm:$0x11]
    %v266 = vunpack.c.l.b16 %v256
    %v267 = vunpack.c.h.b16 %v256
    %v268 = vunpack.c.l.b16 %v257
    %v269 = vunpack.c.h.b16 %v257
    %v270 = vunpack.c.l.b16 %v258
    %v271 = vunpack.c.h.b16 %v258
    %v272 = vunpack.c.l.b16 %v259
    %v273 = vunpack.c.h.b16 %v259
    %v274 = vunpack.c.l.b16 %v260
    %v275 = vunpack.c.h.b16 %v260
    %v276 = vpack.c.b16 %v268, %v266
    %v277 = vpack.c.b16 %v269, %v267
    %v278 = vpack.c.b16 %v272, %v270
    %v279 = vpack.c.b16 %v273, %v271
    %v280 = vpack.c.b16 %v274, %v274
    %v281 = vpack.c.b16 %v275, %v275
    %vm286 = vcmask 277504
    %v288 = vsel %vm286, %v255, 0
    %vm290 = vcmask 1040384
    %v292 = vsel %vm290, %v280, 0
    %v295 = vsel %vm290, %v281, 0
    %297 = vmatpush.bf16.msra.mxu0 0
    %298 = vmatpush.bf16.msra.mxu0 0
    %299 = vmatpush.bf16.msra.mxu0 0
    %300 = vmatpush.bf16.msra.mxu0 0
    %301 = vmatpush.bf16.msra.mxu0 0
    %302 = vmatpush.bf16.msra.mxu0 %v292
    %303 = vmatpush.bf16.msra.mxu0 %v278
    %304 = vmatpush.bf16.msra.mxu0 %v276
    %305 = vmatmul.bf16.gmra.mxu0 %v288
    %v306 = vpop.f32.mrf.mxu0
    %v307 = vadd.f32 0.0, %v306
    %v308 = vpop.f32.mrf.mxu0
    %309 = vdwg.mxu0
    %310 = vmatpush.bf16.msra.mxu0 0
    %311 = vmatpush.bf16.msra.mxu0 0
    %312 = vmatpush.bf16.msra.mxu0 0
    %313 = vmatpush.bf16.msra.mxu0 0
    %314 = vmatpush.bf16.msra.mxu0 0
    %315 = vmatpush.bf16.msra.mxu0 %v295
    %316 = vmatpush.bf16.msra.mxu0 %v279
    %317 = vmatpush.bf16.msra.mxu0 %v277
    %318 = vmatmul.bf16.gmra.mxu0 %v288
    %v319 = vpop.f32.mrf.mxu0
    %v320 = vadd.f32 0.0, %v319
    %v321 = vpop.f32.mrf.mxu0
    %322 = vdwg.mxu0
    %v323 = vmax.f32 %v307, %v320
    %v324 = vld [vmem:[#allocation6] sm:$0x1]
    %v326 = vperm.slane %v324, 0
    %v328 = vadd.f32 %v323, %v326
    %vm329 = vcmp.ge.f32.partialorder %v328, 0.0
    %v330 = vmul.f32 %v328, 0.05
    %v331 = vsel %vm329, %v328, %v330
    %v332 = vpack.c.bf16 %v331, %v331
    %v333 = vld [vmem:[#allocation7] sm:$0xff]
    %v334 = vld [vmem:[#allocation7 + $0x8] sm:$0xff]
    %v335 = vld [vmem:[#allocation7 + $0x10] sm:$0xff]
    %v336 = vld [vmem:[#allocation7 + $0x18] sm:$0xff]
    %v337 = vld [vmem:[#allocation7 + $0x20] sm:$0xff]
    %v338 = vld [vmem:[#allocation7 + $0x28] sm:$0xff]
    %v339 = vld [vmem:[#allocation7 + $0x30] sm:$0xff]
    %v340 = vld [vmem:[#allocation7 + $0x38] sm:$0xff]
    %v341 = vld [vmem:[#allocation7 + $0x40] sm:$0xff]
    %v342 = vld [vmem:[#allocation7 + $0x48] sm:$0xff]
    %v343 = vld [vmem:[#allocation7 + $0x50] sm:$0xff]
    %v344 = vld [vmem:[#allocation7 + $0x58] sm:$0xff]
    %v345 = vld [vmem:[#allocation7 + $0x60] sm:$0xff]
    %v346 = vld [vmem:[#allocation7 + $0x68] sm:$0xff]
    %v347 = vld [vmem:[#allocation7 + $0x70] sm:$0xff]
    %v348 = vld [vmem:[#allocation7 + $0x78] sm:$0xff]
    %v365 = vunpack.c.l.b16 %v333
    %v366 = vunpack.c.h.b16 %v333
    %v367 = vunpack.c.l.b16 %v334
    %v368 = vunpack.c.h.b16 %v334
    %v369 = vunpack.c.l.b16 %v335
    %v370 = vunpack.c.h.b16 %v335
    %v371 = vunpack.c.l.b16 %v336
    %v372 = vunpack.c.h.b16 %v336
    %v373 = vunpack.c.l.b16 %v337
    %v374 = vunpack.c.h.b16 %v337
    %v375 = vunpack.c.l.b16 %v338
    %v376 = vunpack.c.h.b16 %v338
    %v377 = vunpack.c.l.b16 %v339
    %v378 = vunpack.c.h.b16 %v339
    %v379 = vunpack.c.l.b16 %v340
    %v380 = vunpack.c.h.b16 %v340
    %v381 = vunpack.c.l.b16 %v341
    %v382 = vunpack.c.h.b16 %v341
    %v383 = vunpack.c.l.b16 %v342
    %v384 = vunpack.c.h.b16 %v342
    %v385 = vunpack.c.l.b16 %v343
    %v386 = vunpack.c.h.b16 %v343
    %v387 = vunpack.c.l.b16 %v344
    %v388 = vunpack.c.h.b16 %v344
    %v389 = vunpack.c.l.b16 %v345
    %v390 = vunpack.c.h.b16 %v345
    %v391 = vunpack.c.l.b16 %v346
    %v392 = vunpack.c.h.b16 %v346
    %v393 = vunpack.c.l.b16 %v347
    %v394 = vunpack.c.h.b16 %v347
    %v395 = vunpack.c.l.b16 %v348
    %v396 = vunpack.c.h.b16 %v348
    %v397 = vpack.c.b16 %v367, %v365
    %v398 = vpack.c.b16 %v368, %v366
    %v399 = vpack.c.b16 %v371, %v369
    %v400 = vpack.c.b16 %v372, %v370
    %v401 = vpack.c.b16 %v375, %v373
    %v402 = vpack.c.b16 %v376, %v374
    %v403 = vpack.c.b16 %v379, %v377
    %v404 = vpack.c.b16 %v380, %v378
    %v405 = vpack.c.b16 %v383, %v381
    %v406 = vpack.c.b16 %v384, %v382
    %v407 = vpack.c.b16 %v387, %v385
    %v408 = vpack.c.b16 %v388, %v386
    %v409 = vpack.c.b16 %v391, %v389
    %v410 = vpack.c.b16 %v392, %v390
    %v411 = vpack.c.b16 %v395, %v393
    %v412 = vpack.c.b16 %v396, %v394
    %429 = vmatpush.bf16.msra.mxu0 %v411
    %430 = vmatpush.bf16.msra.mxu0 %v409
    %431 = vmatpush.bf16.msra.mxu0 %v407
    %432 = vmatpush.bf16.msra.mxu0 %v405
    %433 = vmatpush.bf16.msra.mxu0 %v403
    %434 = vmatpush.bf16.msra.mxu0 %v401
    %435 = vmatpush.bf16.msra.mxu0 %v399
    %436 = vmatpush.bf16.msra.mxu0 %v397
    %437 = vmatmul.bf16.gmra.mxu0 %v332
    %v438 = vpop.f32.mrf.mxu0
    %v439 = vadd.f32 0.0, %v438
    %v440 = vpop.f32.mrf.mxu0
    %441 = vdwg.mxu0
    %442 = vmatpush.bf16.msra.mxu0 %v412
    %443 = vmatpush.bf16.msra.mxu0 %v410
    %444 = vmatpush.bf16.msra.mxu0 %v408
    %445 = vmatpush.bf16.msra.mxu0 %v406
    %446 = vmatpush.bf16.msra.mxu0 %v404
    %447 = vmatpush.bf16.msra.mxu0 %v402
    %448 = vmatpush.bf16.msra.mxu0 %v400
    %449 = vmatpush.bf16.msra.mxu0 %v398
    %450 = vmatmul.bf16.gmra.mxu0 %v332
    %v451 = vpop.f32.mrf.mxu0
    %v452 = vadd.f32 0.0, %v451
    %v453 = vpop.f32.mrf.mxu0
    %454 = vdwg.mxu0
    %v455 = vmax.f32 %v439, %v452
    %v456 = vld [vmem:[#allocation9] sm:$0x1]
    %v458 = vperm.slane %v456, 0
    %v460 = vadd.f32 %v455, %v458
    %vm461 = vcmp.ge.f32.partialorder %v460, 0.0
    %v462 = vmul.f32 %v460, 0.05
    %v463 = vsel %vm461, %v460, %v462
    %v465 = vrot.slane %v463, 1
    %v467 = vrot.slane %v463, 2
    %v469 = vrot.slane %v463, 3
    %v471 = vrot.slane %v465, 3
    %v472 = vrot.slane %v467, 3
    %v473 = vrot.slane %v469, 3
    %v477 = vsel %vm290, %v463, %v469
    %v478 = vsel %vm290, %v465, %v471
    %v479 = vsel %vm290, %v467, %v472
    %v480 = vsel %vm290, %v469, %v473
    %v481 = vpack.c.bf16 %v477, %v477
    %v482 = vpack.c.bf16 %v478, %v478
    %v483 = vpack.c.bf16 %v479, %v479
    %v484 = vpack.c.bf16 %v480, %v480
    %v485 = vld [vmem:[#allocation10] sm:$0xff]
    %v486 = vld [vmem:[#allocation10 + $0x8] sm:$0xff]
    %v487 = vld [vmem:[#allocation10 + $0x10] sm:$0xff]
    %v488 = vld [vmem:[#allocation10 + $0x18] sm:$0xf]
    %v489 = vld [vmem:[#allocation10 + $0x1c] sm:$0xff]
    %v490 = vld [vmem:[#allocation10 + $0x24] sm:$0xff]
    %v491 = vld [vmem:[#allocation10 + $0x2c] sm:$0xff]
    %v492 = vld [vmem:[#allocation10 + $0x34] sm:$0xf]
    %v493 = vld [vmem:[#allocation10 + $0x38] sm:$0xff]
    %v494 = vld [vmem:[#allocation10 + $0x40] sm:$0xff]
    %v495 = vld [vmem:[#allocation10 + $0x48] sm:$0xff]
    %v496 = vld [vmem:[#allocation10 + $0x50] sm:$0xf]
    %v497 = vld [vmem:[#allocation10 + $0x54] sm:$0xff]
    %v498 = vld [vmem:[#allocation10 + $0x5c] sm:$0xff]
    %v499 = vld [vmem:[#allocation10 + $0x64] sm:$0xff]
    %v500 = vld [vmem:[#allocation10 + $0x6c] sm:$0xf]
    %v501 = vld [vmem:[#allocation10 + $0x70] sm:$0xff]
    %v502 = vld [vmem:[#allocation10 + $0x78] sm:$0xff]
    %v503 = vld [vmem:[#allocation10 + $0x80] sm:$0xff]
    %v504 = vld [vmem:[#allocation10 + $0x88] sm:$0xf]
    %v505 = vld [vmem:[#allocation10 + $0x8c] sm:$0xff]
    %v506 = vld [vmem:[#allocation10 + $0x94] sm:$0xff]
    %v507 = vld [vmem:[#allocation10 + $0x9c] sm:$0xff]
    %v508 = vld [vmem:[#allocation10 + $0xa4] sm:$0xf]
    %v509 = vld [vmem:[#allocation10 + $0xa8] sm:$0xff]
    %v510 = vld [vmem:[#allocation10 + $0xb0] sm:$0xff]
    %v511 = vld [vmem:[#allocation10 + $0xb8] sm:$0xff]
    %v512 = vld [vmem:[#allocation10 + $0xc0] sm:$0xf]
    %v513 = vld [vmem:[#allocation10 + $0xc4] sm:$0xff]
    %v514 = vld [vmem:[#allocation10 + $0xcc] sm:$0xff]
    %v515 = vld [vmem:[#allocation10 + $0xd4] sm:$0xff]
    %v516 = vld [vmem:[#allocation10 + $0xdc] sm:$0xf]
    %v517 = vld [vmem:[#allocation10 + $0xe0] sm:$0xff]
    %v518 = vld [vmem:[#allocation10 + $0xe8] sm:$0xff]
    %v519 = vld [vmem:[#allocation10 + $0xf0] sm:$0xff]
    %v520 = vld [vmem:[#allocation10 + $0xf8] sm:$0xf]
    %v521 = vld [vmem:[#allocation10 + $0xfc] sm:$0xff]
    %v522 = vld [vmem:[#allocation10 + $0x104] sm:$0xff]
    %v523 = vld [vmem:[#allocation10 + $0x10c] sm:$0xff]
    %v524 = vld [vmem:[#allocation10 + $0x114] sm:$0xf]
    %v525 = vld [vmem:[#allocation10 + $0x118] sm:$0xff]
    %v526 = vld [vmem:[#allocation10 + $0x120] sm:$0xff]
    %v527 = vld [vmem:[#allocation10 + $0x128] sm:$0xff]
    %v528 = vld [vmem:[#allocation10 + $0x130] sm:$0xf]
    %v529 = vld [vmem:[#allocation10 + $0x134] sm:$0xff]
    %v530 = vld [vmem:[#allocation10 + $0x13c] sm:$0xff]
    %v531 = vld [vmem:[#allocation10 + $0x144] sm:$0xff]
    %v532 = vld [vmem:[#allocation10 + $0x14c] sm:$0xf]
    %v533 = vld [vmem:[#allocation10 + $0x150] sm:$0xff]
    %v534 = vld [vmem:[#allocation10 + $0x158] sm:$0xff]
    %v535 = vld [vmem:[#allocation10 + $0x160] sm:$0xff]
    %v536 = vld [vmem:[#allocation10 + $0x168] sm:$0xf]
    %v537 = vld [vmem:[#allocation10 + $0x16c] sm:$0xff]
    %v538 = vld [vmem:[#allocation10 + $0x174] sm:$0xff]
    %v539 = vld [vmem:[#allocation10 + $0x17c] sm:$0xff]
    %v540 = vld [vmem:[#allocation10 + $0x184] sm:$0xf]
    %v541 = vld [vmem:[#allocation10 + $0x188] sm:$0xff]
    %v542 = vld [vmem:[#allocation10 + $0x190] sm:$0xff]
    %v543 = vld [vmem:[#allocation10 + $0x198] sm:$0xff]
    %v544 = vld [vmem:[#allocation10 + $0x1a0] sm:$0xf]
    %v545 = vld [vmem:[#allocation10 + $0x1a4] sm:$0xff]
    %v546 = vld [vmem:[#allocation10 + $0x1ac] sm:$0xff]
    %v547 = vld [vmem:[#allocation10 + $0x1b4] sm:$0xff]
    %v548 = vld [vmem:[#allocation10 + $0x1bc] sm:$0xf]
    %v549 = vld [vmem:[#allocation10 + $0x1c0] sm:$0xff]
    %v550 = vld [vmem:[#allocation10 + $0x1c8] sm:$0xff]
    %v551 = vld [vmem:[#allocation10 + $0x1d0] sm:$0xff]
    %v552 = vld [vmem:[#allocation10 + $0x1d8] sm:$0xf]
    %v553 = vld [vmem:[#allocation10 + $0x1dc] sm:$0xff]
    %v554 = vld [vmem:[#allocation10 + $0x1e4] sm:$0xff]
    %v555 = vld [vmem:[#allocation10 + $0x1ec] sm:$0xff]
    %v556 = vld [vmem:[#allocation10 + $0x1f4] sm:$0xf]
    %v557 = vld [vmem:[#allocation10 + $0x1f8] sm:$0xff]
    %v558 = vld [vmem:[#allocation10 + $0x200] sm:$0xff]
    %v559 = vld [vmem:[#allocation10 + $0x208] sm:$0xff]
    %v560 = vld [vmem:[#allocation10 + $0x210] sm:$0xf]
    %v561 = vld [vmem:[#allocation10 + $0x214] sm:$0xff]
    %v562 = vld [vmem:[#allocation10 + $0x21c] sm:$0xff]
    %v563 = vld [vmem:[#allocation10 + $0x224] sm:$0xff]
    %v564 = vld [vmem:[#allocation10 + $0x22c] sm:$0xf]
    %v565 = vld [vmem:[#allocation10 + $0x230] sm:$0xff]
    %v566 = vld [vmem:[#allocation10 + $0x238] sm:$0xff]
    %v567 = vld [vmem:[#allocation10 + $0x240] sm:$0xff]
    %v568 = vld [vmem:[#allocation10 + $0x248] sm:$0xf]
    %v569 = vld [vmem:[#allocation10 + $0x24c] sm:$0xff]
    %v570 = vld [vmem:[#allocation10 + $0x254] sm:$0xff]
    %v571 = vld [vmem:[#allocation10 + $0x25c] sm:$0xff]
    %v572 = vld [vmem:[#allocation10 + $0x264] sm:$0xf]
    %v573 = vld [vmem:[#allocation10 + $0x268] sm:$0xff]
    %v574 = vld [vmem:[#allocation10 + $0x270] sm:$0xff]
    %v575 = vld [vmem:[#allocation10 + $0x278] sm:$0xff]
    %v576 = vld [vmem:[#allocation10 + $0x280] sm:$0xf]
    %v577 = vld [vmem:[#allocation10 + $0x284] sm:$0xff]
    %v578 = vld [vmem:[#allocation10 + $0x28c] sm:$0xff]
    %v579 = vld [vmem:[#allocation10 + $0x294] sm:$0xff]
    %v580 = vld [vmem:[#allocation10 + $0x29c] sm:$0xf]
    %v581 = vld [vmem:[#allocation10 + $0x2a0] sm:$0xff]
    %v582 = vld [vmem:[#allocation10 + $0x2a8] sm:$0xff]
    %v583 = vld [vmem:[#allocation10 + $0x2b0] sm:$0xff]
    %v584 = vld [vmem:[#allocation10 + $0x2b8] sm:$0xf]
    %v585 = vld [vmem:[#allocation10 + $0x2bc] sm:$0xff]
    %v586 = vld [vmem:[#allocation10 + $0x2c4] sm:$0xff]
    %v587 = vld [vmem:[#allocation10 + $0x2cc] sm:$0xff]
    %v588 = vld [vmem:[#allocation10 + $0x2d4] sm:$0xf]
    %v589 = vld [vmem:[#allocation10 + $0x2d8] sm:$0xff]
    %v590 = vld [vmem:[#allocation10 + $0x2e0] sm:$0xff]
    %v591 = vld [vmem:[#allocation10 + $0x2e8] sm:$0xff]
    %v592 = vld [vmem:[#allocation10 + $0x2f0] sm:$0xf]
    %v593 = vld [vmem:[#allocation10 + $0x2f4] sm:$0xff]
    %v594 = vld [vmem:[#allocation10 + $0x2fc] sm:$0xff]
    %v595 = vld [vmem:[#allocation10 + $0x304] sm:$0xff]
    %v596 = vld [vmem:[#allocation10 + $0x30c] sm:$0xf]
    %v597 = vld [vmem:[#allocation10 + $0x310] sm:$0xff]
    %v598 = vld [vmem:[#allocation10 + $0x318] sm:$0xff]
    %v599 = vld [vmem:[#allocation10 + $0x320] sm:$0xff]
    %v600 = vld [vmem:[#allocation10 + $0x328] sm:$0xf]
    %v601 = vld [vmem:[#allocation10 + $0x32c] sm:$0xff]
    %v602 = vld [vmem:[#allocation10 + $0x334] sm:$0xff]
    %v603 = vld [vmem:[#allocation10 + $0x33c] sm:$0xff]
    %v604 = vld [vmem:[#allocation10 + $0x344] sm:$0xf]
    %v605 = vld [vmem:[#allocation10 + $0x348] sm:$0xff]
    %v606 = vld [vmem:[#allocation10 + $0x350] sm:$0xff]
    %v607 = vld [vmem:[#allocation10 + $0x358] sm:$0xff]
    %v608 = vld [vmem:[#allocation10 + $0x360] sm:$0xf]
    %v609 = vld [vmem:[#allocation10 + $0x364] sm:$0xff]
    %v610 = vld [vmem:[#allocation10 + $0x36c] sm:$0xff]
    %v611 = vld [vmem:[#allocation10 + $0x374] sm:$0xff]
    %v612 = vld [vmem:[#allocation10 + $0x37c] sm:$0xf]
    %v613 = vld [vmem:[#allocation10 + $0x380] sm:$0xff]
    %v614 = vld [vmem:[#allocation10 + $0x388] sm:$0xff]
    %v615 = vld [vmem:[#allocation10 + $0x390] sm:$0xff]
    %v616 = vld [vmem:[#allocation10 + $0x398] sm:$0xf]
    %v617 = vld [vmem:[#allocation10 + $0x39c] sm:$0xff]
    %v618 = vld [vmem:[#allocation10 + $0x3a4] sm:$0xff]
    %v619 = vld [vmem:[#allocation10 + $0x3ac] sm:$0xff]
    %v620 = vld [vmem:[#allocation10 + $0x3b4] sm:$0xf]
    %v621 = vld [vmem:[#allocation10 + $0x3b8] sm:$0xff]
    %v622 = vld [vmem:[#allocation10 + $0x3c0] sm:$0xff]
    %v623 = vld [vmem:[#allocation10 + $0x3c8] sm:$0xff]
    %v624 = vld [vmem:[#allocation10 + $0x3d0] sm:$0xf]
    %v625 = vld [vmem:[#allocation10 + $0x3d4] sm:$0xff]
    %v626 = vld [vmem:[#allocation10 + $0x3dc] sm:$0xff]
    %v627 = vld [vmem:[#allocation10 + $0x3e4] sm:$0xff]
    %v628 = vld [vmem:[#allocation10 + $0x3ec] sm:$0xf]
    %v629 = vld [vmem:[#allocation10 + $0x3f0] sm:$0xff]
    %v630 = vld [vmem:[#allocation10 + $0x3f8] sm:$0xff]
    %v631 = vld [vmem:[#allocation10 + $0x400] sm:$0xff]
    %v632 = vld [vmem:[#allocation10 + $0x408] sm:$0xf]
    %v633 = vld [vmem:[#allocation10 + $0x40c] sm:$0xff]
    %v634 = vld [vmem:[#allocation10 + $0x414] sm:$0xff]
    %v635 = vld [vmem:[#allocation10 + $0x41c] sm:$0xff]
    %v636 = vld [vmem:[#allocation10 + $0x424] sm:$0xf]
    %v637 = vld [vmem:[#allocation10 + $0x428] sm:$0xff]
    %v638 = vld [vmem:[#allocation10 + $0x430] sm:$0xff]
    %v639 = vld [vmem:[#allocation10 + $0x438] sm:$0xff]
    %v640 = vld [vmem:[#allocation10 + $0x440] sm:$0xf]
    %v641 = vld [vmem:[#allocation10 + $0x444] sm:$0xff]
    %v642 = vld [vmem:[#allocation10 + $0x44c] sm:$0xff]
    %v643 = vld [vmem:[#allocation10 + $0x454] sm:$0xff]
    %v644 = vld [vmem:[#allocation10 + $0x45c] sm:$0xf]
    %v645 = vld [vmem:[#allocation10 + $0x460] sm:$0xff]
    %v646 = vld [vmem:[#allocation10 + $0x468] sm:$0xff]
    %v647 = vld [vmem:[#allocation10 + $0x470] sm:$0xff]
    %v648 = vld [vmem:[#allocation10 + $0x478] sm:$0xf]
    %v649 = vld [vmem:[#allocation10 + $0x47c] sm:$0xff]
    %v650 = vld [vmem:[#allocation10 + $0x484] sm:$0xff]
    %v651 = vld [vmem:[#allocation10 + $0x48c] sm:$0xff]
    %v652 = vld [vmem:[#allocation10 + $0x494] sm:$0xf]
    %v653 = vld [vmem:[#allocation10 + $0x498] sm:$0xff]
    %v654 = vld [vmem:[#allocation10 + $0x4a0] sm:$0xff]
    %v655 = vld [vmem:[#allocation10 + $0x4a8] sm:$0xff]
    %v656 = vld [vmem:[#allocation10 + $0x4b0] sm:$0xf]
    %v657 = vld [vmem:[#allocation10 + $0x4b4] sm:$0xff]
    %v658 = vld [vmem:[#allocation10 + $0x4bc] sm:$0xff]
    %v659 = vld [vmem:[#allocation10 + $0x4c4] sm:$0xff]
    %v660 = vld [vmem:[#allocation10 + $0x4cc] sm:$0xf]
    %v661 = vld [vmem:[#allocation10 + $0x4d0] sm:$0xff]
    %v662 = vld [vmem:[#allocation10 + $0x4d8] sm:$0xff]
    %v663 = vld [vmem:[#allocation10 + $0x4e0] sm:$0xff]
    %v664 = vld [vmem:[#allocation10 + $0x4e8] sm:$0xf]
    %v665 = vld [vmem:[#allocation10 + $0x4ec] sm:$0xff]
    %v666 = vld [vmem:[#allocation10 + $0x4f4] sm:$0xff]
    %v667 = vld [vmem:[#allocation10 + $0x4fc] sm:$0xff]
    %v668 = vld [vmem:[#allocation10 + $0x504] sm:$0xf]
    %v669 = vld [vmem:[#allocation10 + $0x508] sm:$0xff]
    %v670 = vld [vmem:[#allocation10 + $0x510] sm:$0xff]
    %v671 = vld [vmem:[#allocation10 + $0x518] sm:$0xff]
    %v672 = vld [vmem:[#allocation10 + $0x520] sm:$0xf]
    %v673 = vld [vmem:[#allocation10 + $0x524] sm:$0xff]
    %v674 = vld [vmem:[#allocation10 + $0x52c] sm:$0xff]
    %v675 = vld [vmem:[#allocation10 + $0x534] sm:$0xff]
    %v676 = vld [vmem:[#allocation10 + $0x53c] sm:$0xf]
    %v677 = vld [vmem:[#allocation10 + $0x540] sm:$0xff]
    %v678 = vld [vmem:[#allocation10 + $0x548] sm:$0xff]
    %v679 = vld [vmem:[#allocation10 + $0x550] sm:$0xff]
    %v680 = vld [vmem:[#allocation10 + $0x558] sm:$0xf]
    %v681 = vld [vmem:[#allocation10 + $0x55c] sm:$0xff]
    %v682 = vld [vmem:[#allocation10 + $0x564] sm:$0xff]
    %v683 = vld [vmem:[#allocation10 + $0x56c] sm:$0xff]
    %v684 = vld [vmem:[#allocation10 + $0x574] sm:$0xf]
    %v685 = vld [vmem:[#allocation10 + $0x578] sm:$0xff]
    %v686 = vld [vmem:[#allocation10 + $0x580] sm:$0xff]
    %v687 = vld [vmem:[#allocation10 + $0x588] sm:$0xff]
    %v688 = vld [vmem:[#allocation10 + $0x590] sm:$0xf]
    %v689 = vld [vmem:[#allocation10 + $0x594] sm:$0xff]
    %v690 = vld [vmem:[#allocation10 + $0x59c] sm:$0xff]
    %v691 = vld [vmem:[#allocation10 + $0x5a4] sm:$0xff]
    %v692 = vld [vmem:[#allocation10 + $0x5ac] sm:$0xf]
    %v693 = vld [vmem:[#allocation10 + $0x5b0] sm:$0xff]
    %v694 = vld [vmem:[#allocation10 + $0x5b8] sm:$0xff]
    %v695 = vld [vmem:[#allocation10 + $0x5c0] sm:$0xff]
    %v696 = vld [vmem:[#allocation10 + $0x5c8] sm:$0xf]
    %v697 = vld [vmem:[#allocation10 + $0x5cc] sm:$0xff]
    %v698 = vld [vmem:[#allocation10 + $0x5d4] sm:$0xff]
    %v699 = vld [vmem:[#allocation10 + $0x5dc] sm:$0xff]
    %v700 = vld [vmem:[#allocation10 + $0x5e4] sm:$0xf]
    %v701 = vld [vmem:[#allocation10 + $0x5e8] sm:$0xff]
    %v702 = vld [vmem:[#allocation10 + $0x5f0] sm:$0xff]
    %v703 = vld [vmem:[#allocation10 + $0x5f8] sm:$0xff]
    %v704 = vld [vmem:[#allocation10 + $0x600] sm:$0xf]
    %v705 = vld [vmem:[#allocation10 + $0x604] sm:$0xff]
    %v706 = vld [vmem:[#allocation10 + $0x60c] sm:$0xff]
    %v707 = vld [vmem:[#allocation10 + $0x614] sm:$0xff]
    %v708 = vld [vmem:[#allocation10 + $0x61c] sm:$0xf]
    %v709 = vld [vmem:[#allocation10 + $0x620] sm:$0xff]
    %v710 = vld [vmem:[#allocation10 + $0x628] sm:$0xff]
    %v711 = vld [vmem:[#allocation10 + $0x630] sm:$0xff]
    %v712 = vld [vmem:[#allocation10 + $0x638] sm:$0xf]
    %v713 = vld [vmem:[#allocation10 + $0x63c] sm:$0xff]
    %v714 = vld [vmem:[#allocation10 + $0x644] sm:$0xff]
    %v715 = vld [vmem:[#allocation10 + $0x64c] sm:$0xff]
    %v716 = vld [vmem:[#allocation10 + $0x654] sm:$0xf]
    %v717 = vld [vmem:[#allocation10 + $0x658] sm:$0xff]
    %v718 = vld [vmem:[#allocation10 + $0x660] sm:$0xff]
    %v719 = vld [vmem:[#allocation10 + $0x668] sm:$0xff]
    %v720 = vld [vmem:[#allocation10 + $0x670] sm:$0xf]
    %v721 = vld [vmem:[#allocation10 + $0x674] sm:$0xff]
    %v722 = vld [vmem:[#allocation10 + $0x67c] sm:$0xff]
    %v723 = vld [vmem:[#allocation10 + $0x684] sm:$0xff]
    %v724 = vld [vmem:[#allocation10 + $0x68c] sm:$0xf]
    %v725 = vld [vmem:[#allocation10 + $0x690] sm:$0xff]
    %v726 = vld [vmem:[#allocation10 + $0x698] sm:$0xff]
    %v727 = vld [vmem:[#allocation10 + $0x6a0] sm:$0xff]
    %v728 = vld [vmem:[#allocation10 + $0x6a8] sm:$0xf]
    %v729 = vld [vmem:[#allocation10 + $0x6ac] sm:$0xff]
    %v730 = vld [vmem:[#allocation10 + $0x6b4] sm:$0xff]
    %v731 = vld [vmem:[#allocation10 + $0x6bc] sm:$0xff]
    %v732 = vld [vmem:[#allocation10 + $0x6c4] sm:$0xf]
    %v733 = vld [vmem:[#allocation10 + $0x6c8] sm:$0xff]
    %v734 = vld [vmem:[#allocation10 + $0x6d0] sm:$0xff]
    %v735 = vld [vmem:[#allocation10 + $0x6d8] sm:$0xff]
    %v736 = vld [vmem:[#allocation10 + $0x6e0] sm:$0xf]
    %v737 = vld [vmem:[#allocation10 + $0x6e4] sm:$0xff]
    %v738 = vld [vmem:[#allocation10 + $0x6ec] sm:$0xff]
    %v739 = vld [vmem:[#allocation10 + $0x6f4] sm:$0xff]
    %v740 = vld [vmem:[#allocation10 + $0x6fc] sm:$0xf]
    %v997 = vunpack.c.l.b16 %v485
    %v998 = vunpack.c.h.b16 %v485
    %v999 = vunpack.c.l.b16 %v486
    %v1000 = vunpack.c.h.b16 %v486
    %v1001 = vunpack.c.l.b16 %v487
    %v1002 = vunpack.c.h.b16 %v487
    %v1003 = vunpack.c.l.b16 %v488
    %v1004 = vunpack.c.l.b16 %v489
    %v1005 = vunpack.c.h.b16 %v489
    %v1006 = vunpack.c.l.b16 %v490
    %v1007 = vunpack.c.h.b16 %v490
    %v1008 = vunpack.c.l.b16 %v491
    %v1009 = vunpack.c.h.b16 %v491
    %v1010 = vunpack.c.l.b16 %v492
    %v1011 = vunpack.c.l.b16 %v493
    %v1012 = vunpack.c.h.b16 %v493
    %v1013 = vunpack.c.l.b16 %v494
    %v1014 = vunpack.c.h.b16 %v494
    %v1015 = vunpack.c.l.b16 %v495
    %v1016 = vunpack.c.h.b16 %v495
    %v1017 = vunpack.c.l.b16 %v496
    %v1018 = vunpack.c.l.b16 %v497
    %v1019 = vunpack.c.h.b16 %v497
    %v1020 = vunpack.c.l.b16 %v498
    %v1021 = vunpack.c.h.b16 %v498
    %v1022 = vunpack.c.l.b16 %v499
    %v1023 = vunpack.c.h.b16 %v499
    %v1024 = vunpack.c.l.b16 %v500
    %v1025 = vunpack.c.l.b16 %v501
    %v1026 = vunpack.c.h.b16 %v501
    %v1027 = vunpack.c.l.b16 %v502
    %v1028 = vunpack.c.h.b16 %v502
    %v1029 = vunpack.c.l.b16 %v503
    %v1030 = vunpack.c.h.b16 %v503
    %v1031 = vunpack.c.l.b16 %v504
    %v1032 = vunpack.c.l.b16 %v505
    %v1033 = vunpack.c.h.b16 %v505
    %v1034 = vunpack.c.l.b16 %v506
    %v1035 = vunpack.c.h.b16 %v506
    %v1036 = vunpack.c.l.b16 %v507
    %v1037 = vunpack.c.h.b16 %v507
    %v1038 = vunpack.c.l.b16 %v508
    %v1039 = vunpack.c.l.b16 %v509
    %v1040 = vunpack.c.h.b16 %v509
    %v1041 = vunpack.c.l.b16 %v510
    %v1042 = vunpack.c.h.b16 %v510
    %v1043 = vunpack.c.l.b16 %v511
    %v1044 = vunpack.c.h.b16 %v511
    %v1045 = vunpack.c.l.b16 %v512
    %v1046 = vunpack.c.l.b16 %v513
    %v1047 = vunpack.c.h.b16 %v513
    %v1048 = vunpack.c.l.b16 %v514
    %v1049 = vunpack.c.h.b16 %v514
    %v1050 = vunpack.c.l.b16 %v515
    %v1051 = vunpack.c.h.b16 %v515
    %v1052 = vunpack.c.l.b16 %v516
    %v1053 = vunpack.c.l.b16 %v517
    %v1054 = vunpack.c.h.b16 %v517
    %v1055 = vunpack.c.l.b16 %v518
    %v1056 = vunpack.c.h.b16 %v518
    %v1057 = vunpack.c.l.b16 %v519
    %v1058 = vunpack.c.h.b16 %v519
    %v1059 = vunpack.c.l.b16 %v520
    %v1060 = vunpack.c.l.b16 %v521
    %v1061 = vunpack.c.h.b16 %v521
    %v1062 = vunpack.c.l.b16 %v522
    %v1063 = vunpack.c.h.b16 %v522
    %v1064 = vunpack.c.l.b16 %v523
    %v1065 = vunpack.c.h.b16 %v523
    %v1066 = vunpack.c.l.b16 %v524
    %v1067 = vunpack.c.l.b16 %v525
    %v1068 = vunpack.c.h.b16 %v525
    %v1069 = vunpack.c.l.b16 %v526
    %v1070 = vunpack.c.h.b16 %v526
    %v1071 = vunpack.c.l.b16 %v527
    %v1072 = vunpack.c.h.b16 %v527
    %v1073 = vunpack.c.l.b16 %v528
    %v1074 = vunpack.c.l.b16 %v529
    %v1075 = vunpack.c.h.b16 %v529
    %v1076 = vunpack.c.l.b16 %v530
    %v1077 = vunpack.c.h.b16 %v530
    %v1078 = vunpack.c.l.b16 %v531
    %v1079 = vunpack.c.h.b16 %v531
    %v1080 = vunpack.c.l.b16 %v532
    %v1081 = vunpack.c.l.b16 %v533
    %v1082 = vunpack.c.h.b16 %v533
    %v1083 = vunpack.c.l.b16 %v534
    %v1084 = vunpack.c.h.b16 %v534
    %v1085 = vunpack.c.l.b16 %v535
    %v1086 = vunpack.c.h.b16 %v535
    %v1087 = vunpack.c.l.b16 %v536
    %v1088 = vunpack.c.l.b16 %v537
    %v1089 = vunpack.c.h.b16 %v537
    %v1090 = vunpack.c.l.b16 %v538
    %v1091 = vunpack.c.h.b16 %v538
    %v1092 = vunpack.c.l.b16 %v539
    %v1093 = vunpack.c.h.b16 %v539
    %v1094 = vunpack.c.l.b16 %v540
    %v1095 = vunpack.c.l.b16 %v541
    %v1096 = vunpack.c.h.b16 %v541
    %v1097 = vunpack.c.l.b16 %v542
    %v1098 = vunpack.c.h.b16 %v542
    %v1099 = vunpack.c.l.b16 %v543
    %v1100 = vunpack.c.h.b16 %v543
    %v1101 = vunpack.c.l.b16 %v544
    %v1102 = vunpack.c.l.b16 %v545
    %v1103 = vunpack.c.h.b16 %v545
    %v1104 = vunpack.c.l.b16 %v546
    %v1105 = vunpack.c.h.b16 %v546
    %v1106 = vunpack.c.l.b16 %v547
    %v1107 = vunpack.c.h.b16 %v547
    %v1108 = vunpack.c.l.b16 %v548
    %v1109 = vunpack.c.l.b16 %v549
    %v1110 = vunpack.c.h.b16 %v549
    %v1111 = vunpack.c.l.b16 %v550
    %v1112 = vunpack.c.h.b16 %v550
    %v1113 = vunpack.c.l.b16 %v551
    %v1114 = vunpack.c.h.b16 %v551
    %v1115 = vunpack.c.l.b16 %v552
    %v1116 = vunpack.c.l.b16 %v553
    %v1117 = vunpack.c.h.b16 %v553
    %v1118 = vunpack.c.l.b16 %v554
    %v1119 = vunpack.c.h.b16 %v554
    %v1120 = vunpack.c.l.b16 %v555
    %v1121 = vunpack.c.h.b16 %v555
    %v1122 = vunpack.c.l.b16 %v556
    %v1123 = vunpack.c.l.b16 %v557
    %v1124 = vunpack.c.h.b16 %v557
    %v1125 = vunpack.c.l.b16 %v558
    %v1126 = vunpack.c.h.b16 %v558
    %v1127 = vunpack.c.l.b16 %v559
    %v1128 = vunpack.c.h.b16 %v559
    %v1129 = vunpack.c.l.b16 %v560
    %v1130 = vunpack.c.l.b16 %v561
    %v1131 = vunpack.c.h.b16 %v561
    %v1132 = vunpack.c.l.b16 %v562
    %v1133 = vunpack.c.h.b16 %v562
    %v1134 = vunpack.c.l.b16 %v563
    %v1135 = vunpack.c.h.b16 %v563
    %v1136 = vunpack.c.l.b16 %v564
    %v1137 = vunpack.c.l.b16 %v565
    %v1138 = vunpack.c.h.b16 %v565
    %v1139 = vunpack.c.l.b16 %v566
    %v1140 = vunpack.c.h.b16 %v566
    %v1141 = vunpack.c.l.b16 %v567
    %v1142 = vunpack.c.h.b16 %v567
    %v1143 = vunpack.c.l.b16 %v568
    %v1144 = vunpack.c.l.b16 %v569
    %v1145 = vunpack.c.h.b16 %v569
    %v1146 = vunpack.c.l.b16 %v570
    %v1147 = vunpack.c.h.b16 %v570
    %v1148 = vunpack.c.l.b16 %v571
    %v1149 = vunpack.c.h.b16 %v571
    %v1150 = vunpack.c.l.b16 %v572
    %v1151 = vunpack.c.l.b16 %v573
    %v1152 = vunpack.c.h.b16 %v573
    %v1153 = vunpack.c.l.b16 %v574
    %v1154 = vunpack.c.h.b16 %v574
    %v1155 = vunpack.c.l.b16 %v575
    %v1156 = vunpack.c.h.b16 %v575
    %v1157 = vunpack.c.l.b16 %v576
    %v1158 = vunpack.c.l.b16 %v577
    %v1159 = vunpack.c.h.b16 %v577
    %v1160 = vunpack.c.l.b16 %v578
    %v1161 = vunpack.c.h.b16 %v578
    %v1162 = vunpack.c.l.b16 %v579
    %v1163 = vunpack.c.h.b16 %v579
    %v1164 = vunpack.c.l.b16 %v580
    %v1165 = vunpack.c.l.b16 %v581
    %v1166 = vunpack.c.h.b16 %v581
    %v1167 = vunpack.c.l.b16 %v582
    %v1168 = vunpack.c.h.b16 %v582
    %v1169 = vunpack.c.l.b16 %v583
    %v1170 = vunpack.c.h.b16 %v583
    %v1171 = vunpack.c.l.b16 %v584
    %v1172 = vunpack.c.l.b16 %v585
    %v1173 = vunpack.c.h.b16 %v585
    %v1174 = vunpack.c.l.b16 %v586
    %v1175 = vunpack.c.h.b16 %v586
    %v1176 = vunpack.c.l.b16 %v587
    %v1177 = vunpack.c.h.b16 %v587
    %v1178 = vunpack.c.l.b16 %v588
    %v1179 = vunpack.c.l.b16 %v589
    %v1180 = vunpack.c.h.b16 %v589
    %v1181 = vunpack.c.l.b16 %v590
    %v1182 = vunpack.c.h.b16 %v590
    %v1183 = vunpack.c.l.b16 %v591
    %v1184 = vunpack.c.h.b16 %v591
    %v1185 = vunpack.c.l.b16 %v592
    %v1186 = vunpack.c.l.b16 %v593
    %v1187 = vunpack.c.h.b16 %v593
    %v1188 = vunpack.c.l.b16 %v594
    %v1189 = vunpack.c.h.b16 %v594
    %v1190 = vunpack.c.l.b16 %v595
    %v1191 = vunpack.c.h.b16 %v595
    %v1192 = vunpack.c.l.b16 %v596
    %v1193 = vunpack.c.l.b16 %v597
    %v1194 = vunpack.c.h.b16 %v597
    %v1195 = vunpack.c.l.b16 %v598
    %v1196 = vunpack.c.h.b16 %v598
    %v1197 = vunpack.c.l.b16 %v599
    %v1198 = vunpack.c.h.b16 %v599
    %v1199 = vunpack.c.l.b16 %v600
    %v1200 = vunpack.c.l.b16 %v601
    %v1201 = vunpack.c.h.b16 %v601
    %v1202 = vunpack.c.l.b16 %v602
    %v1203 = vunpack.c.h.b16 %v602
    %v1204 = vunpack.c.l.b16 %v603
    %v1205 = vunpack.c.h.b16 %v603
    %v1206 = vunpack.c.l.b16 %v604
    %v1207 = vunpack.c.l.b16 %v605
    %v1208 = vunpack.c.h.b16 %v605
    %v1209 = vunpack.c.l.b16 %v606
    %v1210 = vunpack.c.h.b16 %v606
    %v1211 = vunpack.c.l.b16 %v607
    %v1212 = vunpack.c.h.b16 %v607
    %v1213 = vunpack.c.l.b16 %v608
    %v1214 = vunpack.c.l.b16 %v609
    %v1215 = vunpack.c.h.b16 %v609
    %v1216 = vunpack.c.l.b16 %v610
    %v1217 = vunpack.c.h.b16 %v610
    %v1218 = vunpack.c.l.b16 %v611
    %v1219 = vunpack.c.h.b16 %v611
    %v1220 = vunpack.c.l.b16 %v612
    %v1221 = vunpack.c.l.b16 %v613
    %v1222 = vunpack.c.h.b16 %v613
    %v1223 = vunpack.c.l.b16 %v614
    %v1224 = vunpack.c.h.b16 %v614
    %v1225 = vunpack.c.l.b16 %v615
    %v1226 = vunpack.c.h.b16 %v615
    %v1227 = vunpack.c.l.b16 %v616
    %v1228 = vunpack.c.l.b16 %v617
    %v1229 = vunpack.c.h.b16 %v617
    %v1230 = vunpack.c.l.b16 %v618
    %v1231 = vunpack.c.h.b16 %v618
    %v1232 = vunpack.c.l.b16 %v619
    %v1233 = vunpack.c.h.b16 %v619
    %v1234 = vunpack.c.l.b16 %v620
    %v1235 = vunpack.c.l.b16 %v621
    %v1236 = vunpack.c.h.b16 %v621
    %v1237 = vunpack.c.l.b16 %v622
    %v1238 = vunpack.c.h.b16 %v622
    %v1239 = vunpack.c.l.b16 %v623
    %v1240 = vunpack.c.h.b16 %v623
    %v1241 = vunpack.c.l.b16 %v624
    %v1242 = vunpack.c.l.b16 %v625
    %v1243 = vunpack.c.h.b16 %v625
    %v1244 = vunpack.c.l.b16 %v626
    %v1245 = vunpack.c.h.b16 %v626
    %v1246 = vunpack.c.l.b16 %v627
    %v1247 = vunpack.c.h.b16 %v627
    %v1248 = vunpack.c.l.b16 %v628
    %v1249 = vunpack.c.l.b16 %v629
    %v1250 = vunpack.c.h.b16 %v629
    %v1251 = vunpack.c.l.b16 %v630
    %v1252 = vunpack.c.h.b16 %v630
    %v1253 = vunpack.c.l.b16 %v631
    %v1254 = vunpack.c.h.b16 %v631
    %v1255 = vunpack.c.l.b16 %v632
    %v1256 = vunpack.c.l.b16 %v633
    %v1257 = vunpack.c.h.b16 %v633
    %v1258 = vunpack.c.l.b16 %v634
    %v1259 = vunpack.c.h.b16 %v634
    %v1260 = vunpack.c.l.b16 %v635
    %v1261 = vunpack.c.h.b16 %v635
    %v1262 = vunpack.c.l.b16 %v636
    %v1263 = vunpack.c.l.b16 %v637
    %v1264 = vunpack.c.h.b16 %v637
    %v1265 = vunpack.c.l.b16 %v638
    %v1266 = vunpack.c.h.b16 %v638
    %v1267 = vunpack.c.l.b16 %v639
    %v1268 = vunpack.c.h.b16 %v639
    %v1269 = vunpack.c.l.b16 %v640
    %v1270 = vunpack.c.l.b16 %v641
    %v1271 = vunpack.c.h.b16 %v641
    %v1272 = vunpack.c.l.b16 %v642
    %v1273 = vunpack.c.h.b16 %v642
    %v1274 = vunpack.c.l.b16 %v643
    %v1275 = vunpack.c.h.b16 %v643
    %v1276 = vunpack.c.l.b16 %v644
    %v1277 = vunpack.c.l.b16 %v645
    %v1278 = vunpack.c.h.b16 %v645
    %v1279 = vunpack.c.l.b16 %v646
    %v1280 = vunpack.c.h.b16 %v646
    %v1281 = vunpack.c.l.b16 %v647
    %v1282 = vunpack.c.h.b16 %v647
    %v1283 = vunpack.c.l.b16 %v648
    %v1284 = vunpack.c.l.b16 %v649
    %v1285 = vunpack.c.h.b16 %v649
    %v1286 = vunpack.c.l.b16 %v650
    %v1287 = vunpack.c.h.b16 %v650
    %v1288 = vunpack.c.l.b16 %v651
    %v1289 = vunpack.c.h.b16 %v651
    %v1290 = vunpack.c.l.b16 %v652
    %v1291 = vunpack.c.l.b16 %v653
    %v1292 = vunpack.c.h.b16 %v653
    %v1293 = vunpack.c.l.b16 %v654
    %v1294 = vunpack.c.h.b16 %v654
    %v1295 = vunpack.c.l.b16 %v655
    %v1296 = vunpack.c.h.b16 %v655
    %v1297 = vunpack.c.l.b16 %v656
    %v1298 = vunpack.c.l.b16 %v657
    %v1299 = vunpack.c.h.b16 %v657
    %v1300 = vunpack.c.l.b16 %v658
    %v1301 = vunpack.c.h.b16 %v658
    %v1302 = vunpack.c.l.b16 %v659
    %v1303 = vunpack.c.h.b16 %v659
    %v1304 = vunpack.c.l.b16 %v660
    %v1305 = vunpack.c.l.b16 %v661
    %v1306 = vunpack.c.h.b16 %v661
    %v1307 = vunpack.c.l.b16 %v662
    %v1308 = vunpack.c.h.b16 %v662
    %v1309 = vunpack.c.l.b16 %v663
    %v1310 = vunpack.c.h.b16 %v663
    %v1311 = vunpack.c.l.b16 %v664
    %v1312 = vunpack.c.l.b16 %v665
    %v1313 = vunpack.c.h.b16 %v665
    %v1314 = vunpack.c.l.b16 %v666
    %v1315 = vunpack.c.h.b16 %v666
    %v1316 = vunpack.c.l.b16 %v667
    %v1317 = vunpack.c.h.b16 %v667
    %v1318 = vunpack.c.l.b16 %v668
    %v1319 = vunpack.c.l.b16 %v669
    %v1320 = vunpack.c.h.b16 %v669
    %v1321 = vunpack.c.l.b16 %v670
    %v1322 = vunpack.c.h.b16 %v670
    %v1323 = vunpack.c.l.b16 %v671
    %v1324 = vunpack.c.h.b16 %v671
    %v1325 = vunpack.c.l.b16 %v672
    %v1326 = vunpack.c.l.b16 %v673
    %v1327 = vunpack.c.h.b16 %v673
    %v1328 = vunpack.c.l.b16 %v674
    %v1329 = vunpack.c.h.b16 %v674
    %v1330 = vunpack.c.l.b16 %v675
    %v1331 = vunpack.c.h.b16 %v675
    %v1332 = vunpack.c.l.b16 %v676
    %v1333 = vunpack.c.l.b16 %v677
    %v1334 = vunpack.c.h.b16 %v677
    %v1335 = vunpack.c.l.b16 %v678
    %v1336 = vunpack.c.h.b16 %v678
    %v1337 = vunpack.c.l.b16 %v679
    %v1338 = vunpack.c.h.b16 %v679
    %v1339 = vunpack.c.l.b16 %v680
    %v1340 = vunpack.c.l.b16 %v681
    %v1341 = vunpack.c.h.b16 %v681
    %v1342 = vunpack.c.l.b16 %v682
    %v1343 = vunpack.c.h.b16 %v682
    %v1344 = vunpack.c.l.b16 %v683
    %v1345 = vunpack.c.h.b16 %v683
    %v1346 = vunpack.c.l.b16 %v684
    %v1347 = vunpack.c.l.b16 %v685
    %v1348 = vunpack.c.h.b16 %v685
    %v1349 = vunpack.c.l.b16 %v686
    %v1350 = vunpack.c.h.b16 %v686
    %v1351 = vunpack.c.l.b16 %v687
    %v1352 = vunpack.c.h.b16 %v687
    %v1353 = vunpack.c.l.b16 %v688
    %v1354 = vunpack.c.l.b16 %v689
    %v1355 = vunpack.c.h.b16 %v689
    %v1356 = vunpack.c.l.b16 %v690
    %v1357 = vunpack.c.h.b16 %v690
    %v1358 = vunpack.c.l.b16 %v691
    %v1359 = vunpack.c.h.b16 %v691
    %v1360 = vunpack.c.l.b16 %v692
    %v1361 = vunpack.c.l.b16 %v693
    %v1362 = vunpack.c.h.b16 %v693
    %v1363 = vunpack.c.l.b16 %v694
    %v1364 = vunpack.c.h.b16 %v694
    %v1365 = vunpack.c.l.b16 %v695
    %v1366 = vunpack.c.h.b16 %v695
    %v1367 = vunpack.c.l.b16 %v696
    %v1368 = vunpack.c.l.b16 %v697
    %v1369 = vunpack.c.h.b16 %v697
    %v1370 = vunpack.c.l.b16 %v698
    %v1371 = vunpack.c.h.b16 %v698
    %v1372 = vunpack.c.l.b16 %v699
    %v1373 = vunpack.c.h.b16 %v699
    %v1374 = vunpack.c.l.b16 %v700
    %v1375 = vunpack.c.l.b16 %v701
    %v1376 = vunpack.c.h.b16 %v701
    %v1377 = vunpack.c.l.b16 %v702
    %v1378 = vunpack.c.h.b16 %v702
    %v1379 = vunpack.c.l.b16 %v703
    %v1380 = vunpack.c.h.b16 %v703
    %v1381 = vunpack.c.l.b16 %v704
    %v1382 = vunpack.c.l.b16 %v705
    %v1383 = vunpack.c.h.b16 %v705
    %v1384 = vunpack.c.l.b16 %v706
    %v1385 = vunpack.c.h.b16 %v706
    %v1386 = vunpack.c.l.b16 %v707
    %v1387 = vunpack.c.h.b16 %v707
    %v1388 = vunpack.c.l.b16 %v708
    %v1389 = vunpack.c.l.b16 %v709
    %v1390 = vunpack.c.h.b16 %v709
    %v1391 = vunpack.c.l.b16 %v710
    %v1392 = vunpack.c.h.b16 %v710
    %v1393 = vunpack.c.l.b16 %v711
    %v1394 = vunpack.c.h.b16 %v711
    %v1395 = vunpack.c.l.b16 %v712
    %v1396 = vunpack.c.l.b16 %v713
    %v1397 = vunpack.c.h.b16 %v713
    %v1398 = vunpack.c.l.b16 %v714
    %v1399 = vunpack.c.h.b16 %v714
    %v1400 = vunpack.c.l.b16 %v715
    %v1401 = vunpack.c.h.b16 %v715
    %v1402 = vunpack.c.l.b16 %v716
    %v1403 = vunpack.c.l.b16 %v717
    %v1404 = vunpack.c.h.b16 %v717
    %v1405 = vunpack.c.l.b16 %v718
    %v1406 = vunpack.c.h.b16 %v718
    %v1407 = vunpack.c.l.b16 %v719
    %v1408 = vunpack.c.h.b16 %v719
    %v1409 = vunpack.c.l.b16 %v720
    %v1410 = vunpack.c.l.b16 %v721
    %v1411 = vunpack.c.h.b16 %v721
    %v1412 = vunpack.c.l.b16 %v722
    %v1413 = vunpack.c.h.b16 %v722
    %v1414 = vunpack.c.l.b16 %v723
    %v1415 = vunpack.c.h.b16 %v723
    %v1416 = vunpack.c.l.b16 %v724
    %v1417 = vunpack.c.l.b16 %v725
    %v1418 = vunpack.c.h.b16 %v725
    %v1419 = vunpack.c.l.b16 %v726
    %v1420 = vunpack.c.h.b16 %v726
    %v1421 = vunpack.c.l.b16 %v727
    %v1422 = vunpack.c.h.b16 %v727
    %v1423 = vunpack.c.l.b16 %v728
    %v1424 = vunpack.c.l.b16 %v729
    %v1425 = vunpack.c.h.b16 %v729
    %v1426 = vunpack.c.l.b16 %v730
    %v1427 = vunpack.c.h.b16 %v730
    %v1428 = vunpack.c.l.b16 %v731
    %v1429 = vunpack.c.h.b16 %v731
    %v1430 = vunpack.c.l.b16 %v732
    %v1431 = vunpack.c.l.b16 %v733
    %v1432 = vunpack.c.h.b16 %v733
    %v1433 = vunpack.c.l.b16 %v734
    %v1434 = vunpack.c.h.b16 %v734
    %v1435 = vunpack.c.l.b16 %v735
    %v1436 = vunpack.c.h.b16 %v735
    %v1437 = vunpack.c.l.b16 %v736
    %v1438 = vunpack.c.l.b16 %v737
    %v1439 = vunpack.c.h.b16 %v737
    %v1440 = vunpack.c.l.b16 %v738
    %v1441 = vunpack.c.h.b16 %v738
    %v1442 = vunpack.c.l.b16 %v739
    %v1443 = vunpack.c.h.b16 %v739
    %v1444 = vunpack.c.l.b16 %v740
    %v1445 = vpack.c.b16 %v1004, %v997
    %v1446 = vpack.c.b16 %v1005, %v998
    %v1447 = vpack.c.b16 %v1006, %v999
    %v1448 = vpack.c.b16 %v1007, %v1000
    %v1449 = vpack.c.b16 %v1008, %v1001
    %v1450 = vpack.c.b16 %v1009, %v1002
    %v1451 = vpack.c.b16 %v1010, %v1003
    %v1452 = vpack.c.b16 %v1018, %v1011
    %v1453 = vpack.c.b16 %v1019, %v1012
    %v1454 = vpack.c.b16 %v1020, %v1013
    %v1455 = vpack.c.b16 %v1021, %v1014
    %v1456 = vpack.c.b16 %v1022, %v1015
    %v1457 = vpack.c.b16 %v1023, %v1016
    %v1458 = vpack.c.b16 %v1024, %v1017
    %v1459 = vpack.c.b16 %v1032, %v1025
    %v1460 = vpack.c.b16 %v1033, %v1026
    %v1461 = vpack.c.b16 %v1034, %v1027
    %v1462 = vpack.c.b16 %v1035, %v1028
    %v1463 = vpack.c.b16 %v1036, %v1029
    %v1464 = vpack.c.b16 %v1037, %v1030
    %v1465 = vpack.c.b16 %v1038, %v1031
    %v1466 = vpack.c.b16 %v1046, %v1039
    %v1467 = vpack.c.b16 %v1047, %v1040
    %v1468 = vpack.c.b16 %v1048, %v1041
    %v1469 = vpack.c.b16 %v1049, %v1042
    %v1470 = vpack.c.b16 %v1050, %v1043
    %v1471 = vpack.c.b16 %v1051, %v1044
    %v1472 = vpack.c.b16 %v1052, %v1045
    %v1473 = vpack.c.b16 %v1060, %v1053
    %v1474 = vpack.c.b16 %v1061, %v1054
    %v1475 = vpack.c.b16 %v1062, %v1055
    %v1476 = vpack.c.b16 %v1063, %v1056
    %v1477 = vpack.c.b16 %v1064, %v1057
    %v1478 = vpack.c.b16 %v1065, %v1058
    %v1479 = vpack.c.b16 %v1066, %v1059
    %v1480 = vpack.c.b16 %v1074, %v1067
    %v1481 = vpack.c.b16 %v1075, %v1068
    %v1482 = vpack.c.b16 %v1076, %v1069
    %v1483 = vpack.c.b16 %v1077, %v1070
    %v1484 = vpack.c.b16 %v1078, %v1071
    %v1485 = vpack.c.b16 %v1079, %v1072
    %v1486 = vpack.c.b16 %v1080, %v1073
    %v1487 = vpack.c.b16 %v1088, %v1081
    %v1488 = vpack.c.b16 %v1089, %v1082
    %v1489 = vpack.c.b16 %v1090, %v1083
    %v1490 = vpack.c.b16 %v1091, %v1084
    %v1491 = vpack.c.b16 %v1092, %v1085
    %v1492 = vpack.c.b16 %v1093, %v1086
    %v1493 = vpack.c.b16 %v1094, %v1087
    %v1494 = vpack.c.b16 %v1102, %v1095
    %v1495 = vpack.c.b16 %v1103, %v1096
    %v1496 = vpack.c.b16 %v1104, %v1097
    %v1497 = vpack.c.b16 %v1105, %v1098
    %v1498 = vpack.c.b16 %v1106, %v1099
    %v1499 = vpack.c.b16 %v1107, %v1100
    %v1500 = vpack.c.b16 %v1108, %v1101
    %v1501 = vpack.c.b16 %v1116, %v1109
    %v1502 = vpack.c.b16 %v1117, %v1110
    %v1503 = vpack.c.b16 %v1118, %v1111
    %v1504 = vpack.c.b16 %v1119, %v1112
    %v1505 = vpack.c.b16 %v1120, %v1113
    %v1506 = vpack.c.b16 %v1121, %v1114
    %v1507 = vpack.c.b16 %v1122, %v1115
    %v1508 = vpack.c.b16 %v1130, %v1123
    %v1509 = vpack.c.b16 %v1131, %v1124
    %v1510 = vpack.c.b16 %v1132, %v1125
    %v1511 = vpack.c.b16 %v1133, %v1126
    %v1512 = vpack.c.b16 %v1134, %v1127
    %v1513 = vpack.c.b16 %v1135, %v1128
    %v1514 = vpack.c.b16 %v1136, %v1129
    %v1515 = vpack.c.b16 %v1144, %v1137
    %v1516 = vpack.c.b16 %v1145, %v1138
    %v1517 = vpack.c.b16 %v1146, %v1139
    %v1518 = vpack.c.b16 %v1147, %v1140
    %v1519 = vpack.c.b16 %v1148, %v1141
    %v1520 = vpack.c.b16 %v1149, %v1142
    %v1521 = vpack.c.b16 %v1150, %v1143
    %v1522 = vpack.c.b16 %v1158, %v1151
    %v1523 = vpack.c.b16 %v1159, %v1152
    %v1524 = vpack.c.b16 %v1160, %v1153
    %v1525 = vpack.c.b16 %v1161, %v1154
    %v1526 = vpack.c.b16 %v1162, %v1155
    %v1527 = vpack.c.b16 %v1163, %v1156
    %v1528 = vpack.c.b16 %v1164, %v1157
    %v1529 = vpack.c.b16 %v1172, %v1165
    %v1530 = vpack.c.b16 %v1173, %v1166
    %v1531 = vpack.c.b16 %v1174, %v1167
    %v1532 = vpack.c.b16 %v1175, %v1168
    %v1533 = vpack.c.b16 %v1176, %v1169
    %v1534 = vpack.c.b16 %v1177, %v1170
    %v1535 = vpack.c.b16 %v1178, %v1171
    %v1536 = vpack.c.b16 %v1186, %v1179
    %v1537 = vpack.c.b16 %v1187, %v1180
    %v1538 = vpack.c.b16 %v1188, %v1181
    %v1539 = vpack.c.b16 %v1189, %v1182
    %v1540 = vpack.c.b16 %v1190, %v1183
    %v1541 = vpack.c.b16 %v1191, %v1184
    %v1542 = vpack.c.b16 %v1192, %v1185
    %v1543 = vpack.c.b16 %v1200, %v1193
    %v1544 = vpack.c.b16 %v1201, %v1194
    %v1545 = vpack.c.b16 %v1202, %v1195
    %v1546 = vpack.c.b16 %v1203, %v1196
    %v1547 = vpack.c.b16 %v1204, %v1197
    %v1548 = vpack.c.b16 %v1205, %v1198
    %v1549 = vpack.c.b16 %v1206, %v1199
    %v1550 = vpack.c.b16 %v1214, %v1207
    %v1551 = vpack.c.b16 %v1215, %v1208
    %v1552 = vpack.c.b16 %v1216, %v1209
    %v1553 = vpack.c.b16 %v1217, %v1210
    %v1554 = vpack.c.b16 %v1218, %v1211
    %v1555 = vpack.c.b16 %v1219, %v1212
    %v1556 = vpack.c.b16 %v1220, %v1213
    %v1557 = vpack.c.b16 %v1228, %v1221
    %v1558 = vpack.c.b16 %v1229, %v1222
    %v1559 = vpack.c.b16 %v1230, %v1223
    %v1560 = vpack.c.b16 %v1231, %v1224
    %v1561 = vpack.c.b16 %v1232, %v1225
    %v1562 = vpack.c.b16 %v1233, %v1226
    %v1563 = vpack.c.b16 %v1234, %v1227
    %v1564 = vpack.c.b16 %v1242, %v1235
    %v1565 = vpack.c.b16 %v1243, %v1236
    %v1566 = vpack.c.b16 %v1244, %v1237
    %v1567 = vpack.c.b16 %v1245, %v1238
    %v1568 = vpack.c.b16 %v1246, %v1239
    %v1569 = vpack.c.b16 %v1247, %v1240
    %v1570 = vpack.c.b16 %v1248, %v1241
    %v1571 = vpack.c.b16 %v1256, %v1249
    %v1572 = vpack.c.b16 %v1257, %v1250
    %v1573 = vpack.c.b16 %v1258, %v1251
    %v1574 = vpack.c.b16 %v1259, %v1252
    %v1575 = vpack.c.b16 %v1260, %v1253
    %v1576 = vpack.c.b16 %v1261, %v1254
    %v1577 = vpack.c.b16 %v1262, %v1255
    %v1578 = vpack.c.b16 %v1270, %v1263
    %v1579 = vpack.c.b16 %v1271, %v1264
    %v1580 = vpack.c.b16 %v1272, %v1265
    %v1581 = vpack.c.b16 %v1273, %v1266
    %v1582 = vpack.c.b16 %v1274, %v1267
    %v1583 = vpack.c.b16 %v1275, %v1268
    %v1584 = vpack.c.b16 %v1276, %v1269
    %v1585 = vpack.c.b16 %v1284, %v1277
    %v1586 = vpack.c.b16 %v1285, %v1278
    %v1587 = vpack.c.b16 %v1286, %v1279
    %v1588 = vpack.c.b16 %v1287, %v1280
    %v1589 = vpack.c.b16 %v1288, %v1281
    %v1590 = vpack.c.b16 %v1289, %v1282
    %v1591 = vpack.c.b16 %v1290, %v1283
    %v1592 = vpack.c.b16 %v1298, %v1291
    %v1593 = vpack.c.b16 %v1299, %v1292
    %v1594 = vpack.c.b16 %v1300, %v1293
    %v1595 = vpack.c.b16 %v1301, %v1294
    %v1596 = vpack.c.b16 %v1302, %v1295
    %v1597 = vpack.c.b16 %v1303, %v1296
    %v1598 = vpack.c.b16 %v1304, %v1297
    %v1599 = vpack.c.b16 %v1312, %v1305
    %v1600 = vpack.c.b16 %v1313, %v1306
    %v1601 = vpack.c.b16 %v1314, %v1307
    %v1602 = vpack.c.b16 %v1315, %v1308
    %v1603 = vpack.c.b16 %v1316, %v1309
    %v1604 = vpack.c.b16 %v1317, %v1310
    %v1605 = vpack.c.b16 %v1318, %v1311
    %v1606 = vpack.c.b16 %v1326, %v1319
    %v1607 = vpack.c.b16 %v1327, %v1320
    %v1608 = vpack.c.b16 %v1328, %v1321
    %v1609 = vpack.c.b16 %v1329, %v1322
    %v1610 = vpack.c.b16 %v1330, %v1323
    %v1611 = vpack.c.b16 %v1331, %v1324
    %v1612 = vpack.c.b16 %v1332, %v1325
    %v1613 = vpack.c.b16 %v1340, %v1333
    %v1614 = vpack.c.b16 %v1341, %v1334
    %v1615 = vpack.c.b16 %v1342, %v1335
    %v1616 = vpack.c.b16 %v1343, %v1336
    %v1617 = vpack.c.b16 %v1344, %v1337
    %v1618 = vpack.c.b16 %v1345, %v1338
    %v1619 = vpack.c.b16 %v1346, %v1339
    %v1620 = vpack.c.b16 %v1354, %v1347
    %v1621 = vpack.c.b16 %v1355, %v1348
    %v1622 = vpack.c.b16 %v1356, %v1349
    %v1623 = vpack.c.b16 %v1357, %v1350
    %v1624 = vpack.c.b16 %v1358, %v1351
    %v1625 = vpack.c.b16 %v1359, %v1352
    %v1626 = vpack.c.b16 %v1360, %v1353
    %v1627 = vpack.c.b16 %v1368, %v1361
    %v1628 = vpack.c.b16 %v1369, %v1362
    %v1629 = vpack.c.b16 %v1370, %v1363
    %v1630 = vpack.c.b16 %v1371, %v1364
    %v1631 = vpack.c.b16 %v1372, %v1365
    %v1632 = vpack.c.b16 %v1373, %v1366
    %v1633 = vpack.c.b16 %v1374, %v1367
    %v1634 = vpack.c.b16 %v1382, %v1375
    %v1635 = vpack.c.b16 %v1383, %v1376
    %v1636 = vpack.c.b16 %v1384, %v1377
    %v1637 = vpack.c.b16 %v1385, %v1378
    %v1638 = vpack.c.b16 %v1386, %v1379
    %v1639 = vpack.c.b16 %v1387, %v1380
    %v1640 = vpack.c.b16 %v1388, %v1381
    %v1641 = vpack.c.b16 %v1396, %v1389
    %v1642 = vpack.c.b16 %v1397, %v1390
    %v1643 = vpack.c.b16 %v1398, %v1391
    %v1644 = vpack.c.b16 %v1399, %v1392
    %v1645 = vpack.c.b16 %v1400, %v1393
    %v1646 = vpack.c.b16 %v1401, %v1394
    %v1647 = vpack.c.b16 %v1402, %v1395
    %v1648 = vpack.c.b16 %v1410, %v1403
    %v1649 = vpack.c.b16 %v1411, %v1404
    %v1650 = vpack.c.b16 %v1412, %v1405
    %v1651 = vpack.c.b16 %v1413, %v1406
    %v1652 = vpack.c.b16 %v1414, %v1407
    %v1653 = vpack.c.b16 %v1415, %v1408
    %v1654 = vpack.c.b16 %v1416, %v1409
    %v1655 = vpack.c.b16 %v1424, %v1417
    %v1656 = vpack.c.b16 %v1425, %v1418
    %v1657 = vpack.c.b16 %v1426, %v1419
    %v1658 = vpack.c.b16 %v1427, %v1420
    %v1659 = vpack.c.b16 %v1428, %v1421
    %v1660 = vpack.c.b16 %v1429, %v1422
    %v1661 = vpack.c.b16 %v1430, %v1423
    %v1662 = vpack.c.b16 %v1438, %v1431
    %v1663 = vpack.c.b16 %v1439, %v1432
    %v1664 = vpack.c.b16 %v1440, %v1433
    %v1665 = vpack.c.b16 %v1441, %v1434
    %v1666 = vpack.c.b16 %v1442, %v1435
    %v1667 = vpack.c.b16 %v1443, %v1436
    %v1668 = vpack.c.b16 %v1444, %v1437
    %1893 = vmatpush.bf16.msra.mxu0 %v1494
    %1894 = vmatpush.bf16.msra.mxu0 %v1487
    %1895 = vmatpush.bf16.msra.mxu0 %v1480
    %1896 = vmatpush.bf16.msra.mxu0 %v1473
    %1897 = vmatpush.bf16.msra.mxu0 %v1466
    %1898 = vmatpush.bf16.msra.mxu0 %v1459
    %1899 = vmatpush.bf16.msra.mxu0 %v1452
    %1900 = vmatpush.bf16.msra.mxu0 %v1445
    %1901 = vmatmul.bf16.gmra.mxu0 %v481
    %v1902 = vpop.f32.mrf.mxu0
    %v1903 = vadd.f32 0.0, %v1902
    %v1904 = vpop.f32.mrf.mxu0
    %1905 = vdwg.mxu0
    %1906 = vmatpush.bf16.msra.mxu0 %v1550
    %1907 = vmatpush.bf16.msra.mxu0 %v1543
    %1908 = vmatpush.bf16.msra.mxu0 %v1536
    %1909 = vmatpush.bf16.msra.mxu0 %v1529
    %1910 = vmatpush.bf16.msra.mxu0 %v1522
    %1911 = vmatpush.bf16.msra.mxu0 %v1515
    %1912 = vmatpush.bf16.msra.mxu0 %v1508
    %1913 = vmatpush.bf16.msra.mxu0 %v1501
    %1914 = vmatmul.bf16.gmra.mxu0 %v482
    %v1915 = vpop.f32.mrf.mxu0
    %v1916 = vadd.f32 %v1903, %v1915
    %v1917 = vpop.f32.mrf.mxu0
    %1918 = vdwg.mxu0
    %1919 = vmatpush.bf16.msra.mxu0 %v1606
    %1920 = vmatpush.bf16.msra.mxu0 %v1599
    %1921 = vmatpush.bf16.msra.mxu0 %v1592
    %1922 = vmatpush.bf16.msra.mxu0 %v1585
    %1923 = vmatpush.bf16.msra.mxu0 %v1578
    %1924 = vmatpush.bf16.msra.mxu0 %v1571
    %1925 = vmatpush.bf16.msra.mxu0 %v1564
    %1926 = vmatpush.bf16.msra.mxu0 %v1557
    %1927 = vmatmul.bf16.gmra.mxu0 %v483
    %v1928 = vpop.f32.mrf.mxu0
    %v1929 = vadd.f32 %v1916, %v1928
    %v1930 = vpop.f32.mrf.mxu0
    %1931 = vdwg.mxu0
    %1932 = vmatpush.bf16.msra.mxu0 %v1662
    %1933 = vmatpush.bf16.msra.mxu0 %v1655
    %1934 = vmatpush.bf16.msra.mxu0 %v1648
    %1935 = vmatpush.bf16.msra.mxu0 %v1641
    %1936 = vmatpush.bf16.msra.mxu0 %v1634
    %1937 = vmatpush.bf16.msra.mxu0 %v1627
    %1938 = vmatpush.bf16.msra.mxu0 %v1620
    %1939 = vmatpush.bf16.msra.mxu0 %v1613
    %1940 = vmatmul.bf16.gmra.mxu0 %v484
    %v1941 = vpop.f32.mrf.mxu0
    %v1942 = vadd.f32 %v1929, %v1941
    %v1943 = vpop.f32.mrf.mxu0
    %1944 = vdwg.mxu0
    %1945 = vmatpush.bf16.msra.mxu0 %v1495
    %1946 = vmatpush.bf16.msra.mxu0 %v1488
    %1947 = vmatpush.bf16.msra.mxu0 %v1481
    %1948 = vmatpush.bf16.msra.mxu0 %v1474
    %1949 = vmatpush.bf16.msra.mxu0 %v1467
    %1950 = vmatpush.bf16.msra.mxu0 %v1460
    %1951 = vmatpush.bf16.msra.mxu0 %v1453
    %1952 = vmatpush.bf16.msra.mxu0 %v1446
    %1953 = vmatmul.bf16.gmra.mxu0 %v481
    %v1954 = vpop.f32.mrf.mxu0
    %v1955 = vadd.f32 0.0, %v1954
    %v1956 = vpop.f32.mrf.mxu0
    %1957 = vdwg.mxu0
    %1958 = vmatpush.bf16.msra.mxu0 %v1551
    %1959 = vmatpush.bf16.msra.mxu0 %v1544
    %1960 = vmatpush.bf16.msra.mxu0 %v1537
    %1961 = vmatpush.bf16.msra.mxu0 %v1530
    %1962 = vmatpush.bf16.msra.mxu0 %v1523
    %1963 = vmatpush.bf16.msra.mxu0 %v1516
    %1964 = vmatpush.bf16.msra.mxu0 %v1509
    %1965 = vmatpush.bf16.msra.mxu0 %v1502
    %1966 = vmatmul.bf16.gmra.mxu0 %v482
    %v1967 = vpop.f32.mrf.mxu0
    %v1968 = vadd.f32 %v1955, %v1967
    %v1969 = vpop.f32.mrf.mxu0
    %1970 = vdwg.mxu0
    %1971 = vmatpush.bf16.msra.mxu0 %v1607
    %1972 = vmatpush.bf16.msra.mxu0 %v1600
    %1973 = vmatpush.bf16.msra.mxu0 %v1593
    %1974 = vmatpush.bf16.msra.mxu0 %v1586
    %1975 = vmatpush.bf16.msra.mxu0 %v1579
    %1976 = vmatpush.bf16.msra.mxu0 %v1572
    %1977 = vmatpush.bf16.msra.mxu0 %v1565
    %1978 = vmatpush.bf16.msra.mxu0 %v1558
    %1979 = vmatmul.bf16.gmra.mxu0 %v483
    %v1980 = vpop.f32.mrf.mxu0
    %v1981 = vadd.f32 %v1968, %v1980
    %v1982 = vpop.f32.mrf.mxu0
    %1983 = vdwg.mxu0
    %1984 = vmatpush.bf16.msra.mxu0 %v1663
    %1985 = vmatpush.bf16.msra.mxu0 %v1656
    %1986 = vmatpush.bf16.msra.mxu0 %v1649
    %1987 = vmatpush.bf16.msra.mxu0 %v1642
    %1988 = vmatpush.bf16.msra.mxu0 %v1635
    %1989 = vmatpush.bf16.msra.mxu0 %v1628
    %1990 = vmatpush.bf16.msra.mxu0 %v1621
    %1991 = vmatpush.bf16.msra.mxu0 %v1614
    %1992 = vmatmul.bf16.gmra.mxu0 %v484
    %v1993 = vpop.f32.mrf.mxu0
    %v1994 = vadd.f32 %v1981, %v1993
    %v1995 = vpop.f32.mrf.mxu0
    %1996 = vdwg.mxu0
    %1997 = vmatpush.bf16.msra.mxu0 %v1496
    %1998 = vmatpush.bf16.msra.mxu0 %v1489
    %1999 = vmatpush.bf16.msra.mxu0 %v1482
    %2000 = vmatpush.bf16.msra.mxu0 %v1475
    %2001 = vmatpush.bf16.msra.mxu0 %v1468
    %2002 = vmatpush.bf16.msra.mxu0 %v1461
    %2003 = vmatpush.bf16.msra.mxu0 %v1454
    %2004 = vmatpush.bf16.msra.mxu0 %v1447
    %2005 = vmatmul.bf16.gmra.mxu0 %v481
    %v2006 = vpop.f32.mrf.mxu0
    %v2007 = vadd.f32 0.0, %v2006
    %v2008 = vpop.f32.mrf.mxu0
    %2009 = vdwg.mxu0
    %2010 = vmatpush.bf16.msra.mxu0 %v1552
    %2011 = vmatpush.bf16.msra.mxu0 %v1545
    %2012 = vmatpush.bf16.msra.mxu0 %v1538
    %2013 = vmatpush.bf16.msra.mxu0 %v1531
    %2014 = vmatpush.bf16.msra.mxu0 %v1524
    %2015 = vmatpush.bf16.msra.mxu0 %v1517
    %2016 = vmatpush.bf16.msra.mxu0 %v1510
    %2017 = vmatpush.bf16.msra.mxu0 %v1503
    %2018 = vmatmul.bf16.gmra.mxu0 %v482
    %v2019 = vpop.f32.mrf.mxu0
    %v2020 = vadd.f32 %v2007, %v2019
    %v2021 = vpop.f32.mrf.mxu0
    %2022 = vdwg.mxu0
    %2023 = vmatpush.bf16.msra.mxu0 %v1608
    %2024 = vmatpush.bf16.msra.mxu0 %v1601
    %2025 = vmatpush.bf16.msra.mxu0 %v1594
    %2026 = vmatpush.bf16.msra.mxu0 %v1587
    %2027 = vmatpush.bf16.msra.mxu0 %v1580
    %2028 = vmatpush.bf16.msra.mxu0 %v1573
    %2029 = vmatpush.bf16.msra.mxu0 %v1566
    %2030 = vmatpush.bf16.msra.mxu0 %v1559
    %2031 = vmatmul.bf16.gmra.mxu0 %v483
    %v2032 = vpop.f32.mrf.mxu0
    %v2033 = vadd.f32 %v2020, %v2032
    %v2034 = vpop.f32.mrf.mxu0
    %2035 = vdwg.mxu0
    %2036 = vmatpush.bf16.msra.mxu0 %v1664
    %2037 = vmatpush.bf16.msra.mxu0 %v1657
    %2038 = vmatpush.bf16.msra.mxu0 %v1650
    %2039 = vmatpush.bf16.msra.mxu0 %v1643
    %2040 = vmatpush.bf16.msra.mxu0 %v1636
    %2041 = vmatpush.bf16.msra.mxu0 %v1629
    %2042 = vmatpush.bf16.msra.mxu0 %v1622
    %2043 = vmatpush.bf16.msra.mxu0 %v1615
    %2044 = vmatmul.bf16.gmra.mxu0 %v484
    %v2045 = vpop.f32.mrf.mxu0
    %v2046 = vadd.f32 %v2033, %v2045
    %v2047 = vpop.f32.mrf.mxu0
    %2048 = vdwg.mxu0
    %2049 = vmatpush.bf16.msra.mxu0 %v1497
    %2050 = vmatpush.bf16.msra.mxu0 %v1490
    %2051 = vmatpush.bf16.msra.mxu0 %v1483
    %2052 = vmatpush.bf16.msra.mxu0 %v1476
    %2053 = vmatpush.bf16.msra.mxu0 %v1469
    %2054 = vmatpush.bf16.msra.mxu0 %v1462
    %2055 = vmatpush.bf16.msra.mxu0 %v1455
    %2056 = vmatpush.bf16.msra.mxu0 %v1448
    %2057 = vmatmul.bf16.gmra.mxu0 %v481
    %v2058 = vpop.f32.mrf.mxu0
    %v2059 = vadd.f32 0.0, %v2058
    %v2060 = vpop.f32.mrf.mxu0
    %2061 = vdwg.mxu0
    %2062 = vmatpush.bf16.msra.mxu0 %v1553
    %2063 = vmatpush.bf16.msra.mxu0 %v1546
    %2064 = vmatpush.bf16.msra.mxu0 %v1539
    %2065 = vmatpush.bf16.msra.mxu0 %v1532
    %2066 = vmatpush.bf16.msra.mxu0 %v1525
    %2067 = vmatpush.bf16.msra.mxu0 %v1518
    %2068 = vmatpush.bf16.msra.mxu0 %v1511
    %2069 = vmatpush.bf16.msra.mxu0 %v1504
    %2070 = vmatmul.bf16.gmra.mxu0 %v482
    %v2071 = vpop.f32.mrf.mxu0
    %v2072 = vadd.f32 %v2059, %v2071
    %v2073 = vpop.f32.mrf.mxu0
    %2074 = vdwg.mxu0
    %2075 = vmatpush.bf16.msra.mxu0 %v1609
    %2076 = vmatpush.bf16.msra.mxu0 %v1602
    %2077 = vmatpush.bf16.msra.mxu0 %v1595
    %2078 = vmatpush.bf16.msra.mxu0 %v1588
    %2079 = vmatpush.bf16.msra.mxu0 %v1581
    %2080 = vmatpush.bf16.msra.mxu0 %v1574
    %2081 = vmatpush.bf16.msra.mxu0 %v1567
    %2082 = vmatpush.bf16.msra.mxu0 %v1560
    %2083 = vmatmul.bf16.gmra.mxu0 %v483
    %v2084 = vpop.f32.mrf.mxu0
    %v2085 = vadd.f32 %v2072, %v2084
    %v2086 = vpop.f32.mrf.mxu0
    %2087 = vdwg.mxu0
    %2088 = vmatpush.bf16.msra.mxu0 %v1665
    %2089 = vmatpush.bf16.msra.mxu0 %v1658
    %2090 = vmatpush.bf16.msra.mxu0 %v1651
    %2091 = vmatpush.bf16.msra.mxu0 %v1644
    %2092 = vmatpush.bf16.msra.mxu0 %v1637
    %2093 = vmatpush.bf16.msra.mxu0 %v1630
    %2094 = vmatpush.bf16.msra.mxu0 %v1623
    %2095 = vmatpush.bf16.msra.mxu0 %v1616
    %2096 = vmatmul.bf16.gmra.mxu0 %v484
    %v2097 = vpop.f32.mrf.mxu0
    %v2098 = vadd.f32 %v2085, %v2097
    %v2099 = vpop.f32.mrf.mxu0
    %2100 = vdwg.mxu0
    %2101 = vmatpush.bf16.msra.mxu0 %v1498
    %2102 = vmatpush.bf16.msra.mxu0 %v1491
    %2103 = vmatpush.bf16.msra.mxu0 %v1484
    %2104 = vmatpush.bf16.msra.mxu0 %v1477
    %2105 = vmatpush.bf16.msra.mxu0 %v1470
    %2106 = vmatpush.bf16.msra.mxu0 %v1463
    %2107 = vmatpush.bf16.msra.mxu0 %v1456
    %2108 = vmatpush.bf16.msra.mxu0 %v1449
    %2109 = vmatmul.bf16.gmra.mxu0 %v481
    %v2110 = vpop.f32.mrf.mxu0
    %v2111 = vadd.f32 0.0, %v2110
    %v2112 = vpop.f32.mrf.mxu0
    %2113 = vdwg.mxu0
    %2114 = vmatpush.bf16.msra.mxu0 %v1554
    %2115 = vmatpush.bf16.msra.mxu0 %v1547
    %2116 = vmatpush.bf16.msra.mxu0 %v1540
    %2117 = vmatpush.bf16.msra.mxu0 %v1533
    %2118 = vmatpush.bf16.msra.mxu0 %v1526
    %2119 = vmatpush.bf16.msra.mxu0 %v1519
    %2120 = vmatpush.bf16.msra.mxu0 %v1512
    %2121 = vmatpush.bf16.msra.mxu0 %v1505
    %2122 = vmatmul.bf16.gmra.mxu0 %v482
    %v2123 = vpop.f32.mrf.mxu0
    %v2124 = vadd.f32 %v2111, %v2123
    %v2125 = vpop.f32.mrf.mxu0
    %2126 = vdwg.mxu0
    %2127 = vmatpush.bf16.msra.mxu0 %v1610
    %2128 = vmatpush.bf16.msra.mxu0 %v1603
    %2129 = vmatpush.bf16.msra.mxu0 %v1596
    %2130 = vmatpush.bf16.msra.mxu0 %v1589
    %2131 = vmatpush.bf16.msra.mxu0 %v1582
    %2132 = vmatpush.bf16.msra.mxu0 %v1575
    %2133 = vmatpush.bf16.msra.mxu0 %v1568
    %2134 = vmatpush.bf16.msra.mxu0 %v1561
    %2135 = vmatmul.bf16.gmra.mxu0 %v483
    %v2136 = vpop.f32.mrf.mxu0
    %v2137 = vadd.f32 %v2124, %v2136
    %v2138 = vpop.f32.mrf.mxu0
    %2139 = vdwg.mxu0
    %2140 = vmatpush.bf16.msra.mxu0 %v1666
    %2141 = vmatpush.bf16.msra.mxu0 %v1659
    %2142 = vmatpush.bf16.msra.mxu0 %v1652
    %2143 = vmatpush.bf16.msra.mxu0 %v1645
    %2144 = vmatpush.bf16.msra.mxu0 %v1638
    %2145 = vmatpush.bf16.msra.mxu0 %v1631
    %2146 = vmatpush.bf16.msra.mxu0 %v1624
    %2147 = vmatpush.bf16.msra.mxu0 %v1617
    %2148 = vmatmul.bf16.gmra.mxu0 %v484
    %v2149 = vpop.f32.mrf.mxu0
    %v2150 = vadd.f32 %v2137, %v2149
    %v2151 = vpop.f32.mrf.mxu0
    %2152 = vdwg.mxu0
    %2153 = vmatpush.bf16.msra.mxu0 %v1499
    %2154 = vmatpush.bf16.msra.mxu0 %v1492
    %2155 = vmatpush.bf16.msra.mxu0 %v1485
    %2156 = vmatpush.bf16.msra.mxu0 %v1478
    %2157 = vmatpush.bf16.msra.mxu0 %v1471
    %2158 = vmatpush.bf16.msra.mxu0 %v1464
    %2159 = vmatpush.bf16.msra.mxu0 %v1457
    %2160 = vmatpush.bf16.msra.mxu0 %v1450
    %2161 = vmatmul.bf16.gmra.mxu0 %v481
    %v2162 = vpop.f32.mrf.mxu0
    %v2163 = vadd.f32 0.0, %v2162
    %v2164 = vpop.f32.mrf.mxu0
    %2165 = vdwg.mxu0
    %2166 = vmatpush.bf16.msra.mxu0 %v1555
    %2167 = vmatpush.bf16.msra.mxu0 %v1548
    %2168 = vmatpush.bf16.msra.mxu0 %v1541
    %2169 = vmatpush.bf16.msra.mxu0 %v1534
    %2170 = vmatpush.bf16.msra.mxu0 %v1527
    %2171 = vmatpush.bf16.msra.mxu0 %v1520
    %2172 = vmatpush.bf16.msra.mxu0 %v1513
    %2173 = vmatpush.bf16.msra.mxu0 %v1506
    %2174 = vmatmul.bf16.gmra.mxu0 %v482
    %v2175 = vpop.f32.mrf.mxu0
    %v2176 = vadd.f32 %v2163, %v2175
    %v2177 = vpop.f32.mrf.mxu0
    %2178 = vdwg.mxu0
    %2179 = vmatpush.bf16.msra.mxu0 %v1611
    %2180 = vmatpush.bf16.msra.mxu0 %v1604
    %2181 = vmatpush.bf16.msra.mxu0 %v1597
    %2182 = vmatpush.bf16.msra.mxu0 %v1590
    %2183 = vmatpush.bf16.msra.mxu0 %v1583
    %2184 = vmatpush.bf16.msra.mxu0 %v1576
    %2185 = vmatpush.bf16.msra.mxu0 %v1569
    %2186 = vmatpush.bf16.msra.mxu0 %v1562
    %2187 = vmatmul.bf16.gmra.mxu0 %v483
    %v2188 = vpop.f32.mrf.mxu0
    %v2189 = vadd.f32 %v2176, %v2188
    %v2190 = vpop.f32.mrf.mxu0
    %2191 = vdwg.mxu0
    %2192 = vmatpush.bf16.msra.mxu0 %v1667
    %2193 = vmatpush.bf16.msra.mxu0 %v1660
    %2194 = vmatpush.bf16.msra.mxu0 %v1653
    %2195 = vmatpush.bf16.msra.mxu0 %v1646
    %2196 = vmatpush.bf16.msra.mxu0 %v1639
    %2197 = vmatpush.bf16.msra.mxu0 %v1632
    %2198 = vmatpush.bf16.msra.mxu0 %v1625
    %2199 = vmatpush.bf16.msra.mxu0 %v1618
    %2200 = vmatmul.bf16.gmra.mxu0 %v484
    %v2201 = vpop.f32.mrf.mxu0
    %v2202 = vadd.f32 %v2189, %v2201
    %v2203 = vpop.f32.mrf.mxu0
    %2204 = vdwg.mxu0
    %2205 = vmatpush.bf16.msra.mxu0 %v1500
    %2206 = vmatpush.bf16.msra.mxu0 %v1493
    %2207 = vmatpush.bf16.msra.mxu0 %v1486
    %2208 = vmatpush.bf16.msra.mxu0 %v1479
    %2209 = vmatpush.bf16.msra.mxu0 %v1472
    %2210 = vmatpush.bf16.msra.mxu0 %v1465
    %2211 = vmatpush.bf16.msra.mxu0 %v1458
    %2212 = vmatpush.bf16.msra.mxu0 %v1451
    %2213 = vmatmul.bf16.gmra.mxu0 %v481
    %v2214 = vpop.f32.mrf.mxu0
    %v2215 = vadd.f32 0.0, %v2214
    %v2216 = vpop.f32.mrf.mxu0
    %2217 = vdwg.mxu0
    %2218 = vmatpush.bf16.msra.mxu0 %v1556
    %2219 = vmatpush.bf16.msra.mxu0 %v1549
    %2220 = vmatpush.bf16.msra.mxu0 %v1542
    %2221 = vmatpush.bf16.msra.mxu0 %v1535
    %2222 = vmatpush.bf16.msra.mxu0 %v1528
    %2223 = vmatpush.bf16.msra.mxu0 %v1521
    %2224 = vmatpush.bf16.msra.mxu0 %v1514
    %2225 = vmatpush.bf16.msra.mxu0 %v1507
    %2226 = vmatmul.bf16.gmra.mxu0 %v482
    %v2227 = vpop.f32.mrf.mxu0
    %v2228 = vadd.f32 %v2215, %v2227
    %v2229 = vpop.f32.mrf.mxu0
    %2230 = vdwg.mxu0
    %2231 = vmatpush.bf16.msra.mxu0 %v1612
    %2232 = vmatpush.bf16.msra.mxu0 %v1605
    %2233 = vmatpush.bf16.msra.mxu0 %v1598
    %2234 = vmatpush.bf16.msra.mxu0 %v1591
    %2235 = vmatpush.bf16.msra.mxu0 %v1584
    %2236 = vmatpush.bf16.msra.mxu0 %v1577
    %2237 = vmatpush.bf16.msra.mxu0 %v1570
    %2238 = vmatpush.bf16.msra.mxu0 %v1563
    %2239 = vmatmul.bf16.gmra.mxu0 %v483
    %v2240 = vpop.f32.mrf.mxu0
    %v2241 = vadd.f32 %v2228, %v2240
    %v2242 = vpop.f32.mrf.mxu0
    %2243 = vdwg.mxu0
    %2244 = vmatpush.bf16.msra.mxu0 %v1668
    %2245 = vmatpush.bf16.msra.mxu0 %v1661
    %2246 = vmatpush.bf16.msra.mxu0 %v1654
    %2247 = vmatpush.bf16.msra.mxu0 %v1647
    %2248 = vmatpush.bf16.msra.mxu0 %v1640
    %2249 = vmatpush.bf16.msra.mxu0 %v1633
    %2250 = vmatpush.bf16.msra.mxu0 %v1626
    %2251 = vmatpush.bf16.msra.mxu0 %v1619
    %2252 = vmatmul.bf16.gmra.mxu0 %v484
    %v2253 = vpop.f32.mrf.mxu0
    %v2254 = vadd.f32 %v2241, %v2253
    %v2255 = vpop.f32.mrf.mxu0
    %2256 = vdwg.mxu0
    %v2258 = vrot.slane %v1994, 6
    %v2261 = vrot.slane %v2046, 4
    %v2264 = vrot.slane %v2098, 2
    %v2267 = vrot.slane %v2202, 6
    %v2270 = vrot.slane %v2254, 4
    %vm2272 = vcmask 1041408
    %v2273 = vsel %vm2272, %v1942, %v2258
    %vm2274 = vcmask 1043456
    %v2275 = vsel %vm2274, %v2273, %v2261
    %vm2276 = vcmask 1045504
    %v2277 = vsel %vm2276, %v2275, %v2264
    %v2278 = vsel %vm2272, %v2150, %v2267
    %v2279 = vsel %vm2274, %v2278, %v2270
    %v2280 = vld [vmem:[#allocation12] sm:$0x1]
    %v2282 = vperm.slane %v2280, 0
    %v2284 = vadd.f32 %v2277, %v2282
    %v2285 = vadd.f32 %v2279, %v2282
    %vm2286 = vcmp.ge.f32.partialorder %v2284, 0.0
    %vm2287 = vcmp.ge.f32.partialorder %v2285, 0.0
    %v2288 = vmul.f32 %v2284, 0.05
    %v2289 = vmul.f32 %v2285, 0.05
    %v2290 = vsel %vm2286, %v2284, %v2288
    %v2291 = vsel %vm2287, %v2285, %v2289
    %v2292 = vpack.c.bf16 %v2291, %v2290
    %v2293 = vld [vmem:[#allocation13] sm:$0xff]
    %v2294 = vld [vmem:[#allocation13 + $0x8] sm:$0xff]
    %v2295 = vld [vmem:[#allocation13 + $0x10] sm:$0xff]
    %v2296 = vld [vmem:[#allocation13 + $0x18] sm:$0xff]
    %v2297 = vld [vmem:[#allocation13 + $0x20] sm:$0xff]
    %v2298 = vld [vmem:[#allocation13 + $0x28] sm:$0xff]
    %v2299 = vld [vmem:[#allocation13 + $0x30] sm:$0xff]
    %v2300 = vld [vmem:[#allocation13 + $0x38] sm:$0xff]
    %v2301 = vld [vmem:[#allocation13 + $0x40] sm:$0xff]
    %v2302 = vld [vmem:[#allocation13 + $0x48] sm:$0xff]
    %v2303 = vld [vmem:[#allocation13 + $0x50] sm:$0xff]
    %v2304 = vld [vmem:[#allocation13 + $0x58] sm:$0xff]
    %v2305 = vld [vmem:[#allocation13 + $0x60] sm:$0xff]
    %v2306 = vld [vmem:[#allocation13 + $0x68] sm:$0xff]
    %v2307 = vld [vmem:[#allocation13 + $0x70] sm:$0xff]
    %v2308 = vld [vmem:[#allocation13 + $0x78] sm:$0xff]
    %v2309 = vld [vmem:[#allocation13 + $0x80] sm:$0xff]
    %v2310 = vld [vmem:[#allocation13 + $0x88] sm:$0xff]
    %v2311 = vld [vmem:[#allocation13 + $0x90] sm:$0xff]
    %v2312 = vld [vmem:[#allocation13 + $0x98] sm:$0xff]
    %v2313 = vld [vmem:[#allocation13 + $0xa0] sm:$0xff]
    %v2314 = vld [vmem:[#allocation13 + $0xa8] sm:$0xff]
    %v2315 = vld [vmem:[#allocation13 + $0xb0] sm:$0xff]
    %v2316 = vld [vmem:[#allocation13 + $0xb8] sm:$0xff]
    %v2317 = vld [vmem:[#allocation13 + $0xc0] sm:$0xff]
    %v2318 = vld [vmem:[#allocation13 + $0xc8] sm:$0xff]
    %v2319 = vld [vmem:[#allocation13 + $0xd0] sm:$0xff]
    %v2320 = vld [vmem:[#allocation13 + $0xd8] sm:$0xff]
    %v2321 = vld [vmem:[#allocation13 + $0xe0] sm:$0xff]
    %v2322 = vld [vmem:[#allocation13 + $0xe8] sm:$0xff]
    %v2323 = vld [vmem:[#allocation13 + $0xf0] sm:$0xff]
    %v2324 = vld [vmem:[#allocation13 + $0xf8] sm:$0xff]
    %v2325 = vld [vmem:[%s8] sm:$0xf]
    %v2327 = vperm.slane %v2325, 0
    %v2328 = vperm.slane %v2325, 1
    %v2329 = vperm.slane %v2325, 2
    %v2330 = vperm.slane %v2325, 3
    %v2367 = vunpack.c.l.b16 %v2293
    %v2368 = vunpack.c.h.b16 %v2293
    %v2369 = vunpack.c.l.b16 %v2294
    %v2370 = vunpack.c.h.b16 %v2294
    %v2371 = vunpack.c.l.b16 %v2295
    %v2372 = vunpack.c.h.b16 %v2295
    %v2373 = vunpack.c.l.b16 %v2296
    %v2374 = vunpack.c.h.b16 %v2296
    %v2375 = vunpack.c.l.b16 %v2297
    %v2376 = vunpack.c.h.b16 %v2297
    %v2377 = vunpack.c.l.b16 %v2298
    %v2378 = vunpack.c.h.b16 %v2298
    %v2379 = vunpack.c.l.b16 %v2299
    %v2380 = vunpack.c.h.b16 %v2299
    %v2381 = vunpack.c.l.b16 %v2300
    %v2382 = vunpack.c.h.b16 %v2300
    %v2383 = vunpack.c.l.b16 %v2301
    %v2384 = vunpack.c.h.b16 %v2301
    %v2385 = vunpack.c.l.b16 %v2302
    %v2386 = vunpack.c.h.b16 %v2302
    %v2387 = vunpack.c.l.b16 %v2303
    %v2388 = vunpack.c.h.b16 %v2303
    %v2389 = vunpack.c.l.b16 %v2304
    %v2390 = vunpack.c.h.b16 %v2304
    %v2391 = vunpack.c.l.b16 %v2305
    %v2392 = vunpack.c.h.b16 %v2305
    %v2393 = vunpack.c.l.b16 %v2306
    %v2394 = vunpack.c.h.b16 %v2306
    %v2395 = vunpack.c.l.b16 %v2307
    %v2396 = vunpack.c.h.b16 %v2307
    %v2397 = vunpack.c.l.b16 %v2308
    %v2398 = vunpack.c.h.b16 %v2308
    %v2399 = vunpack.c.l.b16 %v2309
    %v2400 = vunpack.c.h.b16 %v2309
    %v2401 = vunpack.c.l.b16 %v2310
    %v2402 = vunpack.c.h.b16 %v2310
    %v2403 = vunpack.c.l.b16 %v2311
    %v2404 = vunpack.c.h.b16 %v2311
    %v2405 = vunpack.c.l.b16 %v2312
    %v2406 = vunpack.c.h.b16 %v2312
    %v2407 = vunpack.c.l.b16 %v2313
    %v2408 = vunpack.c.h.b16 %v2313
    %v2409 = vunpack.c.l.b16 %v2314
    %v2410 = vunpack.c.h.b16 %v2314
    %v2411 = vunpack.c.l.b16 %v2315
    %v2412 = vunpack.c.h.b16 %v2315
    %v2413 = vunpack.c.l.b16 %v2316
    %v2414 = vunpack.c.h.b16 %v2316
    %v2415 = vunpack.c.l.b16 %v2317
    %v2416 = vunpack.c.h.b16 %v2317
    %v2417 = vunpack.c.l.b16 %v2318
    %v2418 = vunpack.c.h.b16 %v2318
    %v2419 = vunpack.c.l.b16 %v2319
    %v2420 = vunpack.c.h.b16 %v2319
    %v2421 = vunpack.c.l.b16 %v2320
    %v2422 = vunpack.c.h.b16 %v2320
    %v2423 = vunpack.c.l.b16 %v2321
    %v2424 = vunpack.c.h.b16 %v2321
    %v2425 = vunpack.c.l.b16 %v2322
    %v2426 = vunpack.c.h.b16 %v2322
    %v2427 = vunpack.c.l.b16 %v2323
    %v2428 = vunpack.c.h.b16 %v2323
    %v2429 = vunpack.c.l.b16 %v2324
    %v2430 = vunpack.c.h.b16 %v2324
    %v2431 = vpack.c.b16 %v2371, %v2367
    %v2432 = vpack.c.b16 %v2372, %v2368
    %v2433 = vpack.c.b16 %v2373, %v2369
    %v2434 = vpack.c.b16 %v2374, %v2370
    %v2435 = vpack.c.b16 %v2379, %v2375
    %v2436 = vpack.c.b16 %v2380, %v2376
    %v2437 = vpack.c.b16 %v2381, %v2377
    %v2438 = vpack.c.b16 %v2382, %v2378
    %v2439 = vpack.c.b16 %v2387, %v2383
    %v2440 = vpack.c.b16 %v2388, %v2384
    %v2441 = vpack.c.b16 %v2389, %v2385
    %v2442 = vpack.c.b16 %v2390, %v2386
    %v2443 = vpack.c.b16 %v2395, %v2391
    %v2444 = vpack.c.b16 %v2396, %v2392
    %v2445 = vpack.c.b16 %v2397, %v2393
    %v2446 = vpack.c.b16 %v2398, %v2394
    %v2447 = vpack.c.b16 %v2403, %v2399
    %v2448 = vpack.c.b16 %v2404, %v2400
    %v2449 = vpack.c.b16 %v2405, %v2401
    %v2450 = vpack.c.b16 %v2406, %v2402
    %v2451 = vpack.c.b16 %v2411, %v2407
    %v2452 = vpack.c.b16 %v2412, %v2408
    %v2453 = vpack.c.b16 %v2413, %v2409
    %v2454 = vpack.c.b16 %v2414, %v2410
    %v2455 = vpack.c.b16 %v2419, %v2415
    %v2456 = vpack.c.b16 %v2420, %v2416
    %v2457 = vpack.c.b16 %v2421, %v2417
    %v2458 = vpack.c.b16 %v2422, %v2418
    %v2459 = vpack.c.b16 %v2427, %v2423
    %v2460 = vpack.c.b16 %v2428, %v2424
    %v2461 = vpack.c.b16 %v2429, %v2425
    %v2462 = vpack.c.b16 %v2430, %v2426
    %2495 = vmatpush.bf16.msra.mxu0 %v2459
    %2496 = vmatpush.bf16.msra.mxu0 %v2455
    %2497 = vmatpush.bf16.msra.mxu0 %v2451
    %2498 = vmatpush.bf16.msra.mxu0 %v2447
    %2499 = vmatpush.bf16.msra.mxu0 %v2443
    %2500 = vmatpush.bf16.msra.mxu0 %v2439
    %2501 = vmatpush.bf16.msra.mxu0 %v2435
    %2502 = vmatpush.bf16.msra.mxu0 %v2431
    %2503 = vmatmul.bf16.gmra.mxu0 %v2292
    %v2504 = vpop.f32.mrf.mxu0
    %v2505 = vadd.f32 %v2327, %v2504
    %v2506 = vpop.f32.mrf.mxu0
    %v2507 = vadd.f32 %v2327, %v2506
    %2508 = vdwg.mxu0
    %2509 = vmatpush.bf16.msra.mxu0 %v2460
    %2510 = vmatpush.bf16.msra.mxu0 %v2456
    %2511 = vmatpush.bf16.msra.mxu0 %v2452
    %2512 = vmatpush.bf16.msra.mxu0 %v2448
    %2513 = vmatpush.bf16.msra.mxu0 %v2444
    %2514 = vmatpush.bf16.msra.mxu0 %v2440
    %2515 = vmatpush.bf16.msra.mxu0 %v2436
    %2516 = vmatpush.bf16.msra.mxu0 %v2432
    %2517 = vmatmul.bf16.gmra.mxu0 %v2292
    %v2518 = vpop.f32.mrf.mxu0
    %v2519 = vadd.f32 %v2328, %v2518
    %v2520 = vpop.f32.mrf.mxu0
    %v2521 = vadd.f32 %v2328, %v2520
    %2522 = vdwg.mxu0
    %2523 = vmatpush.bf16.msra.mxu0 %v2461
    %2524 = vmatpush.bf16.msra.mxu0 %v2457
    %2525 = vmatpush.bf16.msra.mxu0 %v2453
    %2526 = vmatpush.bf16.msra.mxu0 %v2449
    %2527 = vmatpush.bf16.msra.mxu0 %v2445
    %2528 = vmatpush.bf16.msra.mxu0 %v2441
    %2529 = vmatpush.bf16.msra.mxu0 %v2437
    %2530 = vmatpush.bf16.msra.mxu0 %v2433
    %2531 = vmatmul.bf16.gmra.mxu0 %v2292
    %v2532 = vpop.f32.mrf.mxu0
    %v2533 = vadd.f32 %v2329, %v2532
    %v2534 = vpop.f32.mrf.mxu0
    %v2535 = vadd.f32 %v2329, %v2534
    %2536 = vdwg.mxu0
    %2537 = vmatpush.bf16.msra.mxu0 %v2462
    %2538 = vmatpush.bf16.msra.mxu0 %v2458
    %2539 = vmatpush.bf16.msra.mxu0 %v2454
    %2540 = vmatpush.bf16.msra.mxu0 %v2450
    %2541 = vmatpush.bf16.msra.mxu0 %v2446
    %2542 = vmatpush.bf16.msra.mxu0 %v2442
    %2543 = vmatpush.bf16.msra.mxu0 %v2438
    %2544 = vmatpush.bf16.msra.mxu0 %v2434
    %2545 = vmatmul.bf16.gmra.mxu0 %v2292
    %v2546 = vpop.f32.mrf.mxu0
    %v2547 = vadd.f32 %v2330, %v2546
    %v2548 = vpop.f32.mrf.mxu0
    %v2549 = vadd.f32 %v2330, %v2548
    %2550 = vdwg.mxu0
    %v2551 = vld [vmem:[#allocation15] sm:$0xff]
    %v2552 = vld [vmem:[#allocation15 + $0x8] sm:$0xff]
    %v2553 = vld [vmem:[#allocation15 + $0x10] sm:$0xff]
    %v2554 = vld [vmem:[#allocation15 + $0x18] sm:$0xff]
    %v2555 = vld [vmem:[#allocation15 + $0x20] sm:$0xff]
    %v2556 = vld [vmem:[#allocation15 + $0x28] sm:$0xff]
    %v2557 = vld [vmem:[#allocation15 + $0x30] sm:$0xff]
    %v2558 = vld [vmem:[#allocation15 + $0x38] sm:$0xff]
    %v2559 = vld [vmem:[#allocation15 + $0x40] sm:$0xff]
    %v2560 = vld [vmem:[#allocation15 + $0x48] sm:$0xff]
    %v2561 = vld [vmem:[#allocation15 + $0x50] sm:$0xff]
    %v2562 = vld [vmem:[#allocation15 + $0x58] sm:$0xff]
    %v2563 = vld [vmem:[#allocation15 + $0x60] sm:$0xff]
    %v2564 = vld [vmem:[#allocation15 + $0x68] sm:$0xff]
    %v2565 = vld [vmem:[#allocation15 + $0x70] sm:$0xff]
    %v2566 = vld [vmem:[#allocation15 + $0x78] sm:$0xff]
    %v2567 = vld [vmem:[#allocation15 + $0x80] sm:$0xff]
    %v2568 = vld [vmem:[#allocation15 + $0x88] sm:$0xff]
    %v2569 = vld [vmem:[#allocation15 + $0x90] sm:$0xff]
    %v2570 = vld [vmem:[#allocation15 + $0x98] sm:$0xff]
    %v2571 = vld [vmem:[#allocation15 + $0xa0] sm:$0xff]
    %v2572 = vld [vmem:[#allocation15 + $0xa8] sm:$0xff]
    %v2573 = vld [vmem:[#allocation15 + $0xb0] sm:$0xff]
    %v2574 = vld [vmem:[#allocation15 + $0xb8] sm:$0xff]
    %v2575 = vld [vmem:[#allocation15 + $0xc0] sm:$0xff]
    %v2576 = vld [vmem:[#allocation15 + $0xc8] sm:$0xff]
    %v2577 = vld [vmem:[#allocation15 + $0xd0] sm:$0xff]
    %v2578 = vld [vmem:[#allocation15 + $0xd8] sm:$0xff]
    %v2579 = vld [vmem:[#allocation15 + $0xe0] sm:$0xff]
    %v2580 = vld [vmem:[#allocation15 + $0xe8] sm:$0xff]
    %v2581 = vld [vmem:[#allocation15 + $0xf0] sm:$0xff]
    %v2582 = vld [vmem:[#allocation15 + $0xf8] sm:$0xff]
    %v2615 = vunpack.c.l.b16 %v2551
    %v2616 = vunpack.c.h.b16 %v2551
    %v2617 = vunpack.c.l.b16 %v2552
    %v2618 = vunpack.c.h.b16 %v2552
    %v2619 = vunpack.c.l.b16 %v2553
    %v2620 = vunpack.c.h.b16 %v2553
    %v2621 = vunpack.c.l.b16 %v2554
    %v2622 = vunpack.c.h.b16 %v2554
    %v2623 = vunpack.c.l.b16 %v2555
    %v2624 = vunpack.c.h.b16 %v2555
    %v2625 = vunpack.c.l.b16 %v2556
    %v2626 = vunpack.c.h.b16 %v2556
    %v2627 = vunpack.c.l.b16 %v2557
    %v2628 = vunpack.c.h.b16 %v2557
    %v2629 = vunpack.c.l.b16 %v2558
    %v2630 = vunpack.c.h.b16 %v2558
    %v2631 = vunpack.c.l.b16 %v2559
    %v2632 = vunpack.c.h.b16 %v2559
    %v2633 = vunpack.c.l.b16 %v2560
    %v2634 = vunpack.c.h.b16 %v2560
    %v2635 = vunpack.c.l.b16 %v2561
    %v2636 = vunpack.c.h.b16 %v2561
    %v2637 = vunpack.c.l.b16 %v2562
    %v2638 = vunpack.c.h.b16 %v2562
    %v2639 = vunpack.c.l.b16 %v2563
    %v2640 = vunpack.c.h.b16 %v2563
    %v2641 = vunpack.c.l.b16 %v2564
    %v2642 = vunpack.c.h.b16 %v2564
    %v2643 = vunpack.c.l.b16 %v2565
    %v2644 = vunpack.c.h.b16 %v2565
    %v2645 = vunpack.c.l.b16 %v2566
    %v2646 = vunpack.c.h.b16 %v2566
    %v2647 = vunpack.c.l.b16 %v2567
    %v2648 = vunpack.c.h.b16 %v2567
    %v2649 = vunpack.c.l.b16 %v2568
    %v2650 = vunpack.c.h.b16 %v2568
    %v2651 = vunpack.c.l.b16 %v2569
    %v2652 = vunpack.c.h.b16 %v2569
    %v2653 = vunpack.c.l.b16 %v2570
    %v2654 = vunpack.c.h.b16 %v2570
    %v2655 = vunpack.c.l.b16 %v2571
    %v2656 = vunpack.c.h.b16 %v2571
    %v2657 = vunpack.c.l.b16 %v2572
    %v2658 = vunpack.c.h.b16 %v2572
    %v2659 = vunpack.c.l.b16 %v2573
    %v2660 = vunpack.c.h.b16 %v2573
    %v2661 = vunpack.c.l.b16 %v2574
    %v2662 = vunpack.c.h.b16 %v2574
    %v2663 = vunpack.c.l.b16 %v2575
    %v2664 = vunpack.c.h.b16 %v2575
    %v2665 = vunpack.c.l.b16 %v2576
    %v2666 = vunpack.c.h.b16 %v2576
    %v2667 = vunpack.c.l.b16 %v2577
    %v2668 = vunpack.c.h.b16 %v2577
    %v2669 = vunpack.c.l.b16 %v2578
    %v2670 = vunpack.c.h.b16 %v2578
    %v2671 = vunpack.c.l.b16 %v2579
    %v2672 = vunpack.c.h.b16 %v2579
    %v2673 = vunpack.c.l.b16 %v2580
    %v2674 = vunpack.c.h.b16 %v2580
    %v2675 = vunpack.c.l.b16 %v2581
    %v2676 = vunpack.c.h.b16 %v2581
    %v2677 = vunpack.c.l.b16 %v2582
    %v2678 = vunpack.c.h.b16 %v2582
    %v2679 = vpack.c.b16 %v2619, %v2615
    %v2680 = vpack.c.b16 %v2620, %v2616
    %v2681 = vpack.c.b16 %v2621, %v2617
    %v2682 = vpack.c.b16 %v2622, %v2618
    %v2683 = vpack.c.b16 %v2627, %v2623
    %v2684 = vpack.c.b16 %v2628, %v2624
    %v2685 = vpack.c.b16 %v2629, %v2625
    %v2686 = vpack.c.b16 %v2630, %v2626
    %v2687 = vpack.c.b16 %v2635, %v2631
    %v2688 = vpack.c.b16 %v2636, %v2632
    %v2689 = vpack.c.b16 %v2637, %v2633
    %v2690 = vpack.c.b16 %v2638, %v2634
    %v2691 = vpack.c.b16 %v2643, %v2639
    %v2692 = vpack.c.b16 %v2644, %v2640
    %v2693 = vpack.c.b16 %v2645, %v2641
    %v2694 = vpack.c.b16 %v2646, %v2642
    %v2695 = vpack.c.b16 %v2651, %v2647
    %v2696 = vpack.c.b16 %v2652, %v2648
    %v2697 = vpack.c.b16 %v2653, %v2649
    %v2698 = vpack.c.b16 %v2654, %v2650
    %v2699 = vpack.c.b16 %v2659, %v2655
    %v2700 = vpack.c.b16 %v2660, %v2656
    %v2701 = vpack.c.b16 %v2661, %v2657
    %v2702 = vpack.c.b16 %v2662, %v2658
    %v2703 = vpack.c.b16 %v2667, %v2663
    %v2704 = vpack.c.b16 %v2668, %v2664
    %v2705 = vpack.c.b16 %v2669, %v2665
    %v2706 = vpack.c.b16 %v2670, %v2666
    %v2707 = vpack.c.b16 %v2675, %v2671
    %v2708 = vpack.c.b16 %v2676, %v2672
    %v2709 = vpack.c.b16 %v2677, %v2673
    %v2710 = vpack.c.b16 %v2678, %v2674
    %2743 = vmatpush.bf16.msra.mxu0 %v2707
    %2744 = vmatpush.bf16.msra.mxu0 %v2703
    %2745 = vmatpush.bf16.msra.mxu0 %v2699
    %2746 = vmatpush.bf16.msra.mxu0 %v2695
    %2747 = vmatpush.bf16.msra.mxu0 %v2691
    %2748 = vmatpush.bf16.msra.mxu0 %v2687
    %2749 = vmatpush.bf16.msra.mxu0 %v2683
    %2750 = vmatpush.bf16.msra.mxu0 %v2679
    %2751 = vmatmul.bf16.gmra.mxu0 0
    %v2752 = vpop.f32.mrf.mxu0
    %v2753 = vadd.f32 0.0, %v2752
    %v2754 = vpop.f32.mrf.mxu0
    %2755 = vdwg.mxu0
    %2756 = vmatpush.bf16.msra.mxu0 %v2708
    %2757 = vmatpush.bf16.msra.mxu0 %v2704
    %2758 = vmatpush.bf16.msra.mxu0 %v2700
    %2759 = vmatpush.bf16.msra.mxu0 %v2696
    %2760 = vmatpush.bf16.msra.mxu0 %v2692
    %2761 = vmatpush.bf16.msra.mxu0 %v2688
    %2762 = vmatpush.bf16.msra.mxu0 %v2684
    %2763 = vmatpush.bf16.msra.mxu0 %v2680
    %2764 = vmatmul.bf16.gmra.mxu0 0
    %v2765 = vpop.f32.mrf.mxu0
    %v2766 = vadd.f32 0.0, %v2765
    %v2767 = vpop.f32.mrf.mxu0
    %2768 = vdwg.mxu0
    %2769 = vmatpush.bf16.msra.mxu0 %v2709
    %2770 = vmatpush.bf16.msra.mxu0 %v2705
    %2771 = vmatpush.bf16.msra.mxu0 %v2701
    %2772 = vmatpush.bf16.msra.mxu0 %v2697
    %2773 = vmatpush.bf16.msra.mxu0 %v2693
    %2774 = vmatpush.bf16.msra.mxu0 %v2689
    %2775 = vmatpush.bf16.msra.mxu0 %v2685
    %2776 = vmatpush.bf16.msra.mxu0 %v2681
    %2777 = vmatmul.bf16.gmra.mxu0 0
    %v2778 = vpop.f32.mrf.mxu0
    %v2779 = vadd.f32 0.0, %v2778
    %v2780 = vpop.f32.mrf.mxu0
    %2781 = vdwg.mxu0
    %2782 = vmatpush.bf16.msra.mxu0 %v2710
    %2783 = vmatpush.bf16.msra.mxu0 %v2706
    %2784 = vmatpush.bf16.msra.mxu0 %v2702
    %2785 = vmatpush.bf16.msra.mxu0 %v2698
    %2786 = vmatpush.bf16.msra.mxu0 %v2694
    %2787 = vmatpush.bf16.msra.mxu0 %v2690
    %2788 = vmatpush.bf16.msra.mxu0 %v2686
    %2789 = vmatpush.bf16.msra.mxu0 %v2682
    %2790 = vmatmul.bf16.gmra.mxu0 0
    %v2791 = vpop.f32.mrf.mxu0
    %v2792 = vadd.f32 0.0, %v2791
    %v2793 = vpop.f32.mrf.mxu0
    %2794 = vdwg.mxu0
    %v2795 = vadd.f32 %v2505, %v2753
    %v2796 = vadd.f32 %v2519, %v2766
    %v2797 = vadd.f32 %v2533, %v2779
    %v2798 = vadd.f32 %v2547, %v2792
    %v2799 = vxor.u32 %v2795, 2147483648
    %v2800 = vmul.f32 %v2799, 1.442695
    %v2801 = vpow.pop %v2800
    %v2802 = vadd.f32 %v2801, 1.0
    %v2803 = vrcp.pop %v2802
    %v2804 = vmul.f32 %v2802, %v2803
    %v2805 = vsub.f32 1.0, %v2804
    %v2806 = vmul.f32 %v2803, %v2805
    %v2807 = vadd.f32 %v2803, %v2806
    %vm2808 = vweird.f32 %v2802
    %vm2809 = vweird.f32 %v2803
    %vm2810 = vmor %vm2808, %vm2809
    %v2811 = vsel %vm2810, %v2803, %v2807
    %v2812 = vand.u32 2147483647, %v2802
    %vm2813 = vcmp.eq.f32.partialorder %v2812, 8.507059e+37
    %v2814 = vand.u32 %v2802, 2147483648
    %v2815 = vor.u32 1.1754944e-38, %v2814
    %v2816 = vsel %vm2813, %v2815, %v2811
    %v2817 = vmul.f32 1.0, %v2816
    %v2818 = vxor.u32 %v2796, 2147483648
    %v2819 = vmul.f32 %v2818, 1.442695
    %v2820 = vpow.pop %v2819
    %v2821 = vadd.f32 %v2820, 1.0
    %v2822 = vrcp.pop %v2821
    %v2823 = vmul.f32 %v2821, %v2822
    %v2824 = vsub.f32 1.0, %v2823
    %v2825 = vmul.f32 %v2822, %v2824
    %v2826 = vadd.f32 %v2822, %v2825
    %vm2827 = vweird.f32 %v2821
    %vm2828 = vweird.f32 %v2822
    %vm2829 = vmor %vm2827, %vm2828
    %v2830 = vsel %vm2829, %v2822, %v2826
    %v2831 = vand.u32 2147483647, %v2821
    %vm2832 = vcmp.eq.f32.partialorder %v2831, 8.507059e+37
    %v2833 = vand.u32 %v2821, 2147483648
    %v2834 = vor.u32 1.1754944e-38, %v2833
    %v2835 = vsel %vm2832, %v2834, %v2830
    %v2836 = vmul.f32 1.0, %v2835
    %v2837 = vtanh.pop %v2797
    %v2838 = vxor.u32 %v2798, 2147483648
    %v2839 = vmul.f32 %v2838, 1.442695
    %v2840 = vpow.pop %v2839
    %v2841 = vadd.f32 %v2840, 1.0
    %v2842 = vrcp.pop %v2841
    %v2843 = vmul.f32 %v2841, %v2842
    %v2844 = vsub.f32 1.0, %v2843
    %v2845 = vmul.f32 %v2842, %v2844
    %v2846 = vadd.f32 %v2842, %v2845
    %vm2847 = vweird.f32 %v2841
    %vm2848 = vweird.f32 %v2842
    %vm2849 = vmor %vm2847, %vm2848
    %v2850 = vsel %vm2849, %v2842, %v2846
    %v2851 = vand.u32 2147483647, %v2841
    %vm2852 = vcmp.eq.f32.partialorder %v2851, 8.507059e+37
    %v2853 = vand.u32 %v2841, 2147483648
    %v2854 = vor.u32 1.1754944e-38, %v2853
    %v2855 = vsel %vm2852, %v2854, %v2850
    %v2856 = vmul.f32 1.0, %v2855
    %v2857 = vmul.f32 %v2836, 0.0
    %v2858 = vmul.f32 %v2817, %v2837
    %v2859 = vadd.f32 %v2857, %v2858
    %v2860 = vtanh.pop %v2859
    %v2861 = vmul.f32 %v2856, %v2860
    %v2862 = vpack.c.bf16 %v2861, %v2861
    %v2863 = vpack.c.bf16 0.0, 0.0
    %v2864 = vld [vmem:[#allocation16] sm:$0xff]
    %v2865 = vld [vmem:[#allocation16 + $0x8] sm:$0xff]
    %v2866 = vld [vmem:[#allocation16 + $0x10] sm:$0xff]
    %v2867 = vld [vmem:[#allocation16 + $0x18] sm:$0xff]
    %v2868 = vld [vmem:[#allocation16 + $0x20] sm:$0xff]
    %v2869 = vld [vmem:[#allocation16 + $0x28] sm:$0xff]
    %v2870 = vld [vmem:[#allocation16 + $0x30] sm:$0xff]
    %v2871 = vld [vmem:[#allocation16 + $0x38] sm:$0xff]
    %v2872 = vld [vmem:[#allocation16 + $0x40] sm:$0xff]
    %v2873 = vld [vmem:[#allocation16 + $0x48] sm:$0xff]
    %v2874 = vld [vmem:[#allocation16 + $0x50] sm:$0xff]
    %v2875 = vld [vmem:[#allocation16 + $0x58] sm:$0xff]
    %v2876 = vld [vmem:[#allocation16 + $0x60] sm:$0xff]
    %v2877 = vld [vmem:[#allocation16 + $0x68] sm:$0xff]
    %v2878 = vld [vmem:[#allocation16 + $0x70] sm:$0xff]
    %v2879 = vld [vmem:[#allocation16 + $0x78] sm:$0xff]
    %v2880 = vld [vmem:[#allocation16 + $0x80] sm:$0xff]
    %v2881 = vld [vmem:[#allocation16 + $0x88] sm:$0xff]
    %v2882 = vld [vmem:[#allocation16 + $0x90] sm:$0xff]
    %v2883 = vld [vmem:[#allocation16 + $0x98] sm:$0xff]
    %v2884 = vld [vmem:[#allocation16 + $0xa0] sm:$0xff]
    %v2885 = vld [vmem:[#allocation16 + $0xa8] sm:$0xff]
    %v2886 = vld [vmem:[#allocation16 + $0xb0] sm:$0xff]
    %v2887 = vld [vmem:[#allocation16 + $0xb8] sm:$0xff]
    %v2888 = vld [vmem:[#allocation16 + $0xc0] sm:$0xff]
    %v2889 = vld [vmem:[#allocation16 + $0xc8] sm:$0xff]
    %v2890 = vld [vmem:[#allocation16 + $0xd0] sm:$0xff]
    %v2891 = vld [vmem:[#allocation16 + $0xd8] sm:$0xff]
    %v2892 = vld [vmem:[#allocation16 + $0xe0] sm:$0xff]
    %v2893 = vld [vmem:[#allocation16 + $0xe8] sm:$0xff]
    %v2894 = vld [vmem:[#allocation16 + $0xf0] sm:$0xff]
    %v2895 = vld [vmem:[#allocation16 + $0xf8] sm:$0xff]
    %v2896 = vld [vmem:[#allocation16 + $0x100] sm:$0xff]
    %v2897 = vld [vmem:[#allocation16 + $0x108] sm:$0xff]
    %v2898 = vld [vmem:[#allocation16 + $0x110] sm:$0xff]
    %v2899 = vld [vmem:[#allocation16 + $0x118] sm:$0xff]
    %v2900 = vld [vmem:[#allocation16 + $0x120] sm:$0xff]
    %v2901 = vld [vmem:[#allocation16 + $0x128] sm:$0xff]
    %v2902 = vld [vmem:[#allocation16 + $0x130] sm:$0xff]
    %v2903 = vld [vmem:[#allocation16 + $0x138] sm:$0xff]
    %v2904 = vld [vmem:[#allocation16 + $0x140] sm:$0xff]
    %v2905 = vld [vmem:[#allocation16 + $0x148] sm:$0xff]
    %v2906 = vld [vmem:[#allocation16 + $0x150] sm:$0xff]
    %v2907 = vld [vmem:[#allocation16 + $0x158] sm:$0xff]
    %v2908 = vld [vmem:[#allocation16 + $0x160] sm:$0xff]
    %v2909 = vld [vmem:[#allocation16 + $0x168] sm:$0xff]
    %v2910 = vld [vmem:[#allocation16 + $0x170] sm:$0xff]
    %v2911 = vld [vmem:[#allocation16 + $0x178] sm:$0xff]
    %v2912 = vld [vmem:[#allocation16 + $0x180] sm:$0xff]
    %v2913 = vld [vmem:[#allocation16 + $0x188] sm:$0xff]
    %v2914 = vld [vmem:[#allocation16 + $0x190] sm:$0xff]
    %v2915 = vld [vmem:[#allocation16 + $0x198] sm:$0xff]
    %v2916 = vld [vmem:[#allocation16 + $0x1a0] sm:$0xff]
    %v2917 = vld [vmem:[#allocation16 + $0x1a8] sm:$0xff]
    %v2918 = vld [vmem:[#allocation16 + $0x1b0] sm:$0xff]
    %v2919 = vld [vmem:[#allocation16 + $0x1b8] sm:$0xff]
    %v2920 = vld [vmem:[#allocation16 + $0x1c0] sm:$0xff]
    %v2921 = vld [vmem:[#allocation16 + $0x1c8] sm:$0xff]
    %v2922 = vld [vmem:[#allocation16 + $0x1d0] sm:$0xff]
    %v2923 = vld [vmem:[#allocation16 + $0x1d8] sm:$0xff]
    %v2924 = vld [vmem:[#allocation16 + $0x1e0] sm:$0xff]
    %v2925 = vld [vmem:[#allocation16 + $0x1e8] sm:$0xff]
    %v2926 = vld [vmem:[#allocation16 + $0x1f0] sm:$0xff]
    %v2927 = vld [vmem:[#allocation16 + $0x1f8] sm:$0xff]
    %v2928 = vld [vmem:[%s11] sm:$0xf]
    %v2930 = vperm.slane %v2928, 0
    %v2931 = vperm.slane %v2928, 1
    %v2932 = vperm.slane %v2928, 2
    %v2933 = vperm.slane %v2928, 3
    %v3002 = vunpack.c.l.b16 %v2864
    %v3003 = vunpack.c.h.b16 %v2864
    %v3004 = vunpack.c.l.b16 %v2865
    %v3005 = vunpack.c.h.b16 %v2865
    %v3006 = vunpack.c.l.b16 %v2866
    %v3007 = vunpack.c.h.b16 %v2866
    %v3008 = vunpack.c.l.b16 %v2867
    %v3009 = vunpack.c.h.b16 %v2867
    %v3010 = vunpack.c.l.b16 %v2868
    %v3011 = vunpack.c.h.b16 %v2868
    %v3012 = vunpack.c.l.b16 %v2869
    %v3013 = vunpack.c.h.b16 %v2869
    %v3014 = vunpack.c.l.b16 %v2870
    %v3015 = vunpack.c.h.b16 %v2870
    %v3016 = vunpack.c.l.b16 %v2871
    %v3017 = vunpack.c.h.b16 %v2871
    %v3018 = vunpack.c.l.b16 %v2872
    %v3019 = vunpack.c.h.b16 %v2872
    %v3020 = vunpack.c.l.b16 %v2873
    %v3021 = vunpack.c.h.b16 %v2873
    %v3022 = vunpack.c.l.b16 %v2874
    %v3023 = vunpack.c.h.b16 %v2874
    %v3024 = vunpack.c.l.b16 %v2875
    %v3025 = vunpack.c.h.b16 %v2875
    %v3026 = vunpack.c.l.b16 %v2876
    %v3027 = vunpack.c.h.b16 %v2876
    %v3028 = vunpack.c.l.b16 %v2877
    %v3029 = vunpack.c.h.b16 %v2877
    %v3030 = vunpack.c.l.b16 %v2878
    %v3031 = vunpack.c.h.b16 %v2878
    %v3032 = vunpack.c.l.b16 %v2879
    %v3033 = vunpack.c.h.b16 %v2879
    %v3034 = vunpack.c.l.b16 %v2880
    %v3035 = vunpack.c.h.b16 %v2880
    %v3036 = vunpack.c.l.b16 %v2881
    %v3037 = vunpack.c.h.b16 %v2881
    %v3038 = vunpack.c.l.b16 %v2882
    %v3039 = vunpack.c.h.b16 %v2882
    %v3040 = vunpack.c.l.b16 %v2883
    %v3041 = vunpack.c.h.b16 %v2883
    %v3042 = vunpack.c.l.b16 %v2884
    %v3043 = vunpack.c.h.b16 %v2884
    %v3044 = vunpack.c.l.b16 %v2885
    %v3045 = vunpack.c.h.b16 %v2885
    %v3046 = vunpack.c.l.b16 %v2886
    %v3047 = vunpack.c.h.b16 %v2886
    %v3048 = vunpack.c.l.b16 %v2887
    %v3049 = vunpack.c.h.b16 %v2887
    %v3050 = vunpack.c.l.b16 %v2888
    %v3051 = vunpack.c.h.b16 %v2888
    %v3052 = vunpack.c.l.b16 %v2889
    %v3053 = vunpack.c.h.b16 %v2889
    %v3054 = vunpack.c.l.b16 %v2890
    %v3055 = vunpack.c.h.b16 %v2890
    %v3056 = vunpack.c.l.b16 %v2891
    %v3057 = vunpack.c.h.b16 %v2891
    %v3058 = vunpack.c.l.b16 %v2892
    %v3059 = vunpack.c.h.b16 %v2892
    %v3060 = vunpack.c.l.b16 %v2893
    %v3061 = vunpack.c.h.b16 %v2893
    %v3062 = vunpack.c.l.b16 %v2894
    %v3063 = vunpack.c.h.b16 %v2894
    %v3064 = vunpack.c.l.b16 %v2895
    %v3065 = vunpack.c.h.b16 %v2895
    %v3066 = vunpack.c.l.b16 %v2896
    %v3067 = vunpack.c.h.b16 %v2896
    %v3068 = vunpack.c.l.b16 %v2897
    %v3069 = vunpack.c.h.b16 %v2897
    %v3070 = vunpack.c.l.b16 %v2898
    %v3071 = vunpack.c.h.b16 %v2898
    %v3072 = vunpack.c.l.b16 %v2899
    %v3073 = vunpack.c.h.b16 %v2899
    %v3074 = vunpack.c.l.b16 %v2900
    %v3075 = vunpack.c.h.b16 %v2900
    %v3076 = vunpack.c.l.b16 %v2901
    %v3077 = vunpack.c.h.b16 %v2901
    %v3078 = vunpack.c.l.b16 %v2902
    %v3079 = vunpack.c.h.b16 %v2902
    %v3080 = vunpack.c.l.b16 %v2903
    %v3081 = vunpack.c.h.b16 %v2903
    %v3082 = vunpack.c.l.b16 %v2904
    %v3083 = vunpack.c.h.b16 %v2904
    %v3084 = vunpack.c.l.b16 %v2905
    %v3085 = vunpack.c.h.b16 %v2905
    %v3086 = vunpack.c.l.b16 %v2906
    %v3087 = vunpack.c.h.b16 %v2906
    %v3088 = vunpack.c.l.b16 %v2907
    %v3089 = vunpack.c.h.b16 %v2907
    %v3090 = vunpack.c.l.b16 %v2908
    %v3091 = vunpack.c.h.b16 %v2908
    %v3092 = vunpack.c.l.b16 %v2909
    %v3093 = vunpack.c.h.b16 %v2909
    %v3094 = vunpack.c.l.b16 %v2910
    %v3095 = vunpack.c.h.b16 %v2910
    %v3096 = vunpack.c.l.b16 %v2911
    %v3097 = vunpack.c.h.b16 %v2911
    %v3098 = vunpack.c.l.b16 %v2912
    %v3099 = vunpack.c.h.b16 %v2912
    %v3100 = vunpack.c.l.b16 %v2913
    %v3101 = vunpack.c.h.b16 %v2913
    %v3102 = vunpack.c.l.b16 %v2914
    %v3103 = vunpack.c.h.b16 %v2914
    %v3104 = vunpack.c.l.b16 %v2915
    %v3105 = vunpack.c.h.b16 %v2915
    %v3106 = vunpack.c.l.b16 %v2916
    %v3107 = vunpack.c.h.b16 %v2916
    %v3108 = vunpack.c.l.b16 %v2917
    %v3109 = vunpack.c.h.b16 %v2917
    %v3110 = vunpack.c.l.b16 %v2918
    %v3111 = vunpack.c.h.b16 %v2918
    %v3112 = vunpack.c.l.b16 %v2919
    %v3113 = vunpack.c.h.b16 %v2919
    %v3114 = vunpack.c.l.b16 %v2920
    %v3115 = vunpack.c.h.b16 %v2920
    %v3116 = vunpack.c.l.b16 %v2921
    %v3117 = vunpack.c.h.b16 %v2921
    %v3118 = vunpack.c.l.b16 %v2922
    %v3119 = vunpack.c.h.b16 %v2922
    %v3120 = vunpack.c.l.b16 %v2923
    %v3121 = vunpack.c.h.b16 %v2923
    %v3122 = vunpack.c.l.b16 %v2924
    %v3123 = vunpack.c.h.b16 %v2924
    %v3124 = vunpack.c.l.b16 %v2925
    %v3125 = vunpack.c.h.b16 %v2925
    %v3126 = vunpack.c.l.b16 %v2926
    %v3127 = vunpack.c.h.b16 %v2926
    %v3128 = vunpack.c.l.b16 %v2927
    %v3129 = vunpack.c.h.b16 %v2927
    %v3130 = vpack.c.b16 %v3006, %v3002
    %v3131 = vpack.c.b16 %v3007, %v3003
    %v3132 = vpack.c.b16 %v3008, %v3004
    %v3133 = vpack.c.b16 %v3009, %v3005
    %v3134 = vpack.c.b16 %v3014, %v3010
    %v3135 = vpack.c.b16 %v3015, %v3011
    %v3136 = vpack.c.b16 %v3016, %v3012
    %v3137 = vpack.c.b16 %v3017, %v3013
    %v3138 = vpack.c.b16 %v3022, %v3018
    %v3139 = vpack.c.b16 %v3023, %v3019
    %v3140 = vpack.c.b16 %v3024, %v3020
    %v3141 = vpack.c.b16 %v3025, %v3021
    %v3142 = vpack.c.b16 %v3030, %v3026
    %v3143 = vpack.c.b16 %v3031, %v3027
    %v3144 = vpack.c.b16 %v3032, %v3028
    %v3145 = vpack.c.b16 %v3033, %v3029
    %v3146 = vpack.c.b16 %v3038, %v3034
    %v3147 = vpack.c.b16 %v3039, %v3035
    %v3148 = vpack.c.b16 %v3040, %v3036
    %v3149 = vpack.c.b16 %v3041, %v3037
    %v3150 = vpack.c.b16 %v3046, %v3042
    %v3151 = vpack.c.b16 %v3047, %v3043
    %v3152 = vpack.c.b16 %v3048, %v3044
    %v3153 = vpack.c.b16 %v3049, %v3045
    %v3154 = vpack.c.b16 %v3054, %v3050
    %v3155 = vpack.c.b16 %v3055, %v3051
    %v3156 = vpack.c.b16 %v3056, %v3052
    %v3157 = vpack.c.b16 %v3057, %v3053
    %v3158 = vpack.c.b16 %v3062, %v3058
    %v3159 = vpack.c.b16 %v3063, %v3059
    %v3160 = vpack.c.b16 %v3064, %v3060
    %v3161 = vpack.c.b16 %v3065, %v3061
    %v3162 = vpack.c.b16 %v3070, %v3066
    %v3163 = vpack.c.b16 %v3071, %v3067
    %v3164 = vpack.c.b16 %v3072, %v3068
    %v3165 = vpack.c.b16 %v3073, %v3069
    %v3166 = vpack.c.b16 %v3078, %v3074
    %v3167 = vpack.c.b16 %v3079, %v3075
    %v3168 = vpack.c.b16 %v3080, %v3076
    %v3169 = vpack.c.b16 %v3081, %v3077
    %v3170 = vpack.c.b16 %v3086, %v3082
    %v3171 = vpack.c.b16 %v3087, %v3083
    %v3172 = vpack.c.b16 %v3088, %v3084
    %v3173 = vpack.c.b16 %v3089, %v3085
    %v3174 = vpack.c.b16 %v3094, %v3090
    %v3175 = vpack.c.b16 %v3095, %v3091
    %v3176 = vpack.c.b16 %v3096, %v3092
    %v3177 = vpack.c.b16 %v3097, %v3093
    %v3178 = vpack.c.b16 %v3102, %v3098
    %v3179 = vpack.c.b16 %v3103, %v3099
    %v3180 = vpack.c.b16 %v3104, %v3100
    %v3181 = vpack.c.b16 %v3105, %v3101
    %v3182 = vpack.c.b16 %v3110, %v3106
    %v3183 = vpack.c.b16 %v3111, %v3107
    %v3184 = vpack.c.b16 %v3112, %v3108
    %v3185 = vpack.c.b16 %v3113, %v3109
    %v3186 = vpack.c.b16 %v3118, %v3114
    %v3187 = vpack.c.b16 %v3119, %v3115
    %v3188 = vpack.c.b16 %v3120, %v3116
    %v3189 = vpack.c.b16 %v3121, %v3117
    %v3190 = vpack.c.b16 %v3126, %v3122
    %v3191 = vpack.c.b16 %v3127, %v3123
    %v3192 = vpack.c.b16 %v3128, %v3124
    %v3193 = vpack.c.b16 %v3129, %v3125
    %3258 = vmatpush.bf16.msra.mxu0 %v3158
    %3259 = vmatpush.bf16.msra.mxu0 %v3154
    %3260 = vmatpush.bf16.msra.mxu0 %v3150
    %3261 = vmatpush.bf16.msra.mxu0 %v3146
    %3262 = vmatpush.bf16.msra.mxu0 %v3142
    %3263 = vmatpush.bf16.msra.mxu0 %v3138
    %3264 = vmatpush.bf16.msra.mxu0 %v3134
    %3265 = vmatpush.bf16.msra.mxu0 %v3130
    %3266 = vmatmul.bf16.gmra.mxu0 %v2862
    %v3267 = vpop.f32.mrf.mxu0
    %v3268 = vadd.f32 %v2930, %v3267
    %v3269 = vpop.f32.mrf.mxu0
    %3270 = vdwg.mxu0
    %3271 = vmatpush.bf16.msra.mxu0 %v3190
    %3272 = vmatpush.bf16.msra.mxu0 %v3186
    %3273 = vmatpush.bf16.msra.mxu0 %v3182
    %3274 = vmatpush.bf16.msra.mxu0 %v3178
    %3275 = vmatpush.bf16.msra.mxu0 %v3174
    %3276 = vmatpush.bf16.msra.mxu0 %v3170
    %3277 = vmatpush.bf16.msra.mxu0 %v3166
    %3278 = vmatpush.bf16.msra.mxu0 %v3162
    %3279 = vmatmul.bf16.gmra.mxu0 %v2863
    %v3280 = vpop.f32.mrf.mxu0
    %v3281 = vadd.f32 %v3268, %v3280
    %v3282 = vpop.f32.mrf.mxu0
    %3283 = vdwg.mxu0
    %3284 = vmatpush.bf16.msra.mxu0 %v3159
    %3285 = vmatpush.bf16.msra.mxu0 %v3155
    %3286 = vmatpush.bf16.msra.mxu0 %v3151
    %3287 = vmatpush.bf16.msra.mxu0 %v3147
    %3288 = vmatpush.bf16.msra.mxu0 %v3143
    %3289 = vmatpush.bf16.msra.mxu0 %v3139
    %3290 = vmatpush.bf16.msra.mxu0 %v3135
    %3291 = vmatpush.bf16.msra.mxu0 %v3131
    %3292 = vmatmul.bf16.gmra.mxu0 %v2862
    %v3293 = vpop.f32.mrf.mxu0
    %v3294 = vadd.f32 %v2931, %v3293
    %v3295 = vpop.f32.mrf.mxu0
    %3296 = vdwg.mxu0
    %3297 = vmatpush.bf16.msra.mxu0 %v3191
    %3298 = vmatpush.bf16.msra.mxu0 %v3187
    %3299 = vmatpush.bf16.msra.mxu0 %v3183
    %3300 = vmatpush.bf16.msra.mxu0 %v3179
    %3301 = vmatpush.bf16.msra.mxu0 %v3175
    %3302 = vmatpush.bf16.msra.mxu0 %v3171
    %3303 = vmatpush.bf16.msra.mxu0 %v3167
    %3304 = vmatpush.bf16.msra.mxu0 %v3163
    %3305 = vmatmul.bf16.gmra.mxu0 %v2863
    %v3306 = vpop.f32.mrf.mxu0
    %v3307 = vadd.f32 %v3294, %v3306
    %v3308 = vpop.f32.mrf.mxu0
    %3309 = vdwg.mxu0
    %3310 = vmatpush.bf16.msra.mxu0 %v3160
    %3311 = vmatpush.bf16.msra.mxu0 %v3156
    %3312 = vmatpush.bf16.msra.mxu0 %v3152
    %3313 = vmatpush.bf16.msra.mxu0 %v3148
    %3314 = vmatpush.bf16.msra.mxu0 %v3144
    %3315 = vmatpush.bf16.msra.mxu0 %v3140
    %3316 = vmatpush.bf16.msra.mxu0 %v3136
    %3317 = vmatpush.bf16.msra.mxu0 %v3132
    %3318 = vmatmul.bf16.gmra.mxu0 %v2862
    %v3319 = vpop.f32.mrf.mxu0
    %v3320 = vadd.f32 %v2932, %v3319
    %v3321 = vpop.f32.mrf.mxu0
    %3322 = vdwg.mxu0
    %3323 = vmatpush.bf16.msra.mxu0 %v3192
    %3324 = vmatpush.bf16.msra.mxu0 %v3188
    %3325 = vmatpush.bf16.msra.mxu0 %v3184
    %3326 = vmatpush.bf16.msra.mxu0 %v3180
    %3327 = vmatpush.bf16.msra.mxu0 %v3176
    %3328 = vmatpush.bf16.msra.mxu0 %v3172
    %3329 = vmatpush.bf16.msra.mxu0 %v3168
    %3330 = vmatpush.bf16.msra.mxu0 %v3164
    %3331 = vmatmul.bf16.gmra.mxu0 %v2863
    %v3332 = vpop.f32.mrf.mxu0
    %v3333 = vadd.f32 %v3320, %v3332
    %v3334 = vpop.f32.mrf.mxu0
    %3335 = vdwg.mxu0
    %3336 = vmatpush.bf16.msra.mxu0 %v3161
    %3337 = vmatpush.bf16.msra.mxu0 %v3157
    %3338 = vmatpush.bf16.msra.mxu0 %v3153
    %3339 = vmatpush.bf16.msra.mxu0 %v3149
    %3340 = vmatpush.bf16.msra.mxu0 %v3145
    %3341 = vmatpush.bf16.msra.mxu0 %v3141
    %3342 = vmatpush.bf16.msra.mxu0 %v3137
    %3343 = vmatpush.bf16.msra.mxu0 %v3133
    %3344 = vmatmul.bf16.gmra.mxu0 %v2862
    %v3345 = vpop.f32.mrf.mxu0
    %v3346 = vadd.f32 %v2933, %v3345
    %v3347 = vpop.f32.mrf.mxu0
    %3348 = vdwg.mxu0
    %3349 = vmatpush.bf16.msra.mxu0 %v3193
    %3350 = vmatpush.bf16.msra.mxu0 %v3189
    %3351 = vmatpush.bf16.msra.mxu0 %v3185
    %3352 = vmatpush.bf16.msra.mxu0 %v3181
    %3353 = vmatpush.bf16.msra.mxu0 %v3177
    %3354 = vmatpush.bf16.msra.mxu0 %v3173
    %3355 = vmatpush.bf16.msra.mxu0 %v3169
    %3356 = vmatpush.bf16.msra.mxu0 %v3165
    %3357 = vmatmul.bf16.gmra.mxu0 %v2863
    %v3358 = vpop.f32.mrf.mxu0
    %v3359 = vadd.f32 %v3346, %v3358
    %v3360 = vpop.f32.mrf.mxu0
    %3361 = vdwg.mxu0
    %v3362 = vxor.u32 %v3281, 2147483648
    %v3363 = vmul.f32 %v3362, 1.442695
    %v3364 = vpow.pop %v3363
    %v3365 = vadd.f32 %v3364, 1.0
    %v3366 = vrcp.pop %v3365
    %v3367 = vmul.f32 %v3365, %v3366
    %v3368 = vsub.f32 1.0, %v3367
    %v3369 = vmul.f32 %v3366, %v3368
    %v3370 = vadd.f32 %v3366, %v3369
    %vm3371 = vweird.f32 %v3365
    %vm3372 = vweird.f32 %v3366
    %vm3373 = vmor %vm3371, %vm3372
    %v3374 = vsel %vm3373, %v3366, %v3370
    %v3375 = vand.u32 2147483647, %v3365
    %vm3376 = vcmp.eq.f32.partialorder %v3375, 8.507059e+37
    %v3377 = vand.u32 %v3365, 2147483648
    %v3378 = vor.u32 1.1754944e-38, %v3377
    %v3379 = vsel %vm3376, %v3378, %v3374
    %v3380 = vmul.f32 1.0, %v3379
    %v3381 = vxor.u32 %v3307, 2147483648
    %v3382 = vmul.f32 %v3381, 1.442695
    %v3383 = vpow.pop %v3382
    %v3384 = vadd.f32 %v3383, 1.0
    %v3385 = vrcp.pop %v3384
    %v3386 = vmul.f32 %v3384, %v3385
    %v3387 = vsub.f32 1.0, %v3386
    %v3388 = vmul.f32 %v3385, %v3387
    %v3389 = vadd.f32 %v3385, %v3388
    %vm3390 = vweird.f32 %v3384
    %vm3391 = vweird.f32 %v3385
    %vm3392 = vmor %vm3390, %vm3391
    %v3393 = vsel %vm3392, %v3385, %v3389
    %v3394 = vand.u32 2147483647, %v3384
    %vm3395 = vcmp.eq.f32.partialorder %v3394, 8.507059e+37
    %v3396 = vand.u32 %v3384, 2147483648
    %v3397 = vor.u32 1.1754944e-38, %v3396
    %v3398 = vsel %vm3395, %v3397, %v3393
    %v3399 = vmul.f32 1.0, %v3398
    %v3400 = vtanh.pop %v3333
    %v3401 = vxor.u32 %v3359, 2147483648
    %v3402 = vmul.f32 %v3401, 1.442695
    %v3403 = vpow.pop %v3402
    %v3404 = vadd.f32 %v3403, 1.0
    %v3405 = vrcp.pop %v3404
    %v3406 = vmul.f32 %v3404, %v3405
    %v3407 = vsub.f32 1.0, %v3406
    %v3408 = vmul.f32 %v3405, %v3407
    %v3409 = vadd.f32 %v3405, %v3408
    %vm3410 = vweird.f32 %v3404
    %vm3411 = vweird.f32 %v3405
    %vm3412 = vmor %vm3410, %vm3411
    %v3413 = vsel %vm3412, %v3405, %v3409
    %v3414 = vand.u32 2147483647, %v3404
    %vm3415 = vcmp.eq.f32.partialorder %v3414, 8.507059e+37
    %v3416 = vand.u32 %v3404, 2147483648
    %v3417 = vor.u32 1.1754944e-38, %v3416
    %v3418 = vsel %vm3415, %v3417, %v3413
    %v3419 = vmul.f32 1.0, %v3418
    %v3420 = vmul.f32 %v3399, 0.0
    %v3421 = vmul.f32 %v3380, %v3400
    %v3422 = vadd.f32 %v3420, %v3421
    %v3423 = vtanh.pop %v3422
    %v3424 = vmul.f32 %v3419, %v3423
    %3425 = vmatpush.bf16.msra.mxu0 %v2707
    %3426 = vmatpush.bf16.msra.mxu0 %v2703
    %3427 = vmatpush.bf16.msra.mxu0 %v2699
    %3428 = vmatpush.bf16.msra.mxu0 %v2695
    %3429 = vmatpush.bf16.msra.mxu0 %v2691
    %3430 = vmatpush.bf16.msra.mxu0 %v2687
    %3431 = vmatpush.bf16.msra.mxu0 %v2683
    %3432 = vmatpush.bf16.msra.mxu0 %v2679
    %3433 = vmatmul.bf16.gmra.mxu0 %v2862
    %v3434 = vpop.f32.mrf.mxu0
    %v3435 = vadd.f32 0.0, %v3434
    %v3436 = vpop.f32.mrf.mxu0
    %3437 = vdwg.mxu0
    %3438 = vmatpush.bf16.msra.mxu0 %v2708
    %3439 = vmatpush.bf16.msra.mxu0 %v2704
    %3440 = vmatpush.bf16.msra.mxu0 %v2700
    %3441 = vmatpush.bf16.msra.mxu0 %v2696
    %3442 = vmatpush.bf16.msra.mxu0 %v2692
    %3443 = vmatpush.bf16.msra.mxu0 %v2688
    %3444 = vmatpush.bf16.msra.mxu0 %v2684
    %3445 = vmatpush.bf16.msra.mxu0 %v2680
    %3446 = vmatmul.bf16.gmra.mxu0 %v2862
    %v3447 = vpop.f32.mrf.mxu0
    %v3448 = vadd.f32 0.0, %v3447
    %v3449 = vpop.f32.mrf.mxu0
    %3450 = vdwg.mxu0
    %3451 = vmatpush.bf16.msra.mxu0 %v2709
    %3452 = vmatpush.bf16.msra.mxu0 %v2705
    %3453 = vmatpush.bf16.msra.mxu0 %v2701
    %3454 = vmatpush.bf16.msra.mxu0 %v2697
    %3455 = vmatpush.bf16.msra.mxu0 %v2693
    %3456 = vmatpush.bf16.msra.mxu0 %v2689
    %3457 = vmatpush.bf16.msra.mxu0 %v2685
    %3458 = vmatpush.bf16.msra.mxu0 %v2681
    %3459 = vmatmul.bf16.gmra.mxu0 %v2862
    %v3460 = vpop.f32.mrf.mxu0
    %v3461 = vadd.f32 0.0, %v3460
    %v3462 = vpop.f32.mrf.mxu0
    %3463 = vdwg.mxu0
    %3464 = vmatpush.bf16.msra.mxu0 %v2710
    %3465 = vmatpush.bf16.msra.mxu0 %v2706
    %3466 = vmatpush.bf16.msra.mxu0 %v2702
    %3467 = vmatpush.bf16.msra.mxu0 %v2698
    %3468 = vmatpush.bf16.msra.mxu0 %v2694
    %3469 = vmatpush.bf16.msra.mxu0 %v2690
    %3470 = vmatpush.bf16.msra.mxu0 %v2686
    %3471 = vmatpush.bf16.msra.mxu0 %v2682
    %3472 = vmatmul.bf16.gmra.mxu0 %v2862
    %v3473 = vpop.f32.mrf.mxu0
    %v3474 = vadd.f32 0.0, %v3473
    %v3475 = vpop.f32.mrf.mxu0
    %3476 = vdwg.mxu0
    %v3481 = vrot.slane %v3435, 6
    %v3482 = vrot.slane %v3448, 6
    %v3483 = vrot.slane %v3461, 6
    %v3484 = vrot.slane %v3474, 6
    %v3489 = vadd.f32 %v2505, %v3481
    %v3490 = vadd.f32 %v2519, %v3482
    %v3491 = vadd.f32 %v2533, %v3483
    %v3492 = vadd.f32 %v2547, %v3484
    %v3493 = vxor.u32 %v3489, 2147483648
    %v3494 = vmul.f32 %v3493, 1.442695
    %v3495 = vpow.pop %v3494
    %v3496 = vadd.f32 %v3495, 1.0
    %v3497 = vrcp.pop %v3496
    %v3498 = vmul.f32 %v3496, %v3497
    %v3499 = vsub.f32 1.0, %v3498
    %v3500 = vmul.f32 %v3497, %v3499
    %v3501 = vadd.f32 %v3497, %v3500
    %vm3502 = vweird.f32 %v3496
    %vm3503 = vweird.f32 %v3497
    %vm3504 = vmor %vm3502, %vm3503
    %v3505 = vsel %vm3504, %v3497, %v3501
    %v3506 = vand.u32 2147483647, %v3496
    %vm3507 = vcmp.eq.f32.partialorder %v3506, 8.507059e+37
    %v3508 = vand.u32 %v3496, 2147483648
    %v3509 = vor.u32 1.1754944e-38, %v3508
    %v3510 = vsel %vm3507, %v3509, %v3505
    %v3511 = vmul.f32 1.0, %v3510
    %v3512 = vxor.u32 %v3490, 2147483648
    %v3513 = vmul.f32 %v3512, 1.442695
    %v3514 = vpow.pop %v3513
    %v3515 = vadd.f32 %v3514, 1.0
    %v3516 = vrcp.pop %v3515
    %v3517 = vmul.f32 %v3515, %v3516
    %v3518 = vsub.f32 1.0, %v3517
    %v3519 = vmul.f32 %v3516, %v3518
    %v3520 = vadd.f32 %v3516, %v3519
    %vm3521 = vweird.f32 %v3515
    %vm3522 = vweird.f32 %v3516
    %vm3523 = vmor %vm3521, %vm3522
    %v3524 = vsel %vm3523, %v3516, %v3520
    %v3525 = vand.u32 2147483647, %v3515
    %vm3526 = vcmp.eq.f32.partialorder %v3525, 8.507059e+37
    %v3527 = vand.u32 %v3515, 2147483648
    %v3528 = vor.u32 1.1754944e-38, %v3527
    %v3529 = vsel %vm3526, %v3528, %v3524
    %v3530 = vmul.f32 1.0, %v3529
    %v3531 = vtanh.pop %v3491
    %v3532 = vxor.u32 %v3492, 2147483648
    %v3533 = vmul.f32 %v3532, 1.442695
    %v3534 = vpow.pop %v3533
    %v3535 = vadd.f32 %v3534, 1.0
    %v3536 = vrcp.pop %v3535
    %v3537 = vmul.f32 %v3535, %v3536
    %v3538 = vsub.f32 1.0, %v3537
    %v3539 = vmul.f32 %v3536, %v3538
    %v3540 = vadd.f32 %v3536, %v3539
    %vm3541 = vweird.f32 %v3535
    %vm3542 = vweird.f32 %v3536
    %vm3543 = vmor %vm3541, %vm3542
    %v3544 = vsel %vm3543, %v3536, %v3540
    %v3545 = vand.u32 2147483647, %v3535
    %vm3546 = vcmp.eq.f32.partialorder %v3545, 8.507059e+37
    %v3547 = vand.u32 %v3535, 2147483648
    %v3548 = vor.u32 1.1754944e-38, %v3547
    %v3549 = vsel %vm3546, %v3548, %v3544
    %v3550 = vmul.f32 1.0, %v3549
    %v3552 = vrot.slane %v2859, 6
    %v3554 = vmul.f32 %v3530, %v3552
    %v3555 = vmul.f32 %v3511, %v3531
    %v3556 = vadd.f32 %v3554, %v3555
    %v3557 = vtanh.pop %v3556
    %v3558 = vmul.f32 %v3550, %v3557
    %v3560 = vrot.slane %v3424, 6
    %v3562 = vpack.c.bf16 %v3558, %v3558
    %v3563 = vpack.c.bf16 %v3560, %v3560
    %v3566 = vrot.slane %v3562, 1
    %v3567 = vrot.slane %v3563, 1
    %3570 = vmatpush.bf16.msra.mxu0 %v3158
    %3571 = vmatpush.bf16.msra.mxu0 %v3154
    %3572 = vmatpush.bf16.msra.mxu0 %v3150
    %3573 = vmatpush.bf16.msra.mxu0 %v3146
    %3574 = vmatpush.bf16.msra.mxu0 %v3142
    %3575 = vmatpush.bf16.msra.mxu0 %v3138
    %3576 = vmatpush.bf16.msra.mxu0 %v3134
    %3577 = vmatpush.bf16.msra.mxu0 %v3130
    %3578 = vmatmul.bf16.gmra.mxu0 %v3566
    %v3579 = vpop.f32.mrf.mxu0
    %v3580 = vadd.f32 %v2930, %v3579
    %v3581 = vpop.f32.mrf.mxu0
    %3582 = vdwg.mxu0
    %3583 = vmatpush.bf16.msra.mxu0 %v3190
    %3584 = vmatpush.bf16.msra.mxu0 %v3186
    %3585 = vmatpush.bf16.msra.mxu0 %v3182
    %3586 = vmatpush.bf16.msra.mxu0 %v3178
    %3587 = vmatpush.bf16.msra.mxu0 %v3174
    %3588 = vmatpush.bf16.msra.mxu0 %v3170
    %3589 = vmatpush.bf16.msra.mxu0 %v3166
    %3590 = vmatpush.bf16.msra.mxu0 %v3162
    %3591 = vmatmul.bf16.gmra.mxu0 %v3567
    %v3592 = vpop.f32.mrf.mxu0
    %v3593 = vadd.f32 %v3580, %v3592
    %v3594 = vpop.f32.mrf.mxu0
    %3595 = vdwg.mxu0
    %3596 = vmatpush.bf16.msra.mxu0 %v3159
    %3597 = vmatpush.bf16.msra.mxu0 %v3155
    %3598 = vmatpush.bf16.msra.mxu0 %v3151
    %3599 = vmatpush.bf16.msra.mxu0 %v3147
    %3600 = vmatpush.bf16.msra.mxu0 %v3143
    %3601 = vmatpush.bf16.msra.mxu0 %v3139
    %3602 = vmatpush.bf16.msra.mxu0 %v3135
    %3603 = vmatpush.bf16.msra.mxu0 %v3131
    %3604 = vmatmul.bf16.gmra.mxu0 %v3566
    %v3605 = vpop.f32.mrf.mxu0
    %v3606 = vadd.f32 %v2931, %v3605
    %v3607 = vpop.f32.mrf.mxu0
    %3608 = vdwg.mxu0
    %3609 = vmatpush.bf16.msra.mxu0 %v3191
    %3610 = vmatpush.bf16.msra.mxu0 %v3187
    %3611 = vmatpush.bf16.msra.mxu0 %v3183
    %3612 = vmatpush.bf16.msra.mxu0 %v3179
    %3613 = vmatpush.bf16.msra.mxu0 %v3175
    %3614 = vmatpush.bf16.msra.mxu0 %v3171
    %3615 = vmatpush.bf16.msra.mxu0 %v3167
    %3616 = vmatpush.bf16.msra.mxu0 %v3163
    %3617 = vmatmul.bf16.gmra.mxu0 %v3567
    %v3618 = vpop.f32.mrf.mxu0
    %v3619 = vadd.f32 %v3606, %v3618
    %v3620 = vpop.f32.mrf.mxu0
    %3621 = vdwg.mxu0
    %3622 = vmatpush.bf16.msra.mxu0 %v3160
    %3623 = vmatpush.bf16.msra.mxu0 %v3156
    %3624 = vmatpush.bf16.msra.mxu0 %v3152
    %3625 = vmatpush.bf16.msra.mxu0 %v3148
    %3626 = vmatpush.bf16.msra.mxu0 %v3144
    %3627 = vmatpush.bf16.msra.mxu0 %v3140
    %3628 = vmatpush.bf16.msra.mxu0 %v3136
    %3629 = vmatpush.bf16.msra.mxu0 %v3132
    %3630 = vmatmul.bf16.gmra.mxu0 %v3566
    %v3631 = vpop.f32.mrf.mxu0
    %v3632 = vadd.f32 %v2932, %v3631
    %v3633 = vpop.f32.mrf.mxu0
    %3634 = vdwg.mxu0
    %3635 = vmatpush.bf16.msra.mxu0 %v3192
    %3636 = vmatpush.bf16.msra.mxu0 %v3188
    %3637 = vmatpush.bf16.msra.mxu0 %v3184
    %3638 = vmatpush.bf16.msra.mxu0 %v3180
    %3639 = vmatpush.bf16.msra.mxu0 %v3176
    %3640 = vmatpush.bf16.msra.mxu0 %v3172
    %3641 = vmatpush.bf16.msra.mxu0 %v3168
    %3642 = vmatpush.bf16.msra.mxu0 %v3164
    %3643 = vmatmul.bf16.gmra.mxu0 %v3567
    %v3644 = vpop.f32.mrf.mxu0
    %v3645 = vadd.f32 %v3632, %v3644
    %v3646 = vpop.f32.mrf.mxu0
    %3647 = vdwg.mxu0
    %3648 = vmatpush.bf16.msra.mxu0 %v3161
    %3649 = vmatpush.bf16.msra.mxu0 %v3157
    %3650 = vmatpush.bf16.msra.mxu0 %v3153
    %3651 = vmatpush.bf16.msra.mxu0 %v3149
    %3652 = vmatpush.bf16.msra.mxu0 %v3145
    %3653 = vmatpush.bf16.msra.mxu0 %v3141
    %3654 = vmatpush.bf16.msra.mxu0 %v3137
    %3655 = vmatpush.bf16.msra.mxu0 %v3133
    %3656 = vmatmul.bf16.gmra.mxu0 %v3566
    %v3657 = vpop.f32.mrf.mxu0
    %v3658 = vadd.f32 %v2933, %v3657
    %v3659 = vpop.f32.mrf.mxu0
    %3660 = vdwg.mxu0
    %3661 = vmatpush.bf16.msra.mxu0 %v3193
    %3662 = vmatpush.bf16.msra.mxu0 %v3189
    %3663 = vmatpush.bf16.msra.mxu0 %v3185
    %3664 = vmatpush.bf16.msra.mxu0 %v3181
    %3665 = vmatpush.bf16.msra.mxu0 %v3177
    %3666 = vmatpush.bf16.msra.mxu0 %v3173
    %3667 = vmatpush.bf16.msra.mxu0 %v3169
    %3668 = vmatpush.bf16.msra.mxu0 %v3165
    %3669 = vmatmul.bf16.gmra.mxu0 %v3567
    %v3670 = vpop.f32.mrf.mxu0
    %v3671 = vadd.f32 %v3658, %v3670
    %v3672 = vpop.f32.mrf.mxu0
    %3673 = vdwg.mxu0
    %v3674 = vxor.u32 %v3593, 2147483648
    %v3675 = vmul.f32 %v3674, 1.442695
    %v3676 = vpow.pop %v3675
    %v3677 = vadd.f32 %v3676, 1.0
    %v3678 = vrcp.pop %v3677
    %v3679 = vmul.f32 %v3677, %v3678
    %v3680 = vsub.f32 1.0, %v3679
    %v3681 = vmul.f32 %v3678, %v3680
    %v3682 = vadd.f32 %v3678, %v3681
    %vm3683 = vweird.f32 %v3677
    %vm3684 = vweird.f32 %v3678
    %vm3685 = vmor %vm3683, %vm3684
    %v3686 = vsel %vm3685, %v3678, %v3682
    %v3687 = vand.u32 2147483647, %v3677
    %vm3688 = vcmp.eq.f32.partialorder %v3687, 8.507059e+37
    %v3689 = vand.u32 %v3677, 2147483648
    %v3690 = vor.u32 1.1754944e-38, %v3689
    %v3691 = vsel %vm3688, %v3690, %v3686
    %v3692 = vmul.f32 1.0, %v3691
    %v3693 = vxor.u32 %v3619, 2147483648
    %v3694 = vmul.f32 %v3693, 1.442695
    %v3695 = vpow.pop %v3694
    %v3696 = vadd.f32 %v3695, 1.0
    %v3697 = vrcp.pop %v3696
    %v3698 = vmul.f32 %v3696, %v3697
    %v3699 = vsub.f32 1.0, %v3698
    %v3700 = vmul.f32 %v3697, %v3699
    %v3701 = vadd.f32 %v3697, %v3700
    %vm3702 = vweird.f32 %v3696
    %vm3703 = vweird.f32 %v3697
    %vm3704 = vmor %vm3702, %vm3703
    %v3705 = vsel %vm3704, %v3697, %v3701
    %v3706 = vand.u32 2147483647, %v3696
    %vm3707 = vcmp.eq.f32.partialorder %v3706, 8.507059e+37
    %v3708 = vand.u32 %v3696, 2147483648
    %v3709 = vor.u32 1.1754944e-38, %v3708
    %v3710 = vsel %vm3707, %v3709, %v3705
    %v3711 = vmul.f32 1.0, %v3710
    %v3712 = vtanh.pop %v3645
    %v3713 = vxor.u32 %v3671, 2147483648
    %v3714 = vmul.f32 %v3713, 1.442695
    %v3715 = vpow.pop %v3714
    %v3716 = vadd.f32 %v3715, 1.0
    %v3717 = vrcp.pop %v3716
    %v3718 = vmul.f32 %v3716, %v3717
    %v3719 = vsub.f32 1.0, %v3718
    %v3720 = vmul.f32 %v3717, %v3719
    %v3721 = vadd.f32 %v3717, %v3720
    %vm3722 = vweird.f32 %v3716
    %vm3723 = vweird.f32 %v3717
    %vm3724 = vmor %vm3722, %vm3723
    %v3725 = vsel %vm3724, %v3717, %v3721
    %v3726 = vand.u32 2147483647, %v3716
    %vm3727 = vcmp.eq.f32.partialorder %v3726, 8.507059e+37
    %v3728 = vand.u32 %v3716, 2147483648
    %v3729 = vor.u32 1.1754944e-38, %v3728
    %v3730 = vsel %vm3727, %v3729, %v3725
    %v3731 = vmul.f32 1.0, %v3730
    %v3732 = vmul.f32 %v3711, %v3422
    %v3733 = vmul.f32 %v3692, %v3712
    %v3734 = vadd.f32 %v3732, %v3733
    %v3735 = vtanh.pop %v3734
    %v3736 = vmul.f32 %v3731, %v3735
    %3737 = vmatpush.bf16.msra.mxu0 %v2707
    %3738 = vmatpush.bf16.msra.mxu0 %v2703
    %3739 = vmatpush.bf16.msra.mxu0 %v2699
    %3740 = vmatpush.bf16.msra.mxu0 %v2695
    %3741 = vmatpush.bf16.msra.mxu0 %v2691
    %3742 = vmatpush.bf16.msra.mxu0 %v2687
    %3743 = vmatpush.bf16.msra.mxu0 %v2683
    %3744 = vmatpush.bf16.msra.mxu0 %v2679
    %3745 = vmatmul.bf16.gmra.mxu0 %v3566
    %v3746 = vpop.f32.mrf.mxu0
    %v3747 = vadd.f32 0.0, %v3746
    %v3748 = vpop.f32.mrf.mxu0
    %3749 = vdwg.mxu0
    %3750 = vmatpush.bf16.msra.mxu0 %v2708
    %3751 = vmatpush.bf16.msra.mxu0 %v2704
    %3752 = vmatpush.bf16.msra.mxu0 %v2700
    %3753 = vmatpush.bf16.msra.mxu0 %v2696
    %3754 = vmatpush.bf16.msra.mxu0 %v2692
    %3755 = vmatpush.bf16.msra.mxu0 %v2688
    %3756 = vmatpush.bf16.msra.mxu0 %v2684
    %3757 = vmatpush.bf16.msra.mxu0 %v2680
    %3758 = vmatmul.bf16.gmra.mxu0 %v3566
    %v3759 = vpop.f32.mrf.mxu0
    %v3760 = vadd.f32 0.0, %v3759
    %v3761 = vpop.f32.mrf.mxu0
    %3762 = vdwg.mxu0
    %3763 = vmatpush.bf16.msra.mxu0 %v2709
    %3764 = vmatpush.bf16.msra.mxu0 %v2705
    %3765 = vmatpush.bf16.msra.mxu0 %v2701
    %3766 = vmatpush.bf16.msra.mxu0 %v2697
    %3767 = vmatpush.bf16.msra.mxu0 %v2693
    %3768 = vmatpush.bf16.msra.mxu0 %v2689
    %3769 = vmatpush.bf16.msra.mxu0 %v2685
    %3770 = vmatpush.bf16.msra.mxu0 %v2681
    %3771 = vmatmul.bf16.gmra.mxu0 %v3566
    %v3772 = vpop.f32.mrf.mxu0
    %v3773 = vadd.f32 0.0, %v3772
    %v3774 = vpop.f32.mrf.mxu0
    %3775 = vdwg.mxu0
    %3776 = vmatpush.bf16.msra.mxu0 %v2710
    %3777 = vmatpush.bf16.msra.mxu0 %v2706
    %3778 = vmatpush.bf16.msra.mxu0 %v2702
    %3779 = vmatpush.bf16.msra.mxu0 %v2698
    %3780 = vmatpush.bf16.msra.mxu0 %v2694
    %3781 = vmatpush.bf16.msra.mxu0 %v2690
    %3782 = vmatpush.bf16.msra.mxu0 %v2686
    %3783 = vmatpush.bf16.msra.mxu0 %v2682
    %3784 = vmatmul.bf16.gmra.mxu0 %v3566
    %v3785 = vpop.f32.mrf.mxu0
    %v3786 = vadd.f32 0.0, %v3785
    %v3787 = vpop.f32.mrf.mxu0
    %3788 = vdwg.mxu0
    %v3793 = vrot.slane %v3747, 4
    %v3794 = vrot.slane %v3760, 4
    %v3795 = vrot.slane %v3773, 4
    %v3796 = vrot.slane %v3786, 4
    %v3801 = vadd.f32 %v2505, %v3793
    %v3802 = vadd.f32 %v2519, %v3794
    %v3803 = vadd.f32 %v2533, %v3795
    %v3804 = vadd.f32 %v2547, %v3796
    %v3805 = vxor.u32 %v3801, 2147483648
    %v3806 = vmul.f32 %v3805, 1.442695
    %v3807 = vpow.pop %v3806
    %v3808 = vadd.f32 %v3807, 1.0
    %v3809 = vrcp.pop %v3808
    %v3810 = vmul.f32 %v3808, %v3809
    %v3811 = vsub.f32 1.0, %v3810
    %v3812 = vmul.f32 %v3809, %v3811
    %v3813 = vadd.f32 %v3809, %v3812
    %vm3814 = vweird.f32 %v3808
    %vm3815 = vweird.f32 %v3809
    %vm3816 = vmor %vm3814, %vm3815
    %v3817 = vsel %vm3816, %v3809, %v3813
    %v3818 = vand.u32 2147483647, %v3808
    %vm3819 = vcmp.eq.f32.partialorder %v3818, 8.507059e+37
    %v3820 = vand.u32 %v3808, 2147483648
    %v3821 = vor.u32 1.1754944e-38, %v3820
    %v3822 = vsel %vm3819, %v3821, %v3817
    %v3823 = vmul.f32 1.0, %v3822
    %v3824 = vxor.u32 %v3802, 2147483648
    %v3825 = vmul.f32 %v3824, 1.442695
    %v3826 = vpow.pop %v3825
    %v3827 = vadd.f32 %v3826, 1.0
    %v3828 = vrcp.pop %v3827
    %v3829 = vmul.f32 %v3827, %v3828
    %v3830 = vsub.f32 1.0, %v3829
    %v3831 = vmul.f32 %v3828, %v3830
    %v3832 = vadd.f32 %v3828, %v3831
    %vm3833 = vweird.f32 %v3827
    %vm3834 = vweird.f32 %v3828
    %vm3835 = vmor %vm3833, %vm3834
    %v3836 = vsel %vm3835, %v3828, %v3832
    %v3837 = vand.u32 2147483647, %v3827
    %vm3838 = vcmp.eq.f32.partialorder %v3837, 8.507059e+37
    %v3839 = vand.u32 %v3827, 2147483648
    %v3840 = vor.u32 1.1754944e-38, %v3839
    %v3841 = vsel %vm3838, %v3840, %v3836
    %v3842 = vmul.f32 1.0, %v3841
    %v3843 = vtanh.pop %v3803
    %v3844 = vxor.u32 %v3804, 2147483648
    %v3845 = vmul.f32 %v3844, 1.442695
    %v3846 = vpow.pop %v3845
    %v3847 = vadd.f32 %v3846, 1.0
    %v3848 = vrcp.pop %v3847
    %v3849 = vmul.f32 %v3847, %v3848
    %v3850 = vsub.f32 1.0, %v3849
    %v3851 = vmul.f32 %v3848, %v3850
    %v3852 = vadd.f32 %v3848, %v3851
    %vm3853 = vweird.f32 %v3847
    %vm3854 = vweird.f32 %v3848
    %vm3855 = vmor %vm3853, %vm3854
    %v3856 = vsel %vm3855, %v3848, %v3852
    %v3857 = vand.u32 2147483647, %v3847
    %vm3858 = vcmp.eq.f32.partialorder %v3857, 8.507059e+37
    %v3859 = vand.u32 %v3847, 2147483648
    %v3860 = vor.u32 1.1754944e-38, %v3859
    %v3861 = vsel %vm3858, %v3860, %v3856
    %v3862 = vmul.f32 1.0, %v3861
    %v3864 = vrot.slane %v3556, 6
    %v3866 = vmul.f32 %v3842, %v3864
    %v3867 = vmul.f32 %v3823, %v3843
    %v3868 = vadd.f32 %v3866, %v3867
    %v3869 = vtanh.pop %v3868
    %v3870 = vmul.f32 %v3862, %v3869
    %v3872 = vrot.slane %v3736, 4
    %v3874 = vpack.c.bf16 %v3870, %v3870
    %v3875 = vpack.c.bf16 %v3872, %v3872
    %v3878 = vrot.slane %v3874, 2
    %v3879 = vrot.slane %v3875, 2
    %3882 = vmatpush.bf16.msra.mxu0 %v3158
    %3883 = vmatpush.bf16.msra.mxu0 %v3154
    %3884 = vmatpush.bf16.msra.mxu0 %v3150
    %3885 = vmatpush.bf16.msra.mxu0 %v3146
    %3886 = vmatpush.bf16.msra.mxu0 %v3142
    %3887 = vmatpush.bf16.msra.mxu0 %v3138
    %3888 = vmatpush.bf16.msra.mxu0 %v3134
    %3889 = vmatpush.bf16.msra.mxu0 %v3130
    %3890 = vmatmul.bf16.gmra.mxu0 %v3878
    %v3891 = vpop.f32.mrf.mxu0
    %v3892 = vadd.f32 %v2930, %v3891
    %v3893 = vpop.f32.mrf.mxu0
    %3894 = vdwg.mxu0
    %3895 = vmatpush.bf16.msra.mxu0 %v3190
    %3896 = vmatpush.bf16.msra.mxu0 %v3186
    %3897 = vmatpush.bf16.msra.mxu0 %v3182
    %3898 = vmatpush.bf16.msra.mxu0 %v3178
    %3899 = vmatpush.bf16.msra.mxu0 %v3174
    %3900 = vmatpush.bf16.msra.mxu0 %v3170
    %3901 = vmatpush.bf16.msra.mxu0 %v3166
    %3902 = vmatpush.bf16.msra.mxu0 %v3162
    %3903 = vmatmul.bf16.gmra.mxu0 %v3879
    %v3904 = vpop.f32.mrf.mxu0
    %v3905 = vadd.f32 %v3892, %v3904
    %v3906 = vpop.f32.mrf.mxu0
    %3907 = vdwg.mxu0
    %3908 = vmatpush.bf16.msra.mxu0 %v3159
    %3909 = vmatpush.bf16.msra.mxu0 %v3155
    %3910 = vmatpush.bf16.msra.mxu0 %v3151
    %3911 = vmatpush.bf16.msra.mxu0 %v3147
    %3912 = vmatpush.bf16.msra.mxu0 %v3143
    %3913 = vmatpush.bf16.msra.mxu0 %v3139
    %3914 = vmatpush.bf16.msra.mxu0 %v3135
    %3915 = vmatpush.bf16.msra.mxu0 %v3131
    %3916 = vmatmul.bf16.gmra.mxu0 %v3878
    %v3917 = vpop.f32.mrf.mxu0
    %v3918 = vadd.f32 %v2931, %v3917
    %v3919 = vpop.f32.mrf.mxu0
    %3920 = vdwg.mxu0
    %3921 = vmatpush.bf16.msra.mxu0 %v3191
    %3922 = vmatpush.bf16.msra.mxu0 %v3187
    %3923 = vmatpush.bf16.msra.mxu0 %v3183
    %3924 = vmatpush.bf16.msra.mxu0 %v3179
    %3925 = vmatpush.bf16.msra.mxu0 %v3175
    %3926 = vmatpush.bf16.msra.mxu0 %v3171
    %3927 = vmatpush.bf16.msra.mxu0 %v3167
    %3928 = vmatpush.bf16.msra.mxu0 %v3163
    %3929 = vmatmul.bf16.gmra.mxu0 %v3879
    %v3930 = vpop.f32.mrf.mxu0
    %v3931 = vadd.f32 %v3918, %v3930
    %v3932 = vpop.f32.mrf.mxu0
    %3933 = vdwg.mxu0
    %3934 = vmatpush.bf16.msra.mxu0 %v3160
    %3935 = vmatpush.bf16.msra.mxu0 %v3156
    %3936 = vmatpush.bf16.msra.mxu0 %v3152
    %3937 = vmatpush.bf16.msra.mxu0 %v3148
    %3938 = vmatpush.bf16.msra.mxu0 %v3144
    %3939 = vmatpush.bf16.msra.mxu0 %v3140
    %3940 = vmatpush.bf16.msra.mxu0 %v3136
    %3941 = vmatpush.bf16.msra.mxu0 %v3132
    %3942 = vmatmul.bf16.gmra.mxu0 %v3878
    %v3943 = vpop.f32.mrf.mxu0
    %v3944 = vadd.f32 %v2932, %v3943
    %v3945 = vpop.f32.mrf.mxu0
    %3946 = vdwg.mxu0
    %3947 = vmatpush.bf16.msra.mxu0 %v3192
    %3948 = vmatpush.bf16.msra.mxu0 %v3188
    %3949 = vmatpush.bf16.msra.mxu0 %v3184
    %3950 = vmatpush.bf16.msra.mxu0 %v3180
    %3951 = vmatpush.bf16.msra.mxu0 %v3176
    %3952 = vmatpush.bf16.msra.mxu0 %v3172
    %3953 = vmatpush.bf16.msra.mxu0 %v3168
    %3954 = vmatpush.bf16.msra.mxu0 %v3164
    %3955 = vmatmul.bf16.gmra.mxu0 %v3879
    %v3956 = vpop.f32.mrf.mxu0
    %v3957 = vadd.f32 %v3944, %v3956
    %v3958 = vpop.f32.mrf.mxu0
    %3959 = vdwg.mxu0
    %3960 = vmatpush.bf16.msra.mxu0 %v3161
    %3961 = vmatpush.bf16.msra.mxu0 %v3157
    %3962 = vmatpush.bf16.msra.mxu0 %v3153
    %3963 = vmatpush.bf16.msra.mxu0 %v3149
    %3964 = vmatpush.bf16.msra.mxu0 %v3145
    %3965 = vmatpush.bf16.msra.mxu0 %v3141
    %3966 = vmatpush.bf16.msra.mxu0 %v3137
    %3967 = vmatpush.bf16.msra.mxu0 %v3133
    %3968 = vmatmul.bf16.gmra.mxu0 %v3878
    %v3969 = vpop.f32.mrf.mxu0
    %v3970 = vadd.f32 %v2933, %v3969
    %v3971 = vpop.f32.mrf.mxu0
    %3972 = vdwg.mxu0
    %3973 = vmatpush.bf16.msra.mxu0 %v3193
    %3974 = vmatpush.bf16.msra.mxu0 %v3189
    %3975 = vmatpush.bf16.msra.mxu0 %v3185
    %3976 = vmatpush.bf16.msra.mxu0 %v3181
    %3977 = vmatpush.bf16.msra.mxu0 %v3177
    %3978 = vmatpush.bf16.msra.mxu0 %v3173
    %3979 = vmatpush.bf16.msra.mxu0 %v3169
    %3980 = vmatpush.bf16.msra.mxu0 %v3165
    %3981 = vmatmul.bf16.gmra.mxu0 %v3879
    %v3982 = vpop.f32.mrf.mxu0
    %v3983 = vadd.f32 %v3970, %v3982
    %v3984 = vpop.f32.mrf.mxu0
    %3985 = vdwg.mxu0
    %v3986 = vxor.u32 %v3905, 2147483648
    %v3987 = vmul.f32 %v3986, 1.442695
    %v3988 = vpow.pop %v3987
    %v3989 = vadd.f32 %v3988, 1.0
    %v3990 = vrcp.pop %v3989
    %v3991 = vmul.f32 %v3989, %v3990
    %v3992 = vsub.f32 1.0, %v3991
    %v3993 = vmul.f32 %v3990, %v3992
    %v3994 = vadd.f32 %v3990, %v3993
    %vm3995 = vweird.f32 %v3989
    %vm3996 = vweird.f32 %v3990
    %vm3997 = vmor %vm3995, %vm3996
    %v3998 = vsel %vm3997, %v3990, %v3994
    %v3999 = vand.u32 2147483647, %v3989
    %vm4000 = vcmp.eq.f32.partialorder %v3999, 8.507059e+37
    %v4001 = vand.u32 %v3989, 2147483648
    %v4002 = vor.u32 1.1754944e-38, %v4001
    %v4003 = vsel %vm4000, %v4002, %v3998
    %v4004 = vmul.f32 1.0, %v4003
    %v4005 = vxor.u32 %v3931, 2147483648
    %v4006 = vmul.f32 %v4005, 1.442695
    %v4007 = vpow.pop %v4006
    %v4008 = vadd.f32 %v4007, 1.0
    %v4009 = vrcp.pop %v4008
    %v4010 = vmul.f32 %v4008, %v4009
    %v4011 = vsub.f32 1.0, %v4010
    %v4012 = vmul.f32 %v4009, %v4011
    %v4013 = vadd.f32 %v4009, %v4012
    %vm4014 = vweird.f32 %v4008
    %vm4015 = vweird.f32 %v4009
    %vm4016 = vmor %vm4014, %vm4015
    %v4017 = vsel %vm4016, %v4009, %v4013
    %v4018 = vand.u32 2147483647, %v4008
    %vm4019 = vcmp.eq.f32.partialorder %v4018, 8.507059e+37
    %v4020 = vand.u32 %v4008, 2147483648
    %v4021 = vor.u32 1.1754944e-38, %v4020
    %v4022 = vsel %vm4019, %v4021, %v4017
    %v4023 = vmul.f32 1.0, %v4022
    %v4024 = vtanh.pop %v3957
    %v4025 = vxor.u32 %v3983, 2147483648
    %v4026 = vmul.f32 %v4025, 1.442695
    %v4027 = vpow.pop %v4026
    %v4028 = vadd.f32 %v4027, 1.0
    %v4029 = vrcp.pop %v4028
    %v4030 = vmul.f32 %v4028, %v4029
    %v4031 = vsub.f32 1.0, %v4030
    %v4032 = vmul.f32 %v4029, %v4031
    %v4033 = vadd.f32 %v4029, %v4032
    %vm4034 = vweird.f32 %v4028
    %vm4035 = vweird.f32 %v4029
    %vm4036 = vmor %vm4034, %vm4035
    %v4037 = vsel %vm4036, %v4029, %v4033
    %v4038 = vand.u32 2147483647, %v4028
    %vm4039 = vcmp.eq.f32.partialorder %v4038, 8.507059e+37
    %v4040 = vand.u32 %v4028, 2147483648
    %v4041 = vor.u32 1.1754944e-38, %v4040
    %v4042 = vsel %vm4039, %v4041, %v4037
    %v4043 = vmul.f32 1.0, %v4042
    %v4044 = vmul.f32 %v4023, %v3734
    %v4045 = vmul.f32 %v4004, %v4024
    %v4046 = vadd.f32 %v4044, %v4045
    %v4047 = vtanh.pop %v4046
    %v4048 = vmul.f32 %v4043, %v4047
    %4049 = vmatpush.bf16.msra.mxu0 %v2707
    %4050 = vmatpush.bf16.msra.mxu0 %v2703
    %4051 = vmatpush.bf16.msra.mxu0 %v2699
    %4052 = vmatpush.bf16.msra.mxu0 %v2695
    %4053 = vmatpush.bf16.msra.mxu0 %v2691
    %4054 = vmatpush.bf16.msra.mxu0 %v2687
    %4055 = vmatpush.bf16.msra.mxu0 %v2683
    %4056 = vmatpush.bf16.msra.mxu0 %v2679
    %4057 = vmatmul.bf16.gmra.mxu0 %v3878
    %v4058 = vpop.f32.mrf.mxu0
    %v4059 = vadd.f32 0.0, %v4058
    %v4060 = vpop.f32.mrf.mxu0
    %4061 = vdwg.mxu0
    %4062 = vmatpush.bf16.msra.mxu0 %v2708
    %4063 = vmatpush.bf16.msra.mxu0 %v2704
    %4064 = vmatpush.bf16.msra.mxu0 %v2700
    %4065 = vmatpush.bf16.msra.mxu0 %v2696
    %4066 = vmatpush.bf16.msra.mxu0 %v2692
    %4067 = vmatpush.bf16.msra.mxu0 %v2688
    %4068 = vmatpush.bf16.msra.mxu0 %v2684
    %4069 = vmatpush.bf16.msra.mxu0 %v2680
    %4070 = vmatmul.bf16.gmra.mxu0 %v3878
    %v4071 = vpop.f32.mrf.mxu0
    %v4072 = vadd.f32 0.0, %v4071
    %v4073 = vpop.f32.mrf.mxu0
    %4074 = vdwg.mxu0
    %4075 = vmatpush.bf16.msra.mxu0 %v2709
    %4076 = vmatpush.bf16.msra.mxu0 %v2705
    %4077 = vmatpush.bf16.msra.mxu0 %v2701
    %4078 = vmatpush.bf16.msra.mxu0 %v2697
    %4079 = vmatpush.bf16.msra.mxu0 %v2693
    %4080 = vmatpush.bf16.msra.mxu0 %v2689
    %4081 = vmatpush.bf16.msra.mxu0 %v2685
    %4082 = vmatpush.bf16.msra.mxu0 %v2681
    %4083 = vmatmul.bf16.gmra.mxu0 %v3878
    %v4084 = vpop.f32.mrf.mxu0
    %v4085 = vadd.f32 0.0, %v4084
    %v4086 = vpop.f32.mrf.mxu0
    %4087 = vdwg.mxu0
    %4088 = vmatpush.bf16.msra.mxu0 %v2710
    %4089 = vmatpush.bf16.msra.mxu0 %v2706
    %4090 = vmatpush.bf16.msra.mxu0 %v2702
    %4091 = vmatpush.bf16.msra.mxu0 %v2698
    %4092 = vmatpush.bf16.msra.mxu0 %v2694
    %4093 = vmatpush.bf16.msra.mxu0 %v2690
    %4094 = vmatpush.bf16.msra.mxu0 %v2686
    %4095 = vmatpush.bf16.msra.mxu0 %v2682
    %4096 = vmatmul.bf16.gmra.mxu0 %v3878
    %v4097 = vpop.f32.mrf.mxu0
    %v4098 = vadd.f32 0.0, %v4097
    %v4099 = vpop.f32.mrf.mxu0
    %4100 = vdwg.mxu0
    %v4105 = vrot.slane %v4059, 2
    %v4106 = vrot.slane %v4072, 2
    %v4107 = vrot.slane %v4085, 2
    %v4108 = vrot.slane %v4098, 2
    %v4113 = vadd.f32 %v2505, %v4105
    %v4114 = vadd.f32 %v2519, %v4106
    %v4115 = vadd.f32 %v2533, %v4107
    %v4116 = vadd.f32 %v2547, %v4108
    %v4117 = vxor.u32 %v4113, 2147483648
    %v4118 = vmul.f32 %v4117, 1.442695
    %v4119 = vpow.pop %v4118
    %v4120 = vadd.f32 %v4119, 1.0
    %v4121 = vrcp.pop %v4120
    %v4122 = vmul.f32 %v4120, %v4121
    %v4123 = vsub.f32 1.0, %v4122
    %v4124 = vmul.f32 %v4121, %v4123
    %v4125 = vadd.f32 %v4121, %v4124
    %vm4126 = vweird.f32 %v4120
    %vm4127 = vweird.f32 %v4121
    %vm4128 = vmor %vm4126, %vm4127
    %v4129 = vsel %vm4128, %v4121, %v4125
    %v4130 = vand.u32 2147483647, %v4120
    %vm4131 = vcmp.eq.f32.partialorder %v4130, 8.507059e+37
    %v4132 = vand.u32 %v4120, 2147483648
    %v4133 = vor.u32 1.1754944e-38, %v4132
    %v4134 = vsel %vm4131, %v4133, %v4129
    %v4135 = vmul.f32 1.0, %v4134
    %v4136 = vxor.u32 %v4114, 2147483648
    %v4137 = vmul.f32 %v4136, 1.442695
    %v4138 = vpow.pop %v4137
    %v4139 = vadd.f32 %v4138, 1.0
    %v4140 = vrcp.pop %v4139
    %v4141 = vmul.f32 %v4139, %v4140
    %v4142 = vsub.f32 1.0, %v4141
    %v4143 = vmul.f32 %v4140, %v4142
    %v4144 = vadd.f32 %v4140, %v4143
    %vm4145 = vweird.f32 %v4139
    %vm4146 = vweird.f32 %v4140
    %vm4147 = vmor %vm4145, %vm4146
    %v4148 = vsel %vm4147, %v4140, %v4144
    %v4149 = vand.u32 2147483647, %v4139
    %vm4150 = vcmp.eq.f32.partialorder %v4149, 8.507059e+37
    %v4151 = vand.u32 %v4139, 2147483648
    %v4152 = vor.u32 1.1754944e-38, %v4151
    %v4153 = vsel %vm4150, %v4152, %v4148
    %v4154 = vmul.f32 1.0, %v4153
    %v4155 = vtanh.pop %v4115
    %v4156 = vxor.u32 %v4116, 2147483648
    %v4157 = vmul.f32 %v4156, 1.442695
    %v4158 = vpow.pop %v4157
    %v4159 = vadd.f32 %v4158, 1.0
    %v4160 = vrcp.pop %v4159
    %v4161 = vmul.f32 %v4159, %v4160
    %v4162 = vsub.f32 1.0, %v4161
    %v4163 = vmul.f32 %v4160, %v4162
    %v4164 = vadd.f32 %v4160, %v4163
    %vm4165 = vweird.f32 %v4159
    %vm4166 = vweird.f32 %v4160
    %vm4167 = vmor %vm4165, %vm4166
    %v4168 = vsel %vm4167, %v4160, %v4164
    %v4169 = vand.u32 2147483647, %v4159
    %vm4170 = vcmp.eq.f32.partialorder %v4169, 8.507059e+37
    %v4171 = vand.u32 %v4159, 2147483648
    %v4172 = vor.u32 1.1754944e-38, %v4171
    %v4173 = vsel %vm4170, %v4172, %v4168
    %v4174 = vmul.f32 1.0, %v4173
    %v4176 = vrot.slane %v3868, 6
    %v4178 = vmul.f32 %v4154, %v4176
    %v4179 = vmul.f32 %v4135, %v4155
    %v4180 = vadd.f32 %v4178, %v4179
    %v4181 = vtanh.pop %v4180
    %v4182 = vmul.f32 %v4174, %v4181
    %v4184 = vrot.slane %v4048, 2
    %v4186 = vpack.c.bf16 %v4182, %v4182
    %v4187 = vpack.c.bf16 %v4184, %v4184
    %v4190 = vrot.slane %v4186, 3
    %v4191 = vrot.slane %v4187, 3
    %4194 = vmatpush.bf16.msra.mxu0 %v3158
    %4195 = vmatpush.bf16.msra.mxu0 %v3154
    %4196 = vmatpush.bf16.msra.mxu0 %v3150
    %4197 = vmatpush.bf16.msra.mxu0 %v3146
    %4198 = vmatpush.bf16.msra.mxu0 %v3142
    %4199 = vmatpush.bf16.msra.mxu0 %v3138
    %4200 = vmatpush.bf16.msra.mxu0 %v3134
    %4201 = vmatpush.bf16.msra.mxu0 %v3130
    %4202 = vmatmul.bf16.gmra.mxu0 %v4190
    %v4203 = vpop.f32.mrf.mxu0
    %v4204 = vadd.f32 %v2930, %v4203
    %v4205 = vpop.f32.mrf.mxu0
    %4206 = vdwg.mxu0
    %4207 = vmatpush.bf16.msra.mxu0 %v3190
    %4208 = vmatpush.bf16.msra.mxu0 %v3186
    %4209 = vmatpush.bf16.msra.mxu0 %v3182
    %4210 = vmatpush.bf16.msra.mxu0 %v3178
    %4211 = vmatpush.bf16.msra.mxu0 %v3174
    %4212 = vmatpush.bf16.msra.mxu0 %v3170
    %4213 = vmatpush.bf16.msra.mxu0 %v3166
    %4214 = vmatpush.bf16.msra.mxu0 %v3162
    %4215 = vmatmul.bf16.gmra.mxu0 %v4191
    %v4216 = vpop.f32.mrf.mxu0
    %v4217 = vadd.f32 %v4204, %v4216
    %v4218 = vpop.f32.mrf.mxu0
    %4219 = vdwg.mxu0
    %4220 = vmatpush.bf16.msra.mxu0 %v3159
    %4221 = vmatpush.bf16.msra.mxu0 %v3155
    %4222 = vmatpush.bf16.msra.mxu0 %v3151
    %4223 = vmatpush.bf16.msra.mxu0 %v3147
    %4224 = vmatpush.bf16.msra.mxu0 %v3143
    %4225 = vmatpush.bf16.msra.mxu0 %v3139
    %4226 = vmatpush.bf16.msra.mxu0 %v3135
    %4227 = vmatpush.bf16.msra.mxu0 %v3131
    %4228 = vmatmul.bf16.gmra.mxu0 %v4190
    %v4229 = vpop.f32.mrf.mxu0
    %v4230 = vadd.f32 %v2931, %v4229
    %v4231 = vpop.f32.mrf.mxu0
    %4232 = vdwg.mxu0
    %4233 = vmatpush.bf16.msra.mxu0 %v3191
    %4234 = vmatpush.bf16.msra.mxu0 %v3187
    %4235 = vmatpush.bf16.msra.mxu0 %v3183
    %4236 = vmatpush.bf16.msra.mxu0 %v3179
    %4237 = vmatpush.bf16.msra.mxu0 %v3175
    %4238 = vmatpush.bf16.msra.mxu0 %v3171
    %4239 = vmatpush.bf16.msra.mxu0 %v3167
    %4240 = vmatpush.bf16.msra.mxu0 %v3163
    %4241 = vmatmul.bf16.gmra.mxu0 %v4191
    %v4242 = vpop.f32.mrf.mxu0
    %v4243 = vadd.f32 %v4230, %v4242
    %v4244 = vpop.f32.mrf.mxu0
    %4245 = vdwg.mxu0
    %4246 = vmatpush.bf16.msra.mxu0 %v3160
    %4247 = vmatpush.bf16.msra.mxu0 %v3156
    %4248 = vmatpush.bf16.msra.mxu0 %v3152
    %4249 = vmatpush.bf16.msra.mxu0 %v3148
    %4250 = vmatpush.bf16.msra.mxu0 %v3144
    %4251 = vmatpush.bf16.msra.mxu0 %v3140
    %4252 = vmatpush.bf16.msra.mxu0 %v3136
    %4253 = vmatpush.bf16.msra.mxu0 %v3132
    %4254 = vmatmul.bf16.gmra.mxu0 %v4190
    %v4255 = vpop.f32.mrf.mxu0
    %v4256 = vadd.f32 %v2932, %v4255
    %v4257 = vpop.f32.mrf.mxu0
    %4258 = vdwg.mxu0
    %4259 = vmatpush.bf16.msra.mxu0 %v3192
    %4260 = vmatpush.bf16.msra.mxu0 %v3188
    %4261 = vmatpush.bf16.msra.mxu0 %v3184
    %4262 = vmatpush.bf16.msra.mxu0 %v3180
    %4263 = vmatpush.bf16.msra.mxu0 %v3176
    %4264 = vmatpush.bf16.msra.mxu0 %v3172
    %4265 = vmatpush.bf16.msra.mxu0 %v3168
    %4266 = vmatpush.bf16.msra.mxu0 %v3164
    %4267 = vmatmul.bf16.gmra.mxu0 %v4191
    %v4268 = vpop.f32.mrf.mxu0
    %v4269 = vadd.f32 %v4256, %v4268
    %v4270 = vpop.f32.mrf.mxu0
    %4271 = vdwg.mxu0
    %4272 = vmatpush.bf16.msra.mxu0 %v3161
    %4273 = vmatpush.bf16.msra.mxu0 %v3157
    %4274 = vmatpush.bf16.msra.mxu0 %v3153
    %4275 = vmatpush.bf16.msra.mxu0 %v3149
    %4276 = vmatpush.bf16.msra.mxu0 %v3145
    %4277 = vmatpush.bf16.msra.mxu0 %v3141
    %4278 = vmatpush.bf16.msra.mxu0 %v3137
    %4279 = vmatpush.bf16.msra.mxu0 %v3133
    %4280 = vmatmul.bf16.gmra.mxu0 %v4190
    %v4281 = vpop.f32.mrf.mxu0
    %v4282 = vadd.f32 %v2933, %v4281
    %v4283 = vpop.f32.mrf.mxu0
    %4284 = vdwg.mxu0
    %4285 = vmatpush.bf16.msra.mxu0 %v3193
    %4286 = vmatpush.bf16.msra.mxu0 %v3189
    %4287 = vmatpush.bf16.msra.mxu0 %v3185
    %4288 = vmatpush.bf16.msra.mxu0 %v3181
    %4289 = vmatpush.bf16.msra.mxu0 %v3177
    %4290 = vmatpush.bf16.msra.mxu0 %v3173
    %4291 = vmatpush.bf16.msra.mxu0 %v3169
    %4292 = vmatpush.bf16.msra.mxu0 %v3165
    %4293 = vmatmul.bf16.gmra.mxu0 %v4191
    %v4294 = vpop.f32.mrf.mxu0
    %v4295 = vadd.f32 %v4282, %v4294
    %v4296 = vpop.f32.mrf.mxu0
    %4297 = vdwg.mxu0
    %v4298 = vxor.u32 %v4217, 2147483648
    %v4299 = vmul.f32 %v4298, 1.442695
    %v4300 = vpow.pop %v4299
    %v4301 = vadd.f32 %v4300, 1.0
    %v4302 = vrcp.pop %v4301
    %v4303 = vmul.f32 %v4301, %v4302
    %v4304 = vsub.f32 1.0, %v4303
    %v4305 = vmul.f32 %v4302, %v4304
    %v4306 = vadd.f32 %v4302, %v4305
    %vm4307 = vweird.f32 %v4301
    %vm4308 = vweird.f32 %v4302
    %vm4309 = vmor %vm4307, %vm4308
    %v4310 = vsel %vm4309, %v4302, %v4306
    %v4311 = vand.u32 2147483647, %v4301
    %vm4312 = vcmp.eq.f32.partialorder %v4311, 8.507059e+37
    %v4313 = vand.u32 %v4301, 2147483648
    %v4314 = vor.u32 1.1754944e-38, %v4313
    %v4315 = vsel %vm4312, %v4314, %v4310
    %v4316 = vmul.f32 1.0, %v4315
    %v4317 = vxor.u32 %v4243, 2147483648
    %v4318 = vmul.f32 %v4317, 1.442695
    %v4319 = vpow.pop %v4318
    %v4320 = vadd.f32 %v4319, 1.0
    %v4321 = vrcp.pop %v4320
    %v4322 = vmul.f32 %v4320, %v4321
    %v4323 = vsub.f32 1.0, %v4322
    %v4324 = vmul.f32 %v4321, %v4323
    %v4325 = vadd.f32 %v4321, %v4324
    %vm4326 = vweird.f32 %v4320
    %vm4327 = vweird.f32 %v4321
    %vm4328 = vmor %vm4326, %vm4327
    %v4329 = vsel %vm4328, %v4321, %v4325
    %v4330 = vand.u32 2147483647, %v4320
    %vm4331 = vcmp.eq.f32.partialorder %v4330, 8.507059e+37
    %v4332 = vand.u32 %v4320, 2147483648
    %v4333 = vor.u32 1.1754944e-38, %v4332
    %v4334 = vsel %vm4331, %v4333, %v4329
    %v4335 = vmul.f32 1.0, %v4334
    %v4336 = vtanh.pop %v4269
    %v4337 = vxor.u32 %v4295, 2147483648
    %v4338 = vmul.f32 %v4337, 1.442695
    %v4339 = vpow.pop %v4338
    %v4340 = vadd.f32 %v4339, 1.0
    %v4341 = vrcp.pop %v4340
    %v4342 = vmul.f32 %v4340, %v4341
    %v4343 = vsub.f32 1.0, %v4342
    %v4344 = vmul.f32 %v4341, %v4343
    %v4345 = vadd.f32 %v4341, %v4344
    %vm4346 = vweird.f32 %v4340
    %vm4347 = vweird.f32 %v4341
    %vm4348 = vmor %vm4346, %vm4347
    %v4349 = vsel %vm4348, %v4341, %v4345
    %v4350 = vand.u32 2147483647, %v4340
    %vm4351 = vcmp.eq.f32.partialorder %v4350, 8.507059e+37
    %v4352 = vand.u32 %v4340, 2147483648
    %v4353 = vor.u32 1.1754944e-38, %v4352
    %v4354 = vsel %vm4351, %v4353, %v4349
    %v4355 = vmul.f32 1.0, %v4354
    %v4356 = vmul.f32 %v4335, %v4046
    %v4357 = vmul.f32 %v4316, %v4336
    %v4358 = vadd.f32 %v4356, %v4357
    %v4359 = vtanh.pop %v4358
    %v4360 = vmul.f32 %v4355, %v4359
    %4361 = vmatpush.bf16.msra.mxu0 %v2707
    %4362 = vmatpush.bf16.msra.mxu0 %v2703
    %4363 = vmatpush.bf16.msra.mxu0 %v2699
    %4364 = vmatpush.bf16.msra.mxu0 %v2695
    %4365 = vmatpush.bf16.msra.mxu0 %v2691
    %4366 = vmatpush.bf16.msra.mxu0 %v2687
    %4367 = vmatpush.bf16.msra.mxu0 %v2683
    %4368 = vmatpush.bf16.msra.mxu0 %v2679
    %4369 = vmatmul.bf16.gmra.mxu0 %v4190
    %v4370 = vpop.f32.mrf.mxu0
    %v4371 = vadd.f32 0.0, %v4370
    %v4372 = vpop.f32.mrf.mxu0
    %4373 = vdwg.mxu0
    %4374 = vmatpush.bf16.msra.mxu0 %v2708
    %4375 = vmatpush.bf16.msra.mxu0 %v2704
    %4376 = vmatpush.bf16.msra.mxu0 %v2700
    %4377 = vmatpush.bf16.msra.mxu0 %v2696
    %4378 = vmatpush.bf16.msra.mxu0 %v2692
    %4379 = vmatpush.bf16.msra.mxu0 %v2688
    %4380 = vmatpush.bf16.msra.mxu0 %v2684
    %4381 = vmatpush.bf16.msra.mxu0 %v2680
    %4382 = vmatmul.bf16.gmra.mxu0 %v4190
    %v4383 = vpop.f32.mrf.mxu0
    %v4384 = vadd.f32 0.0, %v4383
    %v4385 = vpop.f32.mrf.mxu0
    %4386 = vdwg.mxu0
    %4387 = vmatpush.bf16.msra.mxu0 %v2709
    %4388 = vmatpush.bf16.msra.mxu0 %v2705
    %4389 = vmatpush.bf16.msra.mxu0 %v2701
    %4390 = vmatpush.bf16.msra.mxu0 %v2697
    %4391 = vmatpush.bf16.msra.mxu0 %v2693
    %4392 = vmatpush.bf16.msra.mxu0 %v2689
    %4393 = vmatpush.bf16.msra.mxu0 %v2685
    %4394 = vmatpush.bf16.msra.mxu0 %v2681
    %4395 = vmatmul.bf16.gmra.mxu0 %v4190
    %v4396 = vpop.f32.mrf.mxu0
    %v4397 = vadd.f32 0.0, %v4396
    %v4398 = vpop.f32.mrf.mxu0
    %4399 = vdwg.mxu0
    %4400 = vmatpush.bf16.msra.mxu0 %v2710
    %4401 = vmatpush.bf16.msra.mxu0 %v2706
    %4402 = vmatpush.bf16.msra.mxu0 %v2702
    %4403 = vmatpush.bf16.msra.mxu0 %v2698
    %4404 = vmatpush.bf16.msra.mxu0 %v2694
    %4405 = vmatpush.bf16.msra.mxu0 %v2690
    %4406 = vmatpush.bf16.msra.mxu0 %v2686
    %4407 = vmatpush.bf16.msra.mxu0 %v2682
    %4408 = vmatmul.bf16.gmra.mxu0 %v4190
    %v4409 = vpop.f32.mrf.mxu0
    %v4410 = vadd.f32 0.0, %v4409
    %v4411 = vpop.f32.mrf.mxu0
    %4412 = vdwg.mxu0
    %v4413 = vadd.f32 %v2507, %v4371
    %v4414 = vadd.f32 %v2521, %v4384
    %v4415 = vadd.f32 %v2535, %v4397
    %v4416 = vadd.f32 %v2549, %v4410
    %v4417 = vxor.u32 %v4413, 2147483648
    %v4418 = vmul.f32 %v4417, 1.442695
    %v4419 = vpow.pop %v4418
    %v4420 = vadd.f32 %v4419, 1.0
    %v4421 = vrcp.pop %v4420
    %v4422 = vmul.f32 %v4420, %v4421
    %v4423 = vsub.f32 1.0, %v4422
    %v4424 = vmul.f32 %v4421, %v4423
    %v4425 = vadd.f32 %v4421, %v4424
    %vm4426 = vweird.f32 %v4420
    %vm4427 = vweird.f32 %v4421
    %vm4428 = vmor %vm4426, %vm4427
    %v4429 = vsel %vm4428, %v4421, %v4425
    %v4430 = vand.u32 2147483647, %v4420
    %vm4431 = vcmp.eq.f32.partialorder %v4430, 8.507059e+37
    %v4432 = vand.u32 %v4420, 2147483648
    %v4433 = vor.u32 1.1754944e-38, %v4432
    %v4434 = vsel %vm4431, %v4433, %v4429
    %v4435 = vmul.f32 1.0, %v4434
    %v4436 = vxor.u32 %v4414, 2147483648
    %v4437 = vmul.f32 %v4436, 1.442695
    %v4438 = vpow.pop %v4437
    %v4439 = vadd.f32 %v4438, 1.0
    %v4440 = vrcp.pop %v4439
    %v4441 = vmul.f32 %v4439, %v4440
    %v4442 = vsub.f32 1.0, %v4441
    %v4443 = vmul.f32 %v4440, %v4442
    %v4444 = vadd.f32 %v4440, %v4443
    %vm4445 = vweird.f32 %v4439
    %vm4446 = vweird.f32 %v4440
    %vm4447 = vmor %vm4445, %vm4446
    %v4448 = vsel %vm4447, %v4440, %v4444
    %v4449 = vand.u32 2147483647, %v4439
    %vm4450 = vcmp.eq.f32.partialorder %v4449, 8.507059e+37
    %v4451 = vand.u32 %v4439, 2147483648
    %v4452 = vor.u32 1.1754944e-38, %v4451
    %v4453 = vsel %vm4450, %v4452, %v4448
    %v4454 = vmul.f32 1.0, %v4453
    %v4455 = vtanh.pop %v4415
    %v4456 = vxor.u32 %v4416, 2147483648
    %v4457 = vmul.f32 %v4456, 1.442695
    %v4458 = vpow.pop %v4457
    %v4459 = vadd.f32 %v4458, 1.0
    %v4460 = vrcp.pop %v4459
    %v4461 = vmul.f32 %v4459, %v4460
    %v4462 = vsub.f32 1.0, %v4461
    %v4463 = vmul.f32 %v4460, %v4462
    %v4464 = vadd.f32 %v4460, %v4463
    %vm4465 = vweird.f32 %v4459
    %vm4466 = vweird.f32 %v4460
    %vm4467 = vmor %vm4465, %vm4466
    %v4468 = vsel %vm4467, %v4460, %v4464
    %v4469 = vand.u32 2147483647, %v4459
    %vm4470 = vcmp.eq.f32.partialorder %v4469, 8.507059e+37
    %v4471 = vand.u32 %v4459, 2147483648
    %v4472 = vor.u32 1.1754944e-38, %v4471
    %v4473 = vsel %vm4470, %v4472, %v4468
    %v4474 = vmul.f32 1.0, %v4473
    %v4476 = vrot.slane %v4180, 6
    %v4478 = vmul.f32 %v4454, %v4476
    %v4479 = vmul.f32 %v4435, %v4455
    %v4480 = vadd.f32 %v4478, %v4479
    %v4481 = vtanh.pop %v4480
    %v4482 = vmul.f32 %v4474, %v4481
    %v4483 = vpack.c.bf16 %v4482, %v4482
    %v4484 = vpack.c.bf16 %v4360, %v4360
    %4485 = vmatpush.bf16.msra.mxu0 %v3158
    %4486 = vmatpush.bf16.msra.mxu0 %v3154
    %4487 = vmatpush.bf16.msra.mxu0 %v3150
    %4488 = vmatpush.bf16.msra.mxu0 %v3146
    %4489 = vmatpush.bf16.msra.mxu0 %v3142
    %4490 = vmatpush.bf16.msra.mxu0 %v3138
    %4491 = vmatpush.bf16.msra.mxu0 %v3134
    %4492 = vmatpush.bf16.msra.mxu0 %v3130
    %4493 = vmatmul.bf16.gmra.mxu0 %v4483
    %v4494 = vpop.f32.mrf.mxu0
    %v4495 = vadd.f32 %v2930, %v4494
    %v4496 = vpop.f32.mrf.mxu0
    %4497 = vdwg.mxu0
    %4498 = vmatpush.bf16.msra.mxu0 %v3190
    %4499 = vmatpush.bf16.msra.mxu0 %v3186
    %4500 = vmatpush.bf16.msra.mxu0 %v3182
    %4501 = vmatpush.bf16.msra.mxu0 %v3178
    %4502 = vmatpush.bf16.msra.mxu0 %v3174
    %4503 = vmatpush.bf16.msra.mxu0 %v3170
    %4504 = vmatpush.bf16.msra.mxu0 %v3166
    %4505 = vmatpush.bf16.msra.mxu0 %v3162
    %4506 = vmatmul.bf16.gmra.mxu0 %v4484
    %v4507 = vpop.f32.mrf.mxu0
    %v4508 = vadd.f32 %v4495, %v4507
    %v4509 = vpop.f32.mrf.mxu0
    %4510 = vdwg.mxu0
    %4511 = vmatpush.bf16.msra.mxu0 %v3159
    %4512 = vmatpush.bf16.msra.mxu0 %v3155
    %4513 = vmatpush.bf16.msra.mxu0 %v3151
    %4514 = vmatpush.bf16.msra.mxu0 %v3147
    %4515 = vmatpush.bf16.msra.mxu0 %v3143
    %4516 = vmatpush.bf16.msra.mxu0 %v3139
    %4517 = vmatpush.bf16.msra.mxu0 %v3135
    %4518 = vmatpush.bf16.msra.mxu0 %v3131
    %4519 = vmatmul.bf16.gmra.mxu0 %v4483
    %v4520 = vpop.f32.mrf.mxu0
    %v4521 = vadd.f32 %v2931, %v4520
    %v4522 = vpop.f32.mrf.mxu0
    %4523 = vdwg.mxu0
    %4524 = vmatpush.bf16.msra.mxu0 %v3191
    %4525 = vmatpush.bf16.msra.mxu0 %v3187
    %4526 = vmatpush.bf16.msra.mxu0 %v3183
    %4527 = vmatpush.bf16.msra.mxu0 %v3179
    %4528 = vmatpush.bf16.msra.mxu0 %v3175
    %4529 = vmatpush.bf16.msra.mxu0 %v3171
    %4530 = vmatpush.bf16.msra.mxu0 %v3167
    %4531 = vmatpush.bf16.msra.mxu0 %v3163
    %4532 = vmatmul.bf16.gmra.mxu0 %v4484
    %v4533 = vpop.f32.mrf.mxu0
    %v4534 = vadd.f32 %v4521, %v4533
    %v4535 = vpop.f32.mrf.mxu0
    %4536 = vdwg.mxu0
    %4537 = vmatpush.bf16.msra.mxu0 %v3160
    %4538 = vmatpush.bf16.msra.mxu0 %v3156
    %4539 = vmatpush.bf16.msra.mxu0 %v3152
    %4540 = vmatpush.bf16.msra.mxu0 %v3148
    %4541 = vmatpush.bf16.msra.mxu0 %v3144
    %4542 = vmatpush.bf16.msra.mxu0 %v3140
    %4543 = vmatpush.bf16.msra.mxu0 %v3136
    %4544 = vmatpush.bf16.msra.mxu0 %v3132
    %4545 = vmatmul.bf16.gmra.mxu0 %v4483
    %v4546 = vpop.f32.mrf.mxu0
    %v4547 = vadd.f32 %v2932, %v4546
    %v4548 = vpop.f32.mrf.mxu0
    %4549 = vdwg.mxu0
    %4550 = vmatpush.bf16.msra.mxu0 %v3192
    %4551 = vmatpush.bf16.msra.mxu0 %v3188
    %4552 = vmatpush.bf16.msra.mxu0 %v3184
    %4553 = vmatpush.bf16.msra.mxu0 %v3180
    %4554 = vmatpush.bf16.msra.mxu0 %v3176
    %4555 = vmatpush.bf16.msra.mxu0 %v3172
    %4556 = vmatpush.bf16.msra.mxu0 %v3168
    %4557 = vmatpush.bf16.msra.mxu0 %v3164
    %4558 = vmatmul.bf16.gmra.mxu0 %v4484
    %v4559 = vpop.f32.mrf.mxu0
    %v4560 = vadd.f32 %v4547, %v4559
    %v4561 = vpop.f32.mrf.mxu0
    %4562 = vdwg.mxu0
    %4563 = vmatpush.bf16.msra.mxu0 %v3161
    %4564 = vmatpush.bf16.msra.mxu0 %v3157
    %4565 = vmatpush.bf16.msra.mxu0 %v3153
    %4566 = vmatpush.bf16.msra.mxu0 %v3149
    %4567 = vmatpush.bf16.msra.mxu0 %v3145
    %4568 = vmatpush.bf16.msra.mxu0 %v3141
    %4569 = vmatpush.bf16.msra.mxu0 %v3137
    %4570 = vmatpush.bf16.msra.mxu0 %v3133
    %4571 = vmatmul.bf16.gmra.mxu0 %v4483
    %v4572 = vpop.f32.mrf.mxu0
    %v4573 = vadd.f32 %v2933, %v4572
    %v4574 = vpop.f32.mrf.mxu0
    %4575 = vdwg.mxu0
    %4576 = vmatpush.bf16.msra.mxu0 %v3193
    %4577 = vmatpush.bf16.msra.mxu0 %v3189
    %4578 = vmatpush.bf16.msra.mxu0 %v3185
    %4579 = vmatpush.bf16.msra.mxu0 %v3181
    %4580 = vmatpush.bf16.msra.mxu0 %v3177
    %4581 = vmatpush.bf16.msra.mxu0 %v3173
    %4582 = vmatpush.bf16.msra.mxu0 %v3169
    %4583 = vmatpush.bf16.msra.mxu0 %v3165
    %4584 = vmatmul.bf16.gmra.mxu0 %v4484
    %v4585 = vpop.f32.mrf.mxu0
    %v4586 = vadd.f32 %v4573, %v4585
    %v4587 = vpop.f32.mrf.mxu0
    %4588 = vdwg.mxu0
    %v4589 = vxor.u32 %v4508, 2147483648
    %v4590 = vmul.f32 %v4589, 1.442695
    %v4591 = vpow.pop %v4590
    %v4592 = vadd.f32 %v4591, 1.0
    %v4593 = vrcp.pop %v4592
    %v4594 = vmul.f32 %v4592, %v4593
    %v4595 = vsub.f32 1.0, %v4594
    %v4596 = vmul.f32 %v4593, %v4595
    %v4597 = vadd.f32 %v4593, %v4596
    %vm4598 = vweird.f32 %v4592
    %vm4599 = vweird.f32 %v4593
    %vm4600 = vmor %vm4598, %vm4599
    %v4601 = vsel %vm4600, %v4593, %v4597
    %v4602 = vand.u32 2147483647, %v4592
    %vm4603 = vcmp.eq.f32.partialorder %v4602, 8.507059e+37
    %v4604 = vand.u32 %v4592, 2147483648
    %v4605 = vor.u32 1.1754944e-38, %v4604
    %v4606 = vsel %vm4603, %v4605, %v4601
    %v4607 = vmul.f32 1.0, %v4606
    %v4608 = vxor.u32 %v4534, 2147483648
    %v4609 = vmul.f32 %v4608, 1.442695
    %v4610 = vpow.pop %v4609
    %v4611 = vadd.f32 %v4610, 1.0
    %v4612 = vrcp.pop %v4611
    %v4613 = vmul.f32 %v4611, %v4612
    %v4614 = vsub.f32 1.0, %v4613
    %v4615 = vmul.f32 %v4612, %v4614
    %v4616 = vadd.f32 %v4612, %v4615
    %vm4617 = vweird.f32 %v4611
    %vm4618 = vweird.f32 %v4612
    %vm4619 = vmor %vm4617, %vm4618
    %v4620 = vsel %vm4619, %v4612, %v4616
    %v4621 = vand.u32 2147483647, %v4611
    %vm4622 = vcmp.eq.f32.partialorder %v4621, 8.507059e+37
    %v4623 = vand.u32 %v4611, 2147483648
    %v4624 = vor.u32 1.1754944e-38, %v4623
    %v4625 = vsel %vm4622, %v4624, %v4620
    %v4626 = vmul.f32 1.0, %v4625
    %v4627 = vtanh.pop %v4560
    %v4628 = vxor.u32 %v4586, 2147483648
    %v4629 = vmul.f32 %v4628, 1.442695
    %v4630 = vpow.pop %v4629
    %v4631 = vadd.f32 %v4630, 1.0
    %v4632 = vrcp.pop %v4631
    %v4633 = vmul.f32 %v4631, %v4632
    %v4634 = vsub.f32 1.0, %v4633
    %v4635 = vmul.f32 %v4632, %v4634
    %v4636 = vadd.f32 %v4632, %v4635
    %vm4637 = vweird.f32 %v4631
    %vm4638 = vweird.f32 %v4632
    %vm4639 = vmor %vm4637, %vm4638
    %v4640 = vsel %vm4639, %v4632, %v4636
    %v4641 = vand.u32 2147483647, %v4631
    %vm4642 = vcmp.eq.f32.partialorder %v4641, 8.507059e+37
    %v4643 = vand.u32 %v4631, 2147483648
    %v4644 = vor.u32 1.1754944e-38, %v4643
    %v4645 = vsel %vm4642, %v4644, %v4640
    %v4646 = vmul.f32 1.0, %v4645
    %v4647 = vmul.f32 %v4626, %v4358
    %v4648 = vmul.f32 %v4607, %v4627
    %v4649 = vadd.f32 %v4647, %v4648
    %v4650 = vtanh.pop %v4649
    %v4651 = vmul.f32 %v4646, %v4650
    %4652 = vmatpush.bf16.msra.mxu0 %v2707
    %4653 = vmatpush.bf16.msra.mxu0 %v2703
    %4654 = vmatpush.bf16.msra.mxu0 %v2699
    %4655 = vmatpush.bf16.msra.mxu0 %v2695
    %4656 = vmatpush.bf16.msra.mxu0 %v2691
    %4657 = vmatpush.bf16.msra.mxu0 %v2687
    %4658 = vmatpush.bf16.msra.mxu0 %v2683
    %4659 = vmatpush.bf16.msra.mxu0 %v2679
    %4660 = vmatmul.bf16.gmra.mxu0 %v4483
    %v4661 = vpop.f32.mrf.mxu0
    %v4662 = vadd.f32 0.0, %v4661
    %v4663 = vpop.f32.mrf.mxu0
    %4664 = vdwg.mxu0
    %4665 = vmatpush.bf16.msra.mxu0 %v2708
    %4666 = vmatpush.bf16.msra.mxu0 %v2704
    %4667 = vmatpush.bf16.msra.mxu0 %v2700
    %4668 = vmatpush.bf16.msra.mxu0 %v2696
    %4669 = vmatpush.bf16.msra.mxu0 %v2692
    %4670 = vmatpush.bf16.msra.mxu0 %v2688
    %4671 = vmatpush.bf16.msra.mxu0 %v2684
    %4672 = vmatpush.bf16.msra.mxu0 %v2680
    %4673 = vmatmul.bf16.gmra.mxu0 %v4483
    %v4674 = vpop.f32.mrf.mxu0
    %v4675 = vadd.f32 0.0, %v4674
    %v4676 = vpop.f32.mrf.mxu0
    %4677 = vdwg.mxu0
    %4678 = vmatpush.bf16.msra.mxu0 %v2709
    %4679 = vmatpush.bf16.msra.mxu0 %v2705
    %4680 = vmatpush.bf16.msra.mxu0 %v2701
    %4681 = vmatpush.bf16.msra.mxu0 %v2697
    %4682 = vmatpush.bf16.msra.mxu0 %v2693
    %4683 = vmatpush.bf16.msra.mxu0 %v2689
    %4684 = vmatpush.bf16.msra.mxu0 %v2685
    %4685 = vmatpush.bf16.msra.mxu0 %v2681
    %4686 = vmatmul.bf16.gmra.mxu0 %v4483
    %v4687 = vpop.f32.mrf.mxu0
    %v4688 = vadd.f32 0.0, %v4687
    %v4689 = vpop.f32.mrf.mxu0
    %4690 = vdwg.mxu0
    %4691 = vmatpush.bf16.msra.mxu0 %v2710
    %4692 = vmatpush.bf16.msra.mxu0 %v2706
    %4693 = vmatpush.bf16.msra.mxu0 %v2702
    %4694 = vmatpush.bf16.msra.mxu0 %v2698
    %4695 = vmatpush.bf16.msra.mxu0 %v2694
    %4696 = vmatpush.bf16.msra.mxu0 %v2690
    %4697 = vmatpush.bf16.msra.mxu0 %v2686
    %4698 = vmatpush.bf16.msra.mxu0 %v2682
    %4699 = vmatmul.bf16.gmra.mxu0 %v4483
    %v4700 = vpop.f32.mrf.mxu0
    %v4701 = vadd.f32 0.0, %v4700
    %v4702 = vpop.f32.mrf.mxu0
    %4703 = vdwg.mxu0
    %v4708 = vrot.slane %v4662, 6
    %v4709 = vrot.slane %v4675, 6
    %v4710 = vrot.slane %v4688, 6
    %v4711 = vrot.slane %v4701, 6
    %v4716 = vadd.f32 %v2507, %v4708
    %v4717 = vadd.f32 %v2521, %v4709
    %v4718 = vadd.f32 %v2535, %v4710
    %v4719 = vadd.f32 %v2549, %v4711
    %v4720 = vxor.u32 %v4716, 2147483648
    %v4721 = vmul.f32 %v4720, 1.442695
    %v4722 = vpow.pop %v4721
    %v4723 = vadd.f32 %v4722, 1.0
    %v4724 = vrcp.pop %v4723
    %v4725 = vmul.f32 %v4723, %v4724
    %v4726 = vsub.f32 1.0, %v4725
    %v4727 = vmul.f32 %v4724, %v4726
    %v4728 = vadd.f32 %v4724, %v4727
    %vm4729 = vweird.f32 %v4723
    %vm4730 = vweird.f32 %v4724
    %vm4731 = vmor %vm4729, %vm4730
    %v4732 = vsel %vm4731, %v4724, %v4728
    %v4733 = vand.u32 2147483647, %v4723
    %vm4734 = vcmp.eq.f32.partialorder %v4733, 8.507059e+37
    %v4735 = vand.u32 %v4723, 2147483648
    %v4736 = vor.u32 1.1754944e-38, %v4735
    %v4737 = vsel %vm4734, %v4736, %v4732
    %v4738 = vmul.f32 1.0, %v4737
    %v4739 = vxor.u32 %v4717, 2147483648
    %v4740 = vmul.f32 %v4739, 1.442695
    %v4741 = vpow.pop %v4740
    %v4742 = vadd.f32 %v4741, 1.0
    %v4743 = vrcp.pop %v4742
    %v4744 = vmul.f32 %v4742, %v4743
    %v4745 = vsub.f32 1.0, %v4744
    %v4746 = vmul.f32 %v4743, %v4745
    %v4747 = vadd.f32 %v4743, %v4746
    %vm4748 = vweird.f32 %v4742
    %vm4749 = vweird.f32 %v4743
    %vm4750 = vmor %vm4748, %vm4749
    %v4751 = vsel %vm4750, %v4743, %v4747
    %v4752 = vand.u32 2147483647, %v4742
    %vm4753 = vcmp.eq.f32.partialorder %v4752, 8.507059e+37
    %v4754 = vand.u32 %v4742, 2147483648
    %v4755 = vor.u32 1.1754944e-38, %v4754
    %v4756 = vsel %vm4753, %v4755, %v4751
    %v4757 = vmul.f32 1.0, %v4756
    %v4758 = vtanh.pop %v4718
    %v4759 = vxor.u32 %v4719, 2147483648
    %v4760 = vmul.f32 %v4759, 1.442695
    %v4761 = vpow.pop %v4760
    %v4762 = vadd.f32 %v4761, 1.0
    %v4763 = vrcp.pop %v4762
    %v4764 = vmul.f32 %v4762, %v4763
    %v4765 = vsub.f32 1.0, %v4764
    %v4766 = vmul.f32 %v4763, %v4765
    %v4767 = vadd.f32 %v4763, %v4766
    %vm4768 = vweird.f32 %v4762
    %vm4769 = vweird.f32 %v4763
    %vm4770 = vmor %vm4768, %vm4769
    %v4771 = vsel %vm4770, %v4763, %v4767
    %v4772 = vand.u32 2147483647, %v4762
    %vm4773 = vcmp.eq.f32.partialorder %v4772, 8.507059e+37
    %v4774 = vand.u32 %v4762, 2147483648
    %v4775 = vor.u32 1.1754944e-38, %v4774
    %v4776 = vsel %vm4773, %v4775, %v4771
    %v4777 = vmul.f32 1.0, %v4776
    %v4779 = vrot.slane %v4480, 6
    %v4781 = vmul.f32 %v4757, %v4779
    %v4782 = vmul.f32 %v4738, %v4758
    %v4783 = vadd.f32 %v4781, %v4782
    %v4784 = vtanh.pop %v4783
    %v4785 = vmul.f32 %v4777, %v4784
    %v4787 = vrot.slane %v4651, 6
    %v4789 = vpack.c.bf16 %v4785, %v4785
    %v4790 = vpack.c.bf16 %v4787, %v4787
    %v4793 = vrot.slane %v4789, 1
    %v4794 = vrot.slane %v4790, 1
    %4797 = vmatpush.bf16.msra.mxu0 %v3158
    %4798 = vmatpush.bf16.msra.mxu0 %v3154
    %4799 = vmatpush.bf16.msra.mxu0 %v3150
    %4800 = vmatpush.bf16.msra.mxu0 %v3146
    %4801 = vmatpush.bf16.msra.mxu0 %v3142
    %4802 = vmatpush.bf16.msra.mxu0 %v3138
    %4803 = vmatpush.bf16.msra.mxu0 %v3134
    %4804 = vmatpush.bf16.msra.mxu0 %v3130
    %4805 = vmatmul.bf16.gmra.mxu0 %v4793
    %v4806 = vpop.f32.mrf.mxu0
    %v4807 = vadd.f32 %v2930, %v4806
    %v4808 = vpop.f32.mrf.mxu0
    %4809 = vdwg.mxu0
    %4810 = vmatpush.bf16.msra.mxu0 %v3190
    %4811 = vmatpush.bf16.msra.mxu0 %v3186
    %4812 = vmatpush.bf16.msra.mxu0 %v3182
    %4813 = vmatpush.bf16.msra.mxu0 %v3178
    %4814 = vmatpush.bf16.msra.mxu0 %v3174
    %4815 = vmatpush.bf16.msra.mxu0 %v3170
    %4816 = vmatpush.bf16.msra.mxu0 %v3166
    %4817 = vmatpush.bf16.msra.mxu0 %v3162
    %4818 = vmatmul.bf16.gmra.mxu0 %v4794
    %v4819 = vpop.f32.mrf.mxu0
    %v4820 = vadd.f32 %v4807, %v4819
    %v4821 = vpop.f32.mrf.mxu0
    %4822 = vdwg.mxu0
    %4823 = vmatpush.bf16.msra.mxu0 %v3159
    %4824 = vmatpush.bf16.msra.mxu0 %v3155
    %4825 = vmatpush.bf16.msra.mxu0 %v3151
    %4826 = vmatpush.bf16.msra.mxu0 %v3147
    %4827 = vmatpush.bf16.msra.mxu0 %v3143
    %4828 = vmatpush.bf16.msra.mxu0 %v3139
    %4829 = vmatpush.bf16.msra.mxu0 %v3135
    %4830 = vmatpush.bf16.msra.mxu0 %v3131
    %4831 = vmatmul.bf16.gmra.mxu0 %v4793
    %v4832 = vpop.f32.mrf.mxu0
    %v4833 = vadd.f32 %v2931, %v4832
    %v4834 = vpop.f32.mrf.mxu0
    %4835 = vdwg.mxu0
    %4836 = vmatpush.bf16.msra.mxu0 %v3191
    %4837 = vmatpush.bf16.msra.mxu0 %v3187
    %4838 = vmatpush.bf16.msra.mxu0 %v3183
    %4839 = vmatpush.bf16.msra.mxu0 %v3179
    %4840 = vmatpush.bf16.msra.mxu0 %v3175
    %4841 = vmatpush.bf16.msra.mxu0 %v3171
    %4842 = vmatpush.bf16.msra.mxu0 %v3167
    %4843 = vmatpush.bf16.msra.mxu0 %v3163
    %4844 = vmatmul.bf16.gmra.mxu0 %v4794
    %v4845 = vpop.f32.mrf.mxu0
    %v4846 = vadd.f32 %v4833, %v4845
    %v4847 = vpop.f32.mrf.mxu0
    %4848 = vdwg.mxu0
    %4849 = vmatpush.bf16.msra.mxu0 %v3160
    %4850 = vmatpush.bf16.msra.mxu0 %v3156
    %4851 = vmatpush.bf16.msra.mxu0 %v3152
    %4852 = vmatpush.bf16.msra.mxu0 %v3148
    %4853 = vmatpush.bf16.msra.mxu0 %v3144
    %4854 = vmatpush.bf16.msra.mxu0 %v3140
    %4855 = vmatpush.bf16.msra.mxu0 %v3136
    %4856 = vmatpush.bf16.msra.mxu0 %v3132
    %4857 = vmatmul.bf16.gmra.mxu0 %v4793
    %v4858 = vpop.f32.mrf.mxu0
    %v4859 = vadd.f32 %v2932, %v4858
    %v4860 = vpop.f32.mrf.mxu0
    %4861 = vdwg.mxu0
    %4862 = vmatpush.bf16.msra.mxu0 %v3192
    %4863 = vmatpush.bf16.msra.mxu0 %v3188
    %4864 = vmatpush.bf16.msra.mxu0 %v3184
    %4865 = vmatpush.bf16.msra.mxu0 %v3180
    %4866 = vmatpush.bf16.msra.mxu0 %v3176
    %4867 = vmatpush.bf16.msra.mxu0 %v3172
    %4868 = vmatpush.bf16.msra.mxu0 %v3168
    %4869 = vmatpush.bf16.msra.mxu0 %v3164
    %4870 = vmatmul.bf16.gmra.mxu0 %v4794
    %v4871 = vpop.f32.mrf.mxu0
    %v4872 = vadd.f32 %v4859, %v4871
    %v4873 = vpop.f32.mrf.mxu0
    %4874 = vdwg.mxu0
    %4875 = vmatpush.bf16.msra.mxu0 %v3161
    %4876 = vmatpush.bf16.msra.mxu0 %v3157
    %4877 = vmatpush.bf16.msra.mxu0 %v3153
    %4878 = vmatpush.bf16.msra.mxu0 %v3149
    %4879 = vmatpush.bf16.msra.mxu0 %v3145
    %4880 = vmatpush.bf16.msra.mxu0 %v3141
    %4881 = vmatpush.bf16.msra.mxu0 %v3137
    %4882 = vmatpush.bf16.msra.mxu0 %v3133
    %4883 = vmatmul.bf16.gmra.mxu0 %v4793
    %v4884 = vpop.f32.mrf.mxu0
    %v4885 = vadd.f32 %v2933, %v4884
    %v4886 = vpop.f32.mrf.mxu0
    %4887 = vdwg.mxu0
    %4888 = vmatpush.bf16.msra.mxu0 %v3193
    %4889 = vmatpush.bf16.msra.mxu0 %v3189
    %4890 = vmatpush.bf16.msra.mxu0 %v3185
    %4891 = vmatpush.bf16.msra.mxu0 %v3181
    %4892 = vmatpush.bf16.msra.mxu0 %v3177
    %4893 = vmatpush.bf16.msra.mxu0 %v3173
    %4894 = vmatpush.bf16.msra.mxu0 %v3169
    %4895 = vmatpush.bf16.msra.mxu0 %v3165
    %4896 = vmatmul.bf16.gmra.mxu0 %v4794
    %v4897 = vpop.f32.mrf.mxu0
    %v4898 = vadd.f32 %v4885, %v4897
    %v4899 = vpop.f32.mrf.mxu0
    %4900 = vdwg.mxu0
    %v4901 = vxor.u32 %v4820, 2147483648
    %v4902 = vmul.f32 %v4901, 1.442695
    %v4903 = vpow.pop %v4902
    %v4904 = vadd.f32 %v4903, 1.0
    %v4905 = vrcp.pop %v4904
    %v4906 = vmul.f32 %v4904, %v4905
    %v4907 = vsub.f32 1.0, %v4906
    %v4908 = vmul.f32 %v4905, %v4907
    %v4909 = vadd.f32 %v4905, %v4908
    %vm4910 = vweird.f32 %v4904
    %vm4911 = vweird.f32 %v4905
    %vm4912 = vmor %vm4910, %vm4911
    %v4913 = vsel %vm4912, %v4905, %v4909
    %v4914 = vand.u32 2147483647, %v4904
    %vm4915 = vcmp.eq.f32.partialorder %v4914, 8.507059e+37
    %v4916 = vand.u32 %v4904, 2147483648
    %v4917 = vor.u32 1.1754944e-38, %v4916
    %v4918 = vsel %vm4915, %v4917, %v4913
    %v4919 = vmul.f32 1.0, %v4918
    %v4920 = vxor.u32 %v4846, 2147483648
    %v4921 = vmul.f32 %v4920, 1.442695
    %v4922 = vpow.pop %v4921
    %v4923 = vadd.f32 %v4922, 1.0
    %v4924 = vrcp.pop %v4923
    %v4925 = vmul.f32 %v4923, %v4924
    %v4926 = vsub.f32 1.0, %v4925
    %v4927 = vmul.f32 %v4924, %v4926
    %v4928 = vadd.f32 %v4924, %v4927
    %vm4929 = vweird.f32 %v4923
    %vm4930 = vweird.f32 %v4924
    %vm4931 = vmor %vm4929, %vm4930
    %v4932 = vsel %vm4931, %v4924, %v4928
    %v4933 = vand.u32 2147483647, %v4923
    %vm4934 = vcmp.eq.f32.partialorder %v4933, 8.507059e+37
    %v4935 = vand.u32 %v4923, 2147483648
    %v4936 = vor.u32 1.1754944e-38, %v4935
    %v4937 = vsel %vm4934, %v4936, %v4932
    %v4938 = vmul.f32 1.0, %v4937
    %v4939 = vtanh.pop %v4872
    %v4940 = vxor.u32 %v4898, 2147483648
    %v4941 = vmul.f32 %v4940, 1.442695
    %v4942 = vpow.pop %v4941
    %v4943 = vadd.f32 %v4942, 1.0
    %v4944 = vrcp.pop %v4943
    %v4945 = vmul.f32 %v4943, %v4944
    %v4946 = vsub.f32 1.0, %v4945
    %v4947 = vmul.f32 %v4944, %v4946
    %v4948 = vadd.f32 %v4944, %v4947
    %vm4949 = vweird.f32 %v4943
    %vm4950 = vweird.f32 %v4944
    %vm4951 = vmor %vm4949, %vm4950
    %v4952 = vsel %vm4951, %v4944, %v4948
    %v4953 = vand.u32 2147483647, %v4943
    %vm4954 = vcmp.eq.f32.partialorder %v4953, 8.507059e+37
    %v4955 = vand.u32 %v4943, 2147483648
    %v4956 = vor.u32 1.1754944e-38, %v4955
    %v4957 = vsel %vm4954, %v4956, %v4952
    %v4958 = vmul.f32 1.0, %v4957
    %v4959 = vmul.f32 %v4938, %v4649
    %v4960 = vmul.f32 %v4919, %v4939
    %v4961 = vadd.f32 %v4959, %v4960
    %v4962 = vtanh.pop %v4961
    %v4963 = vmul.f32 %v4958, %v4962
    %4964 = vmatpush.bf16.msra.mxu0 %v2707
    %4965 = vmatpush.bf16.msra.mxu0 %v2703
    %4966 = vmatpush.bf16.msra.mxu0 %v2699
    %4967 = vmatpush.bf16.msra.mxu0 %v2695
    %4968 = vmatpush.bf16.msra.mxu0 %v2691
    %4969 = vmatpush.bf16.msra.mxu0 %v2687
    %4970 = vmatpush.bf16.msra.mxu0 %v2683
    %4971 = vmatpush.bf16.msra.mxu0 %v2679
    %4972 = vmatmul.bf16.gmra.mxu0 %v4793
    %v4973 = vpop.f32.mrf.mxu0
    %v4974 = vadd.f32 0.0, %v4973
    %v4975 = vpop.f32.mrf.mxu0
    %4976 = vdwg.mxu0
    %4977 = vmatpush.bf16.msra.mxu0 %v2708
    %4978 = vmatpush.bf16.msra.mxu0 %v2704
    %4979 = vmatpush.bf16.msra.mxu0 %v2700
    %4980 = vmatpush.bf16.msra.mxu0 %v2696
    %4981 = vmatpush.bf16.msra.mxu0 %v2692
    %4982 = vmatpush.bf16.msra.mxu0 %v2688
    %4983 = vmatpush.bf16.msra.mxu0 %v2684
    %4984 = vmatpush.bf16.msra.mxu0 %v2680
    %4985 = vmatmul.bf16.gmra.mxu0 %v4793
    %v4986 = vpop.f32.mrf.mxu0
    %v4987 = vadd.f32 0.0, %v4986
    %v4988 = vpop.f32.mrf.mxu0
    %4989 = vdwg.mxu0
    %4990 = vmatpush.bf16.msra.mxu0 %v2709
    %4991 = vmatpush.bf16.msra.mxu0 %v2705
    %4992 = vmatpush.bf16.msra.mxu0 %v2701
    %4993 = vmatpush.bf16.msra.mxu0 %v2697
    %4994 = vmatpush.bf16.msra.mxu0 %v2693
    %4995 = vmatpush.bf16.msra.mxu0 %v2689
    %4996 = vmatpush.bf16.msra.mxu0 %v2685
    %4997 = vmatpush.bf16.msra.mxu0 %v2681
    %4998 = vmatmul.bf16.gmra.mxu0 %v4793
    %v4999 = vpop.f32.mrf.mxu0
    %v5000 = vadd.f32 0.0, %v4999
    %v5001 = vpop.f32.mrf.mxu0
    %5002 = vdwg.mxu0
    %5003 = vmatpush.bf16.msra.mxu0 %v2710
    %5004 = vmatpush.bf16.msra.mxu0 %v2706
    %5005 = vmatpush.bf16.msra.mxu0 %v2702
    %5006 = vmatpush.bf16.msra.mxu0 %v2698
    %5007 = vmatpush.bf16.msra.mxu0 %v2694
    %5008 = vmatpush.bf16.msra.mxu0 %v2690
    %5009 = vmatpush.bf16.msra.mxu0 %v2686
    %5010 = vmatpush.bf16.msra.mxu0 %v2682
    %5011 = vmatmul.bf16.gmra.mxu0 %v4793
    %v5012 = vpop.f32.mrf.mxu0
    %v5013 = vadd.f32 0.0, %v5012
    %v5014 = vpop.f32.mrf.mxu0
    %5015 = vdwg.mxu0
    %v5020 = vrot.slane %v4974, 4
    %v5021 = vrot.slane %v4987, 4
    %v5022 = vrot.slane %v5000, 4
    %v5023 = vrot.slane %v5013, 4
    %v5028 = vadd.f32 %v2507, %v5020
    %v5029 = vadd.f32 %v2521, %v5021
    %v5030 = vadd.f32 %v2535, %v5022
    %v5031 = vadd.f32 %v2549, %v5023
    %v5032 = vxor.u32 %v5028, 2147483648
    %v5033 = vmul.f32 %v5032, 1.442695
    %v5034 = vpow.pop %v5033
    %v5035 = vadd.f32 %v5034, 1.0
    %v5036 = vrcp.pop %v5035
    %v5037 = vmul.f32 %v5035, %v5036
    %v5038 = vsub.f32 1.0, %v5037
    %v5039 = vmul.f32 %v5036, %v5038
    %v5040 = vadd.f32 %v5036, %v5039
    %vm5041 = vweird.f32 %v5035
    %vm5042 = vweird.f32 %v5036
    %vm5043 = vmor %vm5041, %vm5042
    %v5044 = vsel %vm5043, %v5036, %v5040
    %v5045 = vand.u32 2147483647, %v5035
    %vm5046 = vcmp.eq.f32.partialorder %v5045, 8.507059e+37
    %v5047 = vand.u32 %v5035, 2147483648
    %v5048 = vor.u32 1.1754944e-38, %v5047
    %v5049 = vsel %vm5046, %v5048, %v5044
    %v5050 = vmul.f32 1.0, %v5049
    %v5051 = vxor.u32 %v5029, 2147483648
    %v5052 = vmul.f32 %v5051, 1.442695
    %v5053 = vpow.pop %v5052
    %v5054 = vadd.f32 %v5053, 1.0
    %v5055 = vrcp.pop %v5054
    %v5056 = vmul.f32 %v5054, %v5055
    %v5057 = vsub.f32 1.0, %v5056
    %v5058 = vmul.f32 %v5055, %v5057
    %v5059 = vadd.f32 %v5055, %v5058
    %vm5060 = vweird.f32 %v5054
    %vm5061 = vweird.f32 %v5055
    %vm5062 = vmor %vm5060, %vm5061
    %v5063 = vsel %vm5062, %v5055, %v5059
    %v5064 = vand.u32 2147483647, %v5054
    %vm5065 = vcmp.eq.f32.partialorder %v5064, 8.507059e+37
    %v5066 = vand.u32 %v5054, 2147483648
    %v5067 = vor.u32 1.1754944e-38, %v5066
    %v5068 = vsel %vm5065, %v5067, %v5063
    %v5069 = vmul.f32 1.0, %v5068
    %v5070 = vtanh.pop %v5030
    %v5071 = vxor.u32 %v5031, 2147483648
    %v5072 = vmul.f32 %v5071, 1.442695
    %v5073 = vpow.pop %v5072
    %v5074 = vadd.f32 %v5073, 1.0
    %v5075 = vrcp.pop %v5074
    %v5076 = vmul.f32 %v5074, %v5075
    %v5077 = vsub.f32 1.0, %v5076
    %v5078 = vmul.f32 %v5075, %v5077
    %v5079 = vadd.f32 %v5075, %v5078
    %vm5080 = vweird.f32 %v5074
    %vm5081 = vweird.f32 %v5075
    %vm5082 = vmor %vm5080, %vm5081
    %v5083 = vsel %vm5082, %v5075, %v5079
    %v5084 = vand.u32 2147483647, %v5074
    %vm5085 = vcmp.eq.f32.partialorder %v5084, 8.507059e+37
    %v5086 = vand.u32 %v5074, 2147483648
    %v5087 = vor.u32 1.1754944e-38, %v5086
    %v5088 = vsel %vm5085, %v5087, %v5083
    %v5089 = vmul.f32 1.0, %v5088
    %v5091 = vrot.slane %v4783, 6
    %v5093 = vmul.f32 %v5069, %v5091
    %v5094 = vmul.f32 %v5050, %v5070
    %v5095 = vadd.f32 %v5093, %v5094
    %v5096 = vtanh.pop %v5095
    %v5097 = vmul.f32 %v5089, %v5096
    %v5099 = vrot.slane %v4963, 4
    %v5101 = vpack.c.bf16 %v5097, %v5097
    %v5102 = vpack.c.bf16 %v5099, %v5099
    %v5105 = vrot.slane %v5101, 2
    %v5106 = vrot.slane %v5102, 2
    %5109 = vmatpush.bf16.msra.mxu0 %v3158
    %5110 = vmatpush.bf16.msra.mxu0 %v3154
    %5111 = vmatpush.bf16.msra.mxu0 %v3150
    %5112 = vmatpush.bf16.msra.mxu0 %v3146
    %5113 = vmatpush.bf16.msra.mxu0 %v3142
    %5114 = vmatpush.bf16.msra.mxu0 %v3138
    %5115 = vmatpush.bf16.msra.mxu0 %v3134
    %5116 = vmatpush.bf16.msra.mxu0 %v3130
    %5117 = vmatmul.bf16.gmra.mxu0 %v5105
    %v5118 = vpop.f32.mrf.mxu0
    %v5119 = vadd.f32 %v2930, %v5118
    %v5120 = vpop.f32.mrf.mxu0
    %5121 = vdwg.mxu0
    %5122 = vmatpush.bf16.msra.mxu0 %v3190
    %5123 = vmatpush.bf16.msra.mxu0 %v3186
    %5124 = vmatpush.bf16.msra.mxu0 %v3182
    %5125 = vmatpush.bf16.msra.mxu0 %v3178
    %5126 = vmatpush.bf16.msra.mxu0 %v3174
    %5127 = vmatpush.bf16.msra.mxu0 %v3170
    %5128 = vmatpush.bf16.msra.mxu0 %v3166
    %5129 = vmatpush.bf16.msra.mxu0 %v3162
    %5130 = vmatmul.bf16.gmra.mxu0 %v5106
    %v5131 = vpop.f32.mrf.mxu0
    %v5132 = vadd.f32 %v5119, %v5131
    %v5133 = vpop.f32.mrf.mxu0
    %5134 = vdwg.mxu0
    %5135 = vmatpush.bf16.msra.mxu0 %v3159
    %5136 = vmatpush.bf16.msra.mxu0 %v3155
    %5137 = vmatpush.bf16.msra.mxu0 %v3151
    %5138 = vmatpush.bf16.msra.mxu0 %v3147
    %5139 = vmatpush.bf16.msra.mxu0 %v3143
    %5140 = vmatpush.bf16.msra.mxu0 %v3139
    %5141 = vmatpush.bf16.msra.mxu0 %v3135
    %5142 = vmatpush.bf16.msra.mxu0 %v3131
    %5143 = vmatmul.bf16.gmra.mxu0 %v5105
    %v5144 = vpop.f32.mrf.mxu0
    %v5145 = vadd.f32 %v2931, %v5144
    %v5146 = vpop.f32.mrf.mxu0
    %5147 = vdwg.mxu0
    %5148 = vmatpush.bf16.msra.mxu0 %v3191
    %5149 = vmatpush.bf16.msra.mxu0 %v3187
    %5150 = vmatpush.bf16.msra.mxu0 %v3183
    %5151 = vmatpush.bf16.msra.mxu0 %v3179
    %5152 = vmatpush.bf16.msra.mxu0 %v3175
    %5153 = vmatpush.bf16.msra.mxu0 %v3171
    %5154 = vmatpush.bf16.msra.mxu0 %v3167
    %5155 = vmatpush.bf16.msra.mxu0 %v3163
    %5156 = vmatmul.bf16.gmra.mxu0 %v5106
    %v5157 = vpop.f32.mrf.mxu0
    %v5158 = vadd.f32 %v5145, %v5157
    %v5159 = vpop.f32.mrf.mxu0
    %5160 = vdwg.mxu0
    %5161 = vmatpush.bf16.msra.mxu0 %v3160
    %5162 = vmatpush.bf16.msra.mxu0 %v3156
    %5163 = vmatpush.bf16.msra.mxu0 %v3152
    %5164 = vmatpush.bf16.msra.mxu0 %v3148
    %5165 = vmatpush.bf16.msra.mxu0 %v3144
    %5166 = vmatpush.bf16.msra.mxu0 %v3140
    %5167 = vmatpush.bf16.msra.mxu0 %v3136
    %5168 = vmatpush.bf16.msra.mxu0 %v3132
    %5169 = vmatmul.bf16.gmra.mxu0 %v5105
    %v5170 = vpop.f32.mrf.mxu0
    %v5171 = vadd.f32 %v2932, %v5170
    %v5172 = vpop.f32.mrf.mxu0
    %5173 = vdwg.mxu0
    %5174 = vmatpush.bf16.msra.mxu0 %v3192
    %5175 = vmatpush.bf16.msra.mxu0 %v3188
    %5176 = vmatpush.bf16.msra.mxu0 %v3184
    %5177 = vmatpush.bf16.msra.mxu0 %v3180
    %5178 = vmatpush.bf16.msra.mxu0 %v3176
    %5179 = vmatpush.bf16.msra.mxu0 %v3172
    %5180 = vmatpush.bf16.msra.mxu0 %v3168
    %5181 = vmatpush.bf16.msra.mxu0 %v3164
    %5182 = vmatmul.bf16.gmra.mxu0 %v5106
    %v5183 = vpop.f32.mrf.mxu0
    %v5184 = vadd.f32 %v5171, %v5183
    %v5185 = vpop.f32.mrf.mxu0
    %5186 = vdwg.mxu0
    %5187 = vmatpush.bf16.msra.mxu0 %v3161
    %5188 = vmatpush.bf16.msra.mxu0 %v3157
    %5189 = vmatpush.bf16.msra.mxu0 %v3153
    %5190 = vmatpush.bf16.msra.mxu0 %v3149
    %5191 = vmatpush.bf16.msra.mxu0 %v3145
    %5192 = vmatpush.bf16.msra.mxu0 %v3141
    %5193 = vmatpush.bf16.msra.mxu0 %v3137
    %5194 = vmatpush.bf16.msra.mxu0 %v3133
    %5195 = vmatmul.bf16.gmra.mxu0 %v5105
    %v5196 = vpop.f32.mrf.mxu0
    %v5197 = vadd.f32 %v2933, %v5196
    %v5198 = vpop.f32.mrf.mxu0
    %5199 = vdwg.mxu0
    %5200 = vmatpush.bf16.msra.mxu0 %v3193
    %5201 = vmatpush.bf16.msra.mxu0 %v3189
    %5202 = vmatpush.bf16.msra.mxu0 %v3185
    %5203 = vmatpush.bf16.msra.mxu0 %v3181
    %5204 = vmatpush.bf16.msra.mxu0 %v3177
    %5205 = vmatpush.bf16.msra.mxu0 %v3173
    %5206 = vmatpush.bf16.msra.mxu0 %v3169
    %5207 = vmatpush.bf16.msra.mxu0 %v3165
    %5208 = vmatmul.bf16.gmra.mxu0 %v5106
    %v5209 = vpop.f32.mrf.mxu0
    %v5210 = vadd.f32 %v5197, %v5209
    %v5211 = vpop.f32.mrf.mxu0
    %5212 = vdwg.mxu0
    %v5213 = vxor.u32 %v5132, 2147483648
    %v5214 = vmul.f32 %v5213, 1.442695
    %v5215 = vpow.pop %v5214
    %v5216 = vadd.f32 %v5215, 1.0
    %v5217 = vrcp.pop %v5216
    %v5218 = vmul.f32 %v5216, %v5217
    %v5219 = vsub.f32 1.0, %v5218
    %v5220 = vmul.f32 %v5217, %v5219
    %v5221 = vadd.f32 %v5217, %v5220
    %vm5222 = vweird.f32 %v5216
    %vm5223 = vweird.f32 %v5217
    %vm5224 = vmor %vm5222, %vm5223
    %v5225 = vsel %vm5224, %v5217, %v5221
    %v5226 = vand.u32 2147483647, %v5216
    %vm5227 = vcmp.eq.f32.partialorder %v5226, 8.507059e+37
    %v5228 = vand.u32 %v5216, 2147483648
    %v5229 = vor.u32 1.1754944e-38, %v5228
    %v5230 = vsel %vm5227, %v5229, %v5225
    %v5231 = vmul.f32 1.0, %v5230
    %v5232 = vxor.u32 %v5158, 2147483648
    %v5233 = vmul.f32 %v5232, 1.442695
    %v5234 = vpow.pop %v5233
    %v5235 = vadd.f32 %v5234, 1.0
    %v5236 = vrcp.pop %v5235
    %v5237 = vmul.f32 %v5235, %v5236
    %v5238 = vsub.f32 1.0, %v5237
    %v5239 = vmul.f32 %v5236, %v5238
    %v5240 = vadd.f32 %v5236, %v5239
    %vm5241 = vweird.f32 %v5235
    %vm5242 = vweird.f32 %v5236
    %vm5243 = vmor %vm5241, %vm5242
    %v5244 = vsel %vm5243, %v5236, %v5240
    %v5245 = vand.u32 2147483647, %v5235
    %vm5246 = vcmp.eq.f32.partialorder %v5245, 8.507059e+37
    %v5247 = vand.u32 %v5235, 2147483648
    %v5248 = vor.u32 1.1754944e-38, %v5247
    %v5249 = vsel %vm5246, %v5248, %v5244
    %v5250 = vmul.f32 1.0, %v5249
    %v5251 = vtanh.pop %v5184
    %v5252 = vxor.u32 %v5210, 2147483648
    %v5253 = vmul.f32 %v5252, 1.442695
    %v5254 = vpow.pop %v5253
    %v5255 = vadd.f32 %v5254, 1.0
    %v5256 = vrcp.pop %v5255
    %v5257 = vmul.f32 %v5255, %v5256
    %v5258 = vsub.f32 1.0, %v5257
    %v5259 = vmul.f32 %v5256, %v5258
    %v5260 = vadd.f32 %v5256, %v5259
    %vm5261 = vweird.f32 %v5255
    %vm5262 = vweird.f32 %v5256
    %vm5263 = vmor %vm5261, %vm5262
    %v5264 = vsel %vm5263, %v5256, %v5260
    %v5265 = vand.u32 2147483647, %v5255
    %vm5266 = vcmp.eq.f32.partialorder %v5265, 8.507059e+37
    %v5267 = vand.u32 %v5255, 2147483648
    %v5268 = vor.u32 1.1754944e-38, %v5267
    %v5269 = vsel %vm5266, %v5268, %v5264
    %v5270 = vmul.f32 1.0, %v5269
    %v5271 = vmul.f32 %v5250, %v4961
    %v5272 = vmul.f32 %v5231, %v5251
    %v5273 = vadd.f32 %v5271, %v5272
    %v5274 = vtanh.pop %v5273
    %v5275 = vmul.f32 %v5270, %v5274
    %v5276 = vrot.slane %v3736, 7
    %v5278 = vrot.slane %v4048, 6
    %v5281 = vrot.slane %v4360, 5
    %v5283 = vrot.slane %v4651, 4
    %v5285 = vrot.slane %v4963, 3
    %v5288 = vrot.slane %v5275, 2
    %v5290 = vrot.slane %v3424, 2
    %v5292 = vrot.slane %v3736, 1
    %v5294 = vrot.slane %v4360, 7
    %v5296 = vrot.slane %v4963, 5
    %v5298 = vrot.slane %v5275, 4
    %v5300 = vsel %vm290, %v3424, %v5276
    %v5301 = vsel %vm2272, %v5300, %v5278
    %vm5302 = vcmask 1042432
    %v5303 = vsel %vm5302, %v5301, %v5281
    %v5304 = vsel %vm2274, %v5303, %v5283
    %vm5305 = vcmask 1044480
    %v5306 = vsel %vm5305, %v5304, %v5285
    %v5307 = vsel %vm2276, %v5306, %v5288
    %vm5308 = vcmask 1046528
    %v5309 = vsel %vm5308, %v5307, %v5290
    %v5310 = vsel %vm290, %v5292, %v4048
    %v5311 = vsel %vm2272, %v5310, %v5294
    %v5312 = vsel %vm5302, %v5311, %v4787
    %v5313 = vsel %vm2274, %v5312, %v5296
    %v5314 = vsel %vm5305, %v5313, %v5298
    %v5315 = vpack.c.bf16 %v5314, %v5309
    %v5316 = vld [vmem:[#allocation18] sm:$0xf]
    %v5317 = vld [vmem:[#allocation18 + $0x4] sm:$0xf]
    %v5318 = vld [vmem:[#allocation18 + $0x8] sm:$0xf]
    %v5319 = vld [vmem:[#allocation18 + $0xc] sm:$0xf]
    %v5320 = vld [vmem:[#allocation18 + $0x10] sm:$0xf]
    %v5321 = vld [vmem:[#allocation18 + $0x14] sm:$0xf]
    %v5322 = vld [vmem:[#allocation18 + $0x18] sm:$0xf]
    %v5323 = vld [vmem:[#allocation18 + $0x1c] sm:$0xf]
    %v5324 = vld [vmem:[#allocation18 + $0x20] sm:$0xf]
    %v5325 = vld [vmem:[#allocation18 + $0x24] sm:$0xf]
    %v5326 = vld [vmem:[#allocation18 + $0x28] sm:$0xf]
    %v5327 = vld [vmem:[#allocation18 + $0x2c] sm:$0xf]
    %v5328 = vld [vmem:[#allocation18 + $0x30] sm:$0xf]
    %v5329 = vld [vmem:[#allocation18 + $0x34] sm:$0xf]
    %v5330 = vld [vmem:[#allocation18 + $0x38] sm:$0xf]
    %v5331 = vld [vmem:[#allocation18 + $0x3c] sm:$0xf]
    %v5332 = vld [vmem:[%s13] sm:$0x1]
    %v5334 = vperm.slane %v5332, 0
    %v5352 = vunpack.c.l.b16 %v5316
    %v5353 = vunpack.c.l.b16 %v5317
    %v5354 = vunpack.c.l.b16 %v5318
    %v5355 = vunpack.c.l.b16 %v5319
    %v5356 = vunpack.c.l.b16 %v5320
    %v5357 = vunpack.c.l.b16 %v5321
    %v5358 = vunpack.c.l.b16 %v5322
    %v5359 = vunpack.c.l.b16 %v5323
    %v5360 = vunpack.c.l.b16 %v5324
    %v5361 = vunpack.c.l.b16 %v5325
    %v5362 = vunpack.c.l.b16 %v5326
    %v5363 = vunpack.c.l.b16 %v5327
    %v5364 = vunpack.c.l.b16 %v5328
    %v5365 = vunpack.c.l.b16 %v5329
    %v5366 = vunpack.c.l.b16 %v5330
    %v5367 = vunpack.c.l.b16 %v5331
    %v5368 = vpack.c.b16 %v5353, %v5352
    %v5369 = vpack.c.b16 %v5355, %v5354
    %v5370 = vpack.c.b16 %v5357, %v5356
    %v5371 = vpack.c.b16 %v5359, %v5358
    %v5372 = vpack.c.b16 %v5361, %v5360
    %v5373 = vpack.c.b16 %v5363, %v5362
    %v5374 = vpack.c.b16 %v5365, %v5364
    %v5375 = vpack.c.b16 %v5367, %v5366
    %5384 = vmatpush.bf16.msra.mxu0 %v5375
    %5385 = vmatpush.bf16.msra.mxu0 %v5374
    %5386 = vmatpush.bf16.msra.mxu0 %v5373
    %5387 = vmatpush.bf16.msra.mxu0 %v5372
    %5388 = vmatpush.bf16.msra.mxu0 %v5371
    %5389 = vmatpush.bf16.msra.mxu0 %v5370
    %5390 = vmatpush.bf16.msra.mxu0 %v5369
    %5391 = vmatpush.bf16.msra.mxu0 %v5368
    %5392 = vmatmul.bf16.gmra.mxu0 %v5315
    %v5393 = vpop.f32.mrf.mxu0
    %v5394 = vadd.f32 %v5334, %v5393
    %v5395 = vpop.f32.mrf.mxu0
    %v5396 = vadd.f32 %v5334, %v5395
    %5397 = vdwg.mxu0
    %vm5398 = vcmp.ge.f32.partialorder %v5394, 0.0
    %vm5399 = vcmp.ge.f32.partialorder %v5396, 0.0
    %v5400 = vmul.f32 %v5394, 0.05
    %v5401 = vmul.f32 %v5396, 0.05
    %v5402 = vsel %vm5398, %v5394, %v5400
    %v5403 = vsel %vm5399, %v5396, %v5401
    %v5404 = vpack.c.bf16 %v5403, %v5402
    %v5405 = vld [vmem:[#allocation19] sm:$0xf]
    %v5406 = vld [vmem:[#allocation19 + $0x4] sm:$0xf]
    %v5407 = vld [vmem:[#allocation19 + $0x8] sm:$0xf]
    %v5408 = vld [vmem:[#allocation19 + $0xc] sm:$0xf]
    %v5409 = vld [vmem:[#allocation19 + $0x10] sm:$0xf]
    %v5410 = vld [vmem:[#allocation19 + $0x14] sm:$0xf]
    %v5411 = vld [vmem:[#allocation19 + $0x18] sm:$0xf]
    %v5412 = vld [vmem:[#allocation19 + $0x1c] sm:$0xf]
    %v5413 = vld [vmem:[#allocation19 + $0x20] sm:$0xf]
    %v5414 = vld [vmem:[#allocation19 + $0x24] sm:$0xf]
    %v5415 = vld [vmem:[#allocation19 + $0x28] sm:$0xf]
    %v5416 = vld [vmem:[#allocation19 + $0x2c] sm:$0xf]
    %v5417 = vld [vmem:[#allocation19 + $0x30] sm:$0xf]
    %v5418 = vld [vmem:[#allocation19 + $0x34] sm:$0xf]
    %v5419 = vld [vmem:[#allocation19 + $0x38] sm:$0xf]
    %v5420 = vld [vmem:[#allocation19 + $0x3c] sm:$0xf]
    %v5421 = vld [vmem:[%s15] sm:$0x1]
    %v5423 = vperm.slane %v5421, 0
    %v5441 = vunpack.c.l.b16 %v5405
    %v5442 = vunpack.c.l.b16 %v5406
    %v5443 = vunpack.c.l.b16 %v5407
    %v5444 = vunpack.c.l.b16 %v5408
    %v5445 = vunpack.c.l.b16 %v5409
    %v5446 = vunpack.c.l.b16 %v5410
    %v5447 = vunpack.c.l.b16 %v5411
    %v5448 = vunpack.c.l.b16 %v5412
    %v5449 = vunpack.c.l.b16 %v5413
    %v5450 = vunpack.c.l.b16 %v5414
    %v5451 = vunpack.c.l.b16 %v5415
    %v5452 = vunpack.c.l.b16 %v5416
    %v5453 = vunpack.c.l.b16 %v5417
    %v5454 = vunpack.c.l.b16 %v5418
    %v5455 = vunpack.c.l.b16 %v5419
    %v5456 = vunpack.c.l.b16 %v5420
    %v5457 = vpack.c.b16 %v5442, %v5441
    %v5458 = vpack.c.b16 %v5444, %v5443
    %v5459 = vpack.c.b16 %v5446, %v5445
    %v5460 = vpack.c.b16 %v5448, %v5447
    %v5461 = vpack.c.b16 %v5450, %v5449
    %v5462 = vpack.c.b16 %v5452, %v5451
    %v5463 = vpack.c.b16 %v5454, %v5453
    %v5464 = vpack.c.b16 %v5456, %v5455
    %5473 = vmatpush.bf16.msra.mxu0 %v5464
    %5474 = vmatpush.bf16.msra.mxu0 %v5463
    %5475 = vmatpush.bf16.msra.mxu0 %v5462
    %5476 = vmatpush.bf16.msra.mxu0 %v5461
    %5477 = vmatpush.bf16.msra.mxu0 %v5460
    %5478 = vmatpush.bf16.msra.mxu0 %v5459
    %5479 = vmatpush.bf16.msra.mxu0 %v5458
    %5480 = vmatpush.bf16.msra.mxu0 %v5457
    %5481 = vmatmul.bf16.gmra.mxu0 %v5404
    %v5482 = vpop.f32.mrf.mxu0
    %v5483 = vadd.f32 %v5423, %v5482
    %v5484 = vpop.f32.mrf.mxu0
    %v5485 = vadd.f32 %v5423, %v5484
    %5486 = vdwg.mxu0
    %vm5487 = vcmp.ge.f32.partialorder %v5483, 0.0
    %vm5488 = vcmp.ge.f32.partialorder %v5485, 0.0
    %v5489 = vmul.f32 %v5483, 0.05
    %v5490 = vmul.f32 %v5485, 0.05
    %v5491 = vsel %vm5487, %v5483, %v5489
    %v5492 = vsel %vm5488, %v5485, %v5490
    %v5493 = vpack.c.bf16 %v5492, %v5491
    %v5494 = vld [vmem:[#allocation21] sm:$0xf]
    %v5495 = vld [vmem:[#allocation21 + $0x4] sm:$0xf]
    %v5496 = vld [vmem:[#allocation21 + $0x8] sm:$0xf]
    %v5497 = vld [vmem:[#allocation21 + $0xc] sm:$0xf]
    %v5498 = vld [vmem:[#allocation21 + $0x10] sm:$0xf]
    %v5499 = vld [vmem:[#allocation21 + $0x14] sm:$0xf]
    %v5500 = vld [vmem:[#allocation21 + $0x18] sm:$0xf]
    %v5501 = vld [vmem:[#allocation21 + $0x1c] sm:$0xf]
    %v5502 = vld [vmem:[#allocation21 + $0x20] sm:$0xf]
    %v5503 = vld [vmem:[#allocation21 + $0x24] sm:$0xf]
    %v5504 = vld [vmem:[#allocation21 + $0x28] sm:$0xf]
    %v5505 = vld [vmem:[#allocation21 + $0x2c] sm:$0xf]
    %v5506 = vld [vmem:[#allocation21 + $0x30] sm:$0xf]
    %v5507 = vld [vmem:[#allocation21 + $0x34] sm:$0xf]
    %v5508 = vld [vmem:[#allocation21 + $0x38] sm:$0xf]
    %v5509 = vld [vmem:[#allocation21 + $0x3c] sm:$0xf]
    %v5510 = vld [vmem:[%s17] sm:$0x1]
    %v5512 = vperm.slane %v5510, 0
    %v5530 = vunpack.c.l.b16 %v5494
    %v5531 = vunpack.c.l.b16 %v5495
    %v5532 = vunpack.c.l.b16 %v5496
    %v5533 = vunpack.c.l.b16 %v5497
    %v5534 = vunpack.c.l.b16 %v5498
    %v5535 = vunpack.c.l.b16 %v5499
    %v5536 = vunpack.c.l.b16 %v5500
    %v5537 = vunpack.c.l.b16 %v5501
    %v5538 = vunpack.c.l.b16 %v5502
    %v5539 = vunpack.c.l.b16 %v5503
    %v5540 = vunpack.c.l.b16 %v5504
    %v5541 = vunpack.c.l.b16 %v5505
    %v5542 = vunpack.c.l.b16 %v5506
    %v5543 = vunpack.c.l.b16 %v5507
    %v5544 = vunpack.c.l.b16 %v5508
    %v5545 = vunpack.c.l.b16 %v5509
    %v5546 = vpack.c.b16 %v5531, %v5530
    %v5547 = vpack.c.b16 %v5533, %v5532
    %v5548 = vpack.c.b16 %v5535, %v5534
    %v5549 = vpack.c.b16 %v5537, %v5536
    %v5550 = vpack.c.b16 %v5539, %v5538
    %v5551 = vpack.c.b16 %v5541, %v5540
    %v5552 = vpack.c.b16 %v5543, %v5542
    %v5553 = vpack.c.b16 %v5545, %v5544
    %5562 = vmatpush.bf16.msra.mxu0 %v5553
    %5563 = vmatpush.bf16.msra.mxu0 %v5552
    %5564 = vmatpush.bf16.msra.mxu0 %v5551
    %5565 = vmatpush.bf16.msra.mxu0 %v5550
    %5566 = vmatpush.bf16.msra.mxu0 %v5549
    %5567 = vmatpush.bf16.msra.mxu0 %v5548
    %5568 = vmatpush.bf16.msra.mxu0 %v5547
    %5569 = vmatpush.bf16.msra.mxu0 %v5546
    %5570 = vmatmul.bf16.gmra.mxu0 %v5493
    %v5571 = vpop.f32.mrf.mxu0
    %v5572 = vadd.f32 %v5512, %v5571
    %v5573 = vpop.f32.mrf.mxu0
    %v5574 = vadd.f32 %v5512, %v5573
    %5575 = vdwg.mxu0
    %5576 = vmax.xlane.f32.xlu0 %v5572
    %v5577 = vpop.xlane.xlu0 %5576
    %v5578 = vsel %vm2276, %v5574, -inf
    %5579 = vmax.xlane.f32.xlu0 %v5578
    %v5580 = vpop.xlane.xlu0 %5579
    %v5581 = vsub.f32 %v5572, %v5577
    %v5582 = vsub.f32 %v5574, %v5580
    %v5583 = vmul.f32 %v5581, 1.442695
    %v5584 = vpow.pop %v5583
    %v5585 = vmul.f32 %v5582, 1.442695
    %v5586 = vpow.pop %v5585
    %5587 = vadd.xlane.f32.xlu0 %v5584
    %v5588 = vpop.xlane.xlu0 %5587
    %v5589 = vsel %vm2276, %v5586, 0.0
    %5590 = vadd.xlane.f32.xlu0 %v5589
    %v5591 = vpop.xlane.xlu0 %5590
    %v5592 = vlog2.pop %v5588
    %v5593 = vmul.f32 %v5592, 0.6931472
    %v5594 = vlog2.pop %v5591
    %v5595 = vmul.f32 %v5594, 0.6931472
    %v5596 = vadd.f32 %v5577, %v5593
    %v5597 = vadd.f32 %v5580, %v5595
    %v5598 = vsub.f32 %v5572, %v5596
    %v5599 = vsub.f32 %v5574, %v5597
    %5600 = vst [vmem:[%s18] sm:$0xff] %v5598
    %5601 = vst [vmem:[%s18 + $0x8] sm:$0x3f] %v5599
    // Predicated region
    $region126: #{forward.1} parent=1 // pred_check
      _
    $region127: #{forward.1} parent=1 // pred_check_branch
      %5603 = sbr.rel (0) target = $region129
    $region128: #{forward.1} parent=1 // pred_region
      _
    $region129: #{forward.1} parent=1 // pred_fallthru
      _
    // Predicated region
    $region130: #{forward.1} parent=1 // pred_check
      _
    $region131: #{forward.1} parent=1 // pred_check_branch
      %5605 = sbr.rel (0) target = $region133
    $region132: #{forward.1} parent=1 // pred_region
      _
    $region133: #{forward.1} parent=1 // pred_fallthru
      _
    %5606 = vsyncpa [#allocation3], 1
    %5607 = vsyncpa [#allocation5], 1
    %5608 = vsyncpa [#allocation8], 1
    %5609 = vsyncpa [#allocation11], 1
    %5610 = vsyncpa [#allocation14], 1
    %5611 = vsyncpa [#allocation17], 1
    %5612 = vsyncpa [#allocation20], 1

</llo_original>
